<compile_context>
chip_gen: v7x
topology: tpu7x:2x2x1
jax: 0.10.0
libtpu: 0.0.40
codegen_flags: <defaults>
</compile_context>

<pallas_src>
import jax
import jax.numpy as jnp
from jax import lax
from jax.experimental import pallas as pl
from jax.experimental.pallas import tpu as pltpu


_DILS_PADS = [(1, 0), (2, 0), (3, 1), (4, 2)]
_MAX_PAD = 2          # shared left/top padding covering every branch's own padding


def _round_up(x, m):
    return (x + m - 1) // m * m


def _conv_out_hw(H, W, dil, pad):
    Ho = (H + 2 * pad - dil * 2 - 1) // 2 + 1
    Wo = (W + 2 * pad - dil * 2 - 1) // 2 + 1
    return Ho, Wo


def _tap_offsets():
    """Static (phase, oy, ox) per (branch, tap) w.r.t. the shared pad-2 parity-phase array.

    Input pixel for output (ho, wo), tap (ky, kx) of branch (dil, pad) sits at padded
    coords (2*ho + offy, 2*wo + offx) with offy = ky*dil - pad + 2; the parity of offy/offx
    picks the phase plane and the halved remainder is a *contiguous* offset.
    """
    offs = []
    for dil, pad in _DILS_PADS:
        br = []
        for ky in range(3):
            for kx in range(3):
                offy = ky * dil - pad + _MAX_PAD
                offx = kx * dil - pad + _MAX_PAD
                br.append(((offy % 2) * 2 + (offx % 2), offy // 2, offx // 2))
        offs.append(br)
    return offs


def _make_kernel(offsets, Hh, tR, Wop, C):
    M = tR * Wop

    def kernel(x_ref, w_ref, b_ref, out_ref):
        # x_ref:   (4*Hh, Wh, C) bf16 — four parity phases stacked on rows, VMEM-resident per batch
        # w_ref:   (36, C, 2C)   bf16 — folded depthwise*pointwise weight per (branch, tap)
        # b_ref:   (1, 8C)       f32  — folded bias, branch-concatenated
        # out_ref: (tR*Wop, 8C)  bf16 — lane-dense fused output tile (4 branches side by side)
        row0 = pl.program_id(1) * tR
        branch_outs = []
        for br in range(4):
            acc = None
            for t, (ph, oy, ox) in enumerate(offsets[br]):
                tap = x_ref[pl.ds(ph * Hh + row0 + oy, tR), pl.ds(ox, Wop), :]
                tap = tap.reshape(M, C)                      # clean merge: Wop % 8 == 0
                part = jnp.dot(tap, w_ref[br * 9 + t],
                               preferred_element_type=jnp.float32)
                acc = part if acc is None else acc + part
            branch_outs.append(acc)
        out = jnp.concatenate(branch_outs, axis=-1) + b_ref[...]   # (M, 8C) f32
        out_ref[...] = out.astype(out_ref.dtype)

    return kernel


def dilatedconv_reduction_forward(x, params, num_heads):
    """x: (B, N, C) with N a perfect square. Returns (k, v) like the PyTorch module."""
    B, N, C = x.shape
    H = W = int(N ** 0.5)
    hd = C // num_heads
    x_nhwc = x.reshape(B, H, W, C).astype(jnp.bfloat16)

    offsets = _tap_offsets()
    oy_max = max(o[1] for br in offsets for o in br)
    ox_max = max(o[2] for br in offsets for o in br)

    hw = [_conv_out_hw(H, W, d, p) for d, p in _DILS_PADS]
    Homax = max(ho for ho, _ in hw)
    Womax = max(wo for _, wo in hw)
    Wop = _round_up(Womax, 8)                  # sublane-clean padded output width
    tR = max(1, min(Homax, 1024 // Wop))       # ~<=1024 output rows per grid step
    nR = pl.cdiv(Homax, tR)
    Hop = nR * tR                              # padded output height (garbage rows sliced off)

    # Shared parity-phase decomposition of the (pad=2 + right-padded) input: ~1x bytes of x.
    Hh = Hop + oy_max
    Wh = Wop + ox_max
    pad_h = 2 * Hh - H - _MAX_PAD
    pad_w = 2 * Wh - W - _MAX_PAD
    xpp = jnp.pad(x_nhwc, ((0, 0), (_MAX_PAD, pad_h), (_MAX_PAD, pad_w), (0, 0)))
    x_ph = xpp.reshape(B, Hh, 2, Wh, 2, C).transpose(0, 2, 4, 1, 3, 5)   # (B, py, px, Hh, Wh, C)
    x_ph = x_ph.reshape(B, 4 * Hh, Wh, C)      # row index = phase*Hh + i

    # Fold depthwise into pointwise: one (C, 2C) weight per (branch, tap); fold biases too.
    wf, bf = [], []
    for i in range(4):
        wdw = params[f"d{i + 1}_w"].reshape(C, 9).transpose(1, 0)        # (9, C), k = ky*3+kx
        wpw = params[f"p{i + 1}_w"].reshape(2 * C, C).transpose(1, 0)    # (C, 2C)
        wf.append(wdw[:, :, None] * wpw[None, :, :])                     # (9, C, 2C)
        bf.append(params[f"d{i + 1}_b"] @ wpw + params[f"p{i + 1}_b"])   # (2C,)
    w_all = jnp.stack(wf, 0).reshape(36, C, 2 * C).astype(jnp.bfloat16)
    b_all = jnp.concatenate(bf, 0).reshape(1, 8 * C).astype(jnp.float32)

    kernel = _make_kernel(offsets, Hh, tR, Wop, C)
    M = tR * Wop
    flops = 2 * B * Hop * Wop * 36 * C * 2 * C
    bytes_accessed = (x_ph.size * 2 + w_all.size * 2 + b_all.size * 4
                      + B * Hop * Wop * 8 * C * 2)

    out_flat = pl.pallas_call(
        kernel,
        out_shape=jax.ShapeDtypeStruct((B, Hop * Wop, 8 * C), jnp.bfloat16),
        grid=(B, nR),
        in_specs=[
            # full per-batch phase array, resident across the row-tile axis
            pl.BlockSpec((None, 4 * Hh, Wh, C), lambda b, r: (b, 0, 0, 0)),
            # all folded weights / biases resident for the whole grid
            pl.BlockSpec((36, C, 2 * C), lambda b, r: (0, 0, 0)),
            pl.BlockSpec((1, 8 * C), lambda b, r: (0, 0)),
        ],
        out_specs=pl.BlockSpec((None, M, 8 * C), lambda b, r: (b, r, 0)),
        compiler_params=pltpu.CompilerParams(
            dimension_semantics=("parallel", "parallel")),
        cost_estimate=pl.CostEstimate(flops=flops, transcendentals=0,
                                      bytes_accessed=bytes_accessed),
    )(x_ph, w_all, b_all)

    out4 = out_flat.reshape(B, Hop, Wop, 8 * C)

    # Exact PyTorch reshape/permute chain (pure data movement) per branch, in bf16.
    ks, vs = [], []
    for i in range(4):
        Ho, Wo = hw[i]
        o = out4[:, :Ho, :Wo, i * 2 * C:(i + 1) * 2 * C]       # (B, Ho, Wo, 2C)
        p = jnp.transpose(o, (0, 3, 1, 2))                     # (B, 2C, Ho, Wo)
        p = p.reshape(B, C, -1)
        p = jnp.transpose(p, (0, 2, 1))
        p = p.reshape(B, -1, 2, num_heads, hd)
        p = jnp.transpose(p, (2, 0, 3, 1, 4))                  # (2, B, nh, L_i, hd)
        ks.append(p[0])
        vs.append(p[1])

    k = jnp.concatenate(ks, axis=2)
    v = jnp.concatenate(vs, axis=2)
    return k, v


def _reference_forward(x, params, num_heads):
    """Pure-JAX reference (lax convs) mirroring the PyTorch forward exactly."""
    B, N, C = x.shape
    H = W = int(N ** 0.5)
    x_nchw = jnp.transpose(x, (0, 2, 1)).reshape(B, C, H, W)
    ks, vs = [], []
    for i, (dil, pad) in enumerate(_DILS_PADS):
        wdw = params[f"d{i + 1}_w"]
        bdw = params[f"d{i + 1}_b"]
        wpw = params[f"p{i + 1}_w"]
        bpw = params[f"p{i + 1}_b"]
        d = lax.conv_general_dilated(
            x_nchw, wdw, window_strides=(2, 2),
            padding=[(pad, pad), (pad, pad)], rhs_dilation=(dil, dil),
            dimension_numbers=("NCHW", "OIHW", "NCHW"), feature_group_count=C)
        d = d + bdw[None, :, None, None]
        p = lax.conv_general_dilated(
            d, wpw, window_strides=(1, 1), padding="VALID",
            dimension_numbers=("NCHW", "OIHW", "NCHW"))
        p = p + bpw[None, :, None, None]
        pp = p.reshape(B, C, -1)
        pp = jnp.transpose(pp, (0, 2, 1))
        pp = pp.reshape(B, -1, 2, num_heads, C // num_heads)
        pp = jnp.transpose(pp, (2, 0, 3, 1, 4))
        ks.append(pp[0])
        vs.append(pp[1])
    return jnp.concatenate(ks, axis=2), jnp.concatenate(vs, axis=2)


def init_params(key, C):
    params = {}
    keys = jax.random.split(key, 16)
    idx = 0
    for i in range(1, 5):
        params[f"d{i}_w"] = 0.1 * jax.random.normal(keys[idx], (C, 1, 3, 3), jnp.float32); idx += 1
        params[f"d{i}_b"] = 0.1 * jax.random.normal(keys[idx], (C,), jnp.float32); idx += 1
        params[f"p{i}_w"] = 0.1 * jax.random.normal(keys[idx], (2 * C, C, 1, 1), jnp.float32); idx += 1
        params[f"p{i}_b"] = 0.1 * jax.random.normal(keys[idx], (2 * C,), jnp.float32); idx += 1
    return params


if __name__ == "__main__":
    B, H, W, C, num_heads = 2, 16, 16, 32, 4
    N = H * W

    root = jax.random.PRNGKey(0)
    kx, kp = jax.random.split(root)
    x = jax.random.normal(kx, (B, N, C), jnp.float32)
    params = init_params(kp, C)

    fwd = jax.jit(dilatedconv_reduction_forward, static_argnums=(2,))
    k_out, v_out = fwd(x, params, num_heads)
    jax.block_until_ready((k_out, v_out))

    k_ref, v_ref = _reference_forward(x, params, num_heads)
    jax.block_until_ready((k_ref, v_ref))

    assert k_out.shape == k_ref.shape and v_out.shape == v_ref.shape
    if not (jnp.allclose(k_out.astype(jnp.float32), k_ref, rtol=2e-2, atol=2e-2) and
            jnp.allclose(v_out.astype(jnp.float32), v_ref, rtol=2e-2, atol=2e-2)):
        raise AssertionError(
            "mismatch vs reference: "
            f"k max err {float(jnp.max(jnp.abs(k_out.astype(jnp.float32) - k_ref)))}, "
            f"v max err {float(jnp.max(jnp.abs(v_out.astype(jnp.float32) - v_ref)))}")

    print("KERNEL_OK")
</pallas_src>

<mosaic_0001>
module attributes {stable_mosaic.version = 11 : i64} {
  func.func @kernel(%arg0: i32, %arg1: i32, %arg2: memref<1x44x12x32xbf16, #tpu.memory_space<vmem>>, %arg3: memref<36x32x64xbf16, #tpu.memory_space<vmem>>, %arg4: memref<1x256xf32, #tpu.memory_space<vmem>>, %arg5: memref<1x56x256xbf16, #tpu.memory_space<vmem>>) attributes {dimension_semantics = [#tpu.dimension_semantics<parallel>, #tpu.dimension_semantics<parallel>], iteration_bounds = array<i64: 2, 1>, scalar_prefetch = 0 : i64, scratch_operands = 0 : i64, tpu.core_type = #tpu.core_type<tc>, window_params = [{transform_indices = @transform_0, window_bounds = array<i64: 1, 44, 12, 32>}, {pipeline_mode = #tpu.pipeline_mode<synchronous>, transform_indices = @transform_1, window_bounds = array<i64: 36, 32, 64>}, {pipeline_mode = #tpu.pipeline_mode<synchronous>, transform_indices = @transform_2, window_bounds = array<i64: 1, 256>}, {transform_indices = @transform_3, window_bounds = array<i64: 1, 56, 256>}]} {
    %c7_i32 = arith.constant 7 : i32
    %0 = arith.muli %arg1, %c7_i32 : i32
    %c0_i32 = arith.constant 0 : i32
    %1 = arith.addi %c0_i32, %0 : i32
    %c1_i32 = arith.constant 1 : i32
    %2 = arith.addi %1, %c1_i32 : i32
    %c0 = arith.constant 0 : index
    %3 = arith.index_cast %2 : i32 to index
    %c1 = arith.constant 1 : index
    %c0_0 = arith.constant 0 : index
    %4 = vector.load %arg2[%c0, %3, %c1, %c0_0] : memref<1x44x12x32xbf16, #tpu.memory_space<vmem>>, vector<1x7x8x32xbf16>
    %5 = vector.shape_cast %4 : vector<1x7x8x32xbf16> to vector<7x8x32xbf16>
    %6 = vector.shape_cast %5 : vector<7x8x32xbf16> to vector<56x32xbf16>
    %c0_1 = arith.constant 0 : index
    %c0_2 = arith.constant 0 : index
    %c0_3 = arith.constant 0 : index
    %7 = vector.load %arg3[%c0_1, %c0_2, %c0_3] : memref<36x32x64xbf16, #tpu.memory_space<vmem>>, vector<1x32x64xbf16>
    %8 = vector.shape_cast %7 : vector<1x32x64xbf16> to vector<32x64xbf16>
    %cst = arith.constant dense<0.000000e+00> : vector<56x64xf32>
    %9 = tpu.matmul %6, %8, %cst {dimension_numbers = #tpu.dot_dimension_numbers<[1], [0], [0], [1], [0, 0, 1, 1], [], []>} : vector<56x32xbf16>, vector<32x64xbf16>, vector<56x64xf32> -> vector<56x64xf32>
    %c11_i32 = arith.constant 11 : i32
    %10 = arith.addi %c11_i32, %0 : i32
    %c1_i32_4 = arith.constant 1 : i32
    %11 = arith.addi %10, %c1_i32_4 : i32
    %c0_5 = arith.constant 0 : index
    %12 = arith.index_cast %11 : i32 to index
    %c1_6 = arith.constant 1 : index
    %c0_7 = arith.constant 0 : index
    %13 = vector.load %arg2[%c0_5, %12, %c1_6, %c0_7] : memref<1x44x12x32xbf16, #tpu.memory_space<vmem>>, vector<1x7x8x32xbf16>
    %14 = vector.shape_cast %13 : vector<1x7x8x32xbf16> to vector<7x8x32xbf16>
    %15 = vector.shape_cast %14 : vector<7x8x32xbf16> to vector<56x32xbf16>
    %c1_8 = arith.constant 1 : index
    %c0_9 = arith.constant 0 : index
    %c0_10 = arith.constant 0 : index
    %16 = vector.load %arg3[%c1_8, %c0_9, %c0_10] : memref<36x32x64xbf16, #tpu.memory_space<vmem>>, vector<1x32x64xbf16>
    %17 = vector.shape_cast %16 : vector<1x32x64xbf16> to vector<32x64xbf16>
    %cst_11 = arith.constant dense<0.000000e+00> : vector<56x64xf32>
    %18 = tpu.matmul %15, %17, %cst_11 {dimension_numbers = #tpu.dot_dimension_numbers<[1], [0], [0], [1], [0, 0, 1, 1], [], []>} : vector<56x32xbf16>, vector<32x64xbf16>, vector<56x64xf32> -> vector<56x64xf32>
    %19 = arith.addf %9, %18 : vector<56x64xf32>
    %c0_i32_12 = arith.constant 0 : i32
    %20 = arith.addi %c0_i32_12, %0 : i32
    %c1_i32_13 = arith.constant 1 : i32
    %21 = arith.addi %20, %c1_i32_13 : i32
    %c0_14 = arith.constant 0 : index
    %22 = arith.index_cast %21 : i32 to index
    %c2 = arith.constant 2 : index
    %c0_15 = arith.constant 0 : index
    %23 = vector.load %arg2[%c0_14, %22, %c2, %c0_15] : memref<1x44x12x32xbf16, #tpu.memory_space<vmem>>, vector<1x7x8x32xbf16>
    %24 = vector.shape_cast %23 : vector<1x7x8x32xbf16> to vector<7x8x32xbf16>
    %25 = vector.shape_cast %24 : vector<7x8x32xbf16> to vector<56x32xbf16>
    %c2_16 = arith.constant 2 : index
    %c0_17 = arith.constant 0 : index
    %c0_18 = arith.constant 0 : index
    %26 = vector.load %arg3[%c2_16, %c0_17, %c0_18] : memref<36x32x64xbf16, #tpu.memory_space<vmem>>, vector<1x32x64xbf16>
    %27 = vector.shape_cast %26 : vector<1x32x64xbf16> to vector<32x64xbf16>
    %cst_19 = arith.constant dense<0.000000e+00> : vector<56x64xf32>
    %28 = tpu.matmul %25, %27, %cst_19 {dimension_numbers = #tpu.dot_dimension_numbers<[1], [0], [0], [1], [0, 0, 1, 1], [], []>} : vector<56x32xbf16>, vector<32x64xbf16>, vector<56x64xf32> -> vector<56x64xf32>
    %29 = arith.addf %19, %28 : vector<56x64xf32>
    %c22_i32 = arith.constant 22 : i32
    %30 = arith.addi %c22_i32, %0 : i32
    %c1_i32_20 = arith.constant 1 : i32
    %31 = arith.addi %30, %c1_i32_20 : i32
    %c0_21 = arith.constant 0 : index
    %32 = arith.index_cast %31 : i32 to index
    %c1_22 = arith.constant 1 : index
    %c0_23 = arith.constant 0 : index
    %33 = vector.load %arg2[%c0_21, %32, %c1_22, %c0_23] : memref<1x44x12x32xbf16, #tpu.memory_space<vmem>>, vector<1x7x8x32xbf16>
    %34 = vector.shape_cast %33 : vector<1x7x8x32xbf16> to vector<7x8x32xbf16>
    %35 = vector.shape_cast %34 : vector<7x8x32xbf16> to vector<56x32xbf16>
    %c3 = arith.constant 3 : index
    %c0_24 = arith.constant 0 : index
    %c0_25 = arith.constant 0 : index
    %36 = vector.load %arg3[%c3, %c0_24, %c0_25] : memref<36x32x64xbf16, #tpu.memory_space<vmem>>, vector<1x32x64xbf16>
    %37 = vector.shape_cast %36 : vector<1x32x64xbf16> to vector<32x64xbf16>
    %cst_26 = arith.constant dense<0.000000e+00> : vector<56x64xf32>
    %38 = tpu.matmul %35, %37, %cst_26 {dimension_numbers = #tpu.dot_dimension_numbers<[1], [0], [0], [1], [0, 0, 1, 1], [], []>} : vector<56x32xbf16>, vector<32x64xbf16>, vector<56x64xf32> -> vector<56x64xf32>
    %39 = arith.addf %29, %38 : vector<56x64xf32>
    %c33_i32 = arith.constant 33 : i32
    %40 = arith.addi %c33_i32, %0 : i32
    %c1_i32_27 = arith.constant 1 : i32
    %41 = arith.addi %40, %c1_i32_27 : i32
    %c0_28 = arith.constant 0 : index
    %42 = arith.index_cast %41 : i32 to index
    %c1_29 = arith.constant 1 : index
    %c0_30 = arith.constant 0 : index
    %43 = vector.load %arg2[%c0_28, %42, %c1_29, %c0_30] : memref<1x44x12x32xbf16, #tpu.memory_space<vmem>>, vector<1x7x8x32xbf16>
    %44 = vector.shape_cast %43 : vector<1x7x8x32xbf16> to vector<7x8x32xbf16>
    %45 = vector.shape_cast %44 : vector<7x8x32xbf16> to vector<56x32xbf16>
    %c4 = arith.constant 4 : index
    %c0_31 = arith.constant 0 : index
    %c0_32 = arith.constant 0 : index
    %46 = vector.load %arg3[%c4, %c0_31, %c0_32] : memref<36x32x64xbf16, #tpu.memory_space<vmem>>, vector<1x32x64xbf16>
    %47 = vector.shape_cast %46 : vector<1x32x64xbf16> to vector<32x64xbf16>
    %cst_33 = arith.constant dense<0.000000e+00> : vector<56x64xf32>
    %48 = tpu.matmul %45, %47, %cst_33 {dimension_numbers = #tpu.dot_dimension_numbers<[1], [0], [0], [1], [0, 0, 1, 1], [], []>} : vector<56x32xbf16>, vector<32x64xbf16>, vector<56x64xf32> -> vector<56x64xf32>
    %49 = arith.addf %39, %48 : vector<56x64xf32>
    %c22_i32_34 = arith.constant 22 : i32
    %50 = arith.addi %c22_i32_34, %0 : i32
    %c1_i32_35 = arith.constant 1 : i32
    %51 = arith.addi %50, %c1_i32_35 : i32
    %c0_36 = arith.constant 0 : index
    %52 = arith.index_cast %51 : i32 to index
    %c2_37 = arith.constant 2 : index
    %c0_38 = arith.constant 0 : index
    %53 = vector.load %arg2[%c0_36, %52, %c2_37, %c0_38] : memref<1x44x12x32xbf16, #tpu.memory_space<vmem>>, vector<1x7x8x32xbf16>
    %54 = vector.shape_cast %53 : vector<1x7x8x32xbf16> to vector<7x8x32xbf16>
    %55 = vector.shape_cast %54 : vector<7x8x32xbf16> to vector<56x32xbf16>
    %c5 = arith.constant 5 : index
    %c0_39 = arith.constant 0 : index
    %c0_40 = arith.constant 0 : index
    %56 = vector.load %arg3[%c5, %c0_39, %c0_40] : memref<36x32x64xbf16, #tpu.memory_space<vmem>>, vector<1x32x64xbf16>
    %57 = vector.shape_cast %56 : vector<1x32x64xbf16> to vector<32x64xbf16>
    %cst_41 = arith.constant dense<0.000000e+00> : vector<56x64xf32>
    %58 = tpu.matmul %55, %57, %cst_41 {dimension_numbers = #tpu.dot_dimension_numbers<[1], [0], [0], [1], [0, 0, 1, 1], [], []>} : vector<56x32xbf16>, vector<32x64xbf16>, vector<56x64xf32> -> vector<56x64xf32>
    %59 = arith.addf %49, %58 : vector<56x64xf32>
    %c0_i32_42 = arith.constant 0 : i32
    %60 = arith.addi %c0_i32_42, %0 : i32
    %c2_i32 = arith.constant 2 : i32
    %61 = arith.addi %60, %c2_i32 : i32
    %c0_43 = arith.constant 0 : index
    %62 = arith.index_cast %61 : i32 to index
    %c1_44 = arith.constant 1 : index
    %c0_45 = arith.constant 0 : index
    %63 = vector.load %arg2[%c0_43, %62, %c1_44, %c0_45] : memref<1x44x12x32xbf16, #tpu.memory_space<vmem>>, vector<1x7x8x32xbf16>
    %64 = vector.shape_cast %63 : vector<1x7x8x32xbf16> to vector<7x8x32xbf16>
    %65 = vector.shape_cast %64 : vector<7x8x32xbf16> to vector<56x32xbf16>
    %c6 = arith.constant 6 : index
    %c0_46 = arith.constant 0 : index
    %c0_47 = arith.constant 0 : index
    %66 = vector.load %arg3[%c6, %c0_46, %c0_47] : memref<36x32x64xbf16, #tpu.memory_space<vmem>>, vector<1x32x64xbf16>
    %67 = vector.shape_cast %66 : vector<1x32x64xbf16> to vector<32x64xbf16>
    %cst_48 = arith.constant dense<0.000000e+00> : vector<56x64xf32>
    %68 = tpu.matmul %65, %67, %cst_48 {dimension_numbers = #tpu.dot_dimension_numbers<[1], [0], [0], [1], [0, 0, 1, 1], [], []>} : vector<56x32xbf16>, vector<32x64xbf16>, vector<56x64xf32> -> vector<56x64xf32>
    %69 = arith.addf %59, %68 : vector<56x64xf32>
    %c11_i32_49 = arith.constant 11 : i32
    %70 = arith.addi %c11_i32_49, %0 : i32
    %c2_i32_50 = arith.constant 2 : i32
    %71 = arith.addi %70, %c2_i32_50 : i32
    %c0_51 = arith.constant 0 : index
    %72 = arith.index_cast %71 : i32 to index
    %c1_52 = arith.constant 1 : index
    %c0_53 = arith.constant 0 : index
    %73 = vector.load %arg2[%c0_51, %72, %c1_52, %c0_53] : memref<1x44x12x32xbf16, #tpu.memory_space<vmem>>, vector<1x7x8x32xbf16>
    %74 = vector.shape_cast %73 : vector<1x7x8x32xbf16> to vector<7x8x32xbf16>
    %75 = vector.shape_cast %74 : vector<7x8x32xbf16> to vector<56x32xbf16>
    %c7 = arith.constant 7 : index
    %c0_54 = arith.constant 0 : index
    %c0_55 = arith.constant 0 : index
    %76 = vector.load %arg3[%c7, %c0_54, %c0_55] : memref<36x32x64xbf16, #tpu.memory_space<vmem>>, vector<1x32x64xbf16>
    %77 = vector.shape_cast %76 : vector<1x32x64xbf16> to vector<32x64xbf16>
    %cst_56 = arith.constant dense<0.000000e+00> : vector<56x64xf32>
    %78 = tpu.matmul %75, %77, %cst_56 {dimension_numbers = #tpu.dot_dimension_numbers<[1], [0], [0], [1], [0, 0, 1, 1], [], []>} : vector<56x32xbf16>, vector<32x64xbf16>, vector<56x64xf32> -> vector<56x64xf32>
    %79 = arith.addf %69, %78 : vector<56x64xf32>
    %c0_i32_57 = arith.constant 0 : i32
    %80 = arith.addi %c0_i32_57, %0 : i32
    %c2_i32_58 = arith.constant 2 : i32
    %81 = arith.addi %80, %c2_i32_58 : i32
    %c0_59 = arith.constant 0 : index
    %82 = arith.index_cast %81 : i32 to index
    %c2_60 = arith.constant 2 : index
    %c0_61 = arith.constant 0 : index
    %83 = vector.load %arg2[%c0_59, %82, %c2_60, %c0_61] : memref<1x44x12x32xbf16, #tpu.memory_space<vmem>>, vector<1x7x8x32xbf16>
    %84 = vector.shape_cast %83 : vector<1x7x8x32xbf16> to vector<7x8x32xbf16>
    %85 = vector.shape_cast %84 : vector<7x8x32xbf16> to vector<56x32xbf16>
    %c8 = arith.constant 8 : index
    %c0_62 = arith.constant 0 : index
    %c0_63 = arith.constant 0 : index
    %86 = vector.load %arg3[%c8, %c0_62, %c0_63] : memref<36x32x64xbf16, #tpu.memory_space<vmem>>, vector<1x32x64xbf16>
    %87 = vector.shape_cast %86 : vector<1x32x64xbf16> to vector<32x64xbf16>
    %cst_64 = arith.constant dense<0.000000e+00> : vector<56x64xf32>
    %88 = tpu.matmul %85, %87, %cst_64 {dimension_numbers = #tpu.dot_dimension_numbers<[1], [0], [0], [1], [0, 0, 1, 1], [], []>} : vector<56x32xbf16>, vector<32x64xbf16>, vector<56x64xf32> -> vector<56x64xf32>
    %89 = arith.addf %79, %88 : vector<56x64xf32>
    %c0_i32_65 = arith.constant 0 : i32
    %90 = arith.addi %c0_i32_65, %0 : i32
    %c1_i32_66 = arith.constant 1 : i32
    %91 = arith.addi %90, %c1_i32_66 : i32
    %c0_67 = arith.constant 0 : index
    %92 = arith.index_cast %91 : i32 to index
    %c1_68 = arith.constant 1 : index
    %c0_69 = arith.constant 0 : index
    %93 = vector.load %arg2[%c0_67, %92, %c1_68, %c0_69] : memref<1x44x12x32xbf16, #tpu.memory_space<vmem>>, vector<1x7x8x32xbf16>
    %94 = vector.shape_cast %93 : vector<1x7x8x32xbf16> to vector<7x8x32xbf16>
    %95 = vector.shape_cast %94 : vector<7x8x32xbf16> to vector<56x32xbf16>
    %c9 = arith.constant 9 : index
    %c0_70 = arith.constant 0 : index
    %c0_71 = arith.constant 0 : index
    %96 = vector.load %arg3[%c9, %c0_70, %c0_71] : memref<36x32x64xbf16, #tpu.memory_space<vmem>>, vector<1x32x64xbf16>
    %97 = vector.shape_cast %96 : vector<1x32x64xbf16> to vector<32x64xbf16>
    %cst_72 = arith.constant dense<0.000000e+00> : vector<56x64xf32>
    %98 = tpu.matmul %95, %97, %cst_72 {dimension_numbers = #tpu.dot_dimension_numbers<[1], [0], [0], [1], [0, 0, 1, 1], [], []>} : vector<56x32xbf16>, vector<32x64xbf16>, vector<56x64xf32> -> vector<56x64xf32>
    %c0_i32_73 = arith.constant 0 : i32
    %99 = arith.addi %c0_i32_73, %0 : i32
    %c1_i32_74 = arith.constant 1 : i32
    %100 = arith.addi %99, %c1_i32_74 : i32
    %c0_75 = arith.constant 0 : index
    %101 = arith.index_cast %100 : i32 to index
    %c2_76 = arith.constant 2 : index
    %c0_77 = arith.constant 0 : index
    %102 = vector.load %arg2[%c0_75, %101, %c2_76, %c0_77] : memref<1x44x12x32xbf16, #tpu.memory_space<vmem>>, vector<1x7x8x32xbf16>
    %103 = vector.shape_cast %102 : vector<1x7x8x32xbf16> to vector<7x8x32xbf16>
    %104 = vector.shape_cast %103 : vector<7x8x32xbf16> to vector<56x32xbf16>
    %c10 = arith.constant 10 : index
    %c0_78 = arith.constant 0 : index
    %c0_79 = arith.constant 0 : index
    %105 = vector.load %arg3[%c10, %c0_78, %c0_79] : memref<36x32x64xbf16, #tpu.memory_space<vmem>>, vector<1x32x64xbf16>
    %106 = vector.shape_cast %105 : vector<1x32x64xbf16> to vector<32x64xbf16>
    %cst_80 = arith.constant dense<0.000000e+00> : vector<56x64xf32>
    %107 = tpu.matmul %104, %106, %cst_80 {dimension_numbers = #tpu.dot_dimension_numbers<[1], [0], [0], [1], [0, 0, 1, 1], [], []>} : vector<56x32xbf16>, vector<32x64xbf16>, vector<56x64xf32> -> vector<56x64xf32>
    %108 = arith.addf %98, %107 : vector<56x64xf32>
    %c0_i32_81 = arith.constant 0 : i32
    %109 = arith.addi %c0_i32_81, %0 : i32
    %c1_i32_82 = arith.constant 1 : i32
    %110 = arith.addi %109, %c1_i32_82 : i32
    %c0_83 = arith.constant 0 : index
    %111 = arith.index_cast %110 : i32 to index
    %c3_84 = arith.constant 3 : index
    %c0_85 = arith.constant 0 : index
    %112 = vector.load %arg2[%c0_83, %111, %c3_84, %c0_85] : memref<1x44x12x32xbf16, #tpu.memory_space<vmem>>, vector<1x7x8x32xbf16>
    %113 = vector.shape_cast %112 : vector<1x7x8x32xbf16> to vector<7x8x32xbf16>
    %114 = vector.shape_cast %113 : vector<7x8x32xbf16> to vector<56x32xbf16>
    %c11 = arith.constant 11 : index
    %c0_86 = arith.constant 0 : index
    %c0_87 = arith.constant 0 : index
    %115 = vector.load %arg3[%c11, %c0_86, %c0_87] : memref<36x32x64xbf16, #tpu.memory_space<vmem>>, vector<1x32x64xbf16>
    %116 = vector.shape_cast %115 : vector<1x32x64xbf16> to vector<32x64xbf16>
    %cst_88 = arith.constant dense<0.000000e+00> : vector<56x64xf32>
    %117 = tpu.matmul %114, %116, %cst_88 {dimension_numbers = #tpu.dot_dimension_numbers<[1], [0], [0], [1], [0, 0, 1, 1], [], []>} : vector<56x32xbf16>, vector<32x64xbf16>, vector<56x64xf32> -> vector<56x64xf32>
    %118 = arith.addf %108, %117 : vector<56x64xf32>
    %c0_i32_89 = arith.constant 0 : i32
    %119 = arith.addi %c0_i32_89, %0 : i32
    %c2_i32_90 = arith.constant 2 : i32
    %120 = arith.addi %119, %c2_i32_90 : i32
    %c0_91 = arith.constant 0 : index
    %121 = arith.index_cast %120 : i32 to index
    %c1_92 = arith.constant 1 : index
    %c0_93 = arith.constant 0 : index
    %122 = vector.load %arg2[%c0_91, %121, %c1_92, %c0_93] : memref<1x44x12x32xbf16, #tpu.memory_space<vmem>>, vector<1x7x8x32xbf16>
    %123 = vector.shape_cast %122 : vector<1x7x8x32xbf16> to vector<7x8x32xbf16>
    %124 = vector.shape_cast %123 : vector<7x8x32xbf16> to vector<56x32xbf16>
    %c12 = arith.constant 12 : index
    %c0_94 = arith.constant 0 : index
    %c0_95 = arith.constant 0 : index
    %125 = vector.load %arg3[%c12, %c0_94, %c0_95] : memref<36x32x64xbf16, #tpu.memory_space<vmem>>, vector<1x32x64xbf16>
    %126 = vector.shape_cast %125 : vector<1x32x64xbf16> to vector<32x64xbf16>
    %cst_96 = arith.constant dense<0.000000e+00> : vector<56x64xf32>
    %127 = tpu.matmul %124, %126, %cst_96 {dimension_numbers = #tpu.dot_dimension_numbers<[1], [0], [0], [1], [0, 0, 1, 1], [], []>} : vector<56x32xbf16>, vector<32x64xbf16>, vector<56x64xf32> -> vector<56x64xf32>
    %128 = arith.addf %118, %127 : vector<56x64xf32>
    %c0_i32_97 = arith.constant 0 : i32
    %129 = arith.addi %c0_i32_97, %0 : i32
    %c2_i32_98 = arith.constant 2 : i32
    %130 = arith.addi %129, %c2_i32_98 : i32
    %c0_99 = arith.constant 0 : index
    %131 = arith.index_cast %130 : i32 to index
    %c2_100 = arith.constant 2 : index
    %c0_101 = arith.constant 0 : index
    %132 = vector.load %arg2[%c0_99, %131, %c2_100, %c0_101] : memref<1x44x12x32xbf16, #tpu.memory_space<vmem>>, vector<1x7x8x32xbf16>
    %133 = vector.shape_cast %132 : vector<1x7x8x32xbf16> to vector<7x8x32xbf16>
    %134 = vector.shape_cast %133 : vector<7x8x32xbf16> to vector<56x32xbf16>
    %c13 = arith.constant 13 : index
    %c0_102 = arith.constant 0 : index
    %c0_103 = arith.constant 0 : index
    %135 = vector.load %arg3[%c13, %c0_102, %c0_103] : memref<36x32x64xbf16, #tpu.memory_space<vmem>>, vector<1x32x64xbf16>
    %136 = vector.shape_cast %135 : vector<1x32x64xbf16> to vector<32x64xbf16>
    %cst_104 = arith.constant dense<0.000000e+00> : vector<56x64xf32>
    %137 = tpu.matmul %134, %136, %cst_104 {dimension_numbers = #tpu.dot_dimension_numbers<[1], [0], [0], [1], [0, 0, 1, 1], [], []>} : vector<56x32xbf16>, vector<32x64xbf16>, vector<56x64xf32> -> vector<56x64xf32>
    %138 = arith.addf %128, %137 : vector<56x64xf32>
    %c0_i32_105 = arith.constant 0 : i32
    %139 = arith.addi %c0_i32_105, %0 : i32
    %c2_i32_106 = arith.constant 2 : i32
    %140 = arith.addi %139, %c2_i32_106 : i32
    %c0_107 = arith.constant 0 : index
    %141 = arith.index_cast %140 : i32 to index
    %c3_108 = arith.constant 3 : index
    %c0_109 = arith.constant 0 : index
    %142 = vector.load %arg2[%c0_107, %141, %c3_108, %c0_109] : memref<1x44x12x32xbf16, #tpu.memory_space<vmem>>, vector<1x7x8x32xbf16>
    %143 = vector.shape_cast %142 : vector<1x7x8x32xbf16> to vector<7x8x32xbf16>
    %144 = vector.shape_cast %143 : vector<7x8x32xbf16> to vector<56x32xbf16>
    %c14 = arith.constant 14 : index
    %c0_110 = arith.constant 0 : index
    %c0_111 = arith.constant 0 : index
    %145 = vector.load %arg3[%c14, %c0_110, %c0_111] : memref<36x32x64xbf16, #tpu.memory_space<vmem>>, vector<1x32x64xbf16>
    %146 = vector.shape_cast %145 : vector<1x32x64xbf16> to vector<32x64xbf16>
    %cst_112 = arith.constant dense<0.000000e+00> : vector<56x64xf32>
    %147 = tpu.matmul %144, %146, %cst_112 {dimension_numbers = #tpu.dot_dimension_numbers<[1], [0], [0], [1], [0, 0, 1, 1], [], []>} : vector<56x32xbf16>, vector<32x64xbf16>, vector<56x64xf32> -> vector<56x64xf32>
    %148 = arith.addf %138, %147 : vector<56x64xf32>
    %c0_i32_113 = arith.constant 0 : i32
    %149 = arith.addi %c0_i32_113, %0 : i32
    %c3_i32 = arith.constant 3 : i32
    %150 = arith.addi %149, %c3_i32 : i32
    %c0_114 = arith.constant 0 : index
    %151 = arith.index_cast %150 : i32 to index
    %c1_115 = arith.constant 1 : index
    %c0_116 = arith.constant 0 : index
    %152 = vector.load %arg2[%c0_114, %151, %c1_115, %c0_116] : memref<1x44x12x32xbf16, #tpu.memory_space<vmem>>, vector<1x7x8x32xbf16>
    %153 = vector.shape_cast %152 : vector<1x7x8x32xbf16> to vector<7x8x32xbf16>
    %154 = vector.shape_cast %153 : vector<7x8x32xbf16> to vector<56x32xbf16>
    %c15 = arith.constant 15 : index
    %c0_117 = arith.constant 0 : index
    %c0_118 = arith.constant 0 : index
    %155 = vector.load %arg3[%c15, %c0_117, %c0_118] : memref<36x32x64xbf16, #tpu.memory_space<vmem>>, vector<1x32x64xbf16>
    %156 = vector.shape_cast %155 : vector<1x32x64xbf16> to vector<32x64xbf16>
    %cst_119 = arith.constant dense<0.000000e+00> : vector<56x64xf32>
    %157 = tpu.matmul %154, %156, %cst_119 {dimension_numbers = #tpu.dot_dimension_numbers<[1], [0], [0], [1], [0, 0, 1, 1], [], []>} : vector<56x32xbf16>, vector<32x64xbf16>, vector<56x64xf32> -> vector<56x64xf32>
    %158 = arith.addf %148, %157 : vector<56x64xf32>
    %c0_i32_120 = arith.constant 0 : i32
    %159 = arith.addi %c0_i32_120, %0 : i32
    %c3_i32_121 = arith.constant 3 : i32
    %160 = arith.addi %159, %c3_i32_121 : i32
    %c0_122 = arith.constant 0 : index
    %161 = arith.index_cast %160 : i32 to index
    %c2_123 = arith.constant 2 : index
    %c0_124 = arith.constant 0 : index
    %162 = vector.load %arg2[%c0_122, %161, %c2_123, %c0_124] : memref<1x44x12x32xbf16, #tpu.memory_space<vmem>>, vector<1x7x8x32xbf16>
    %163 = vector.shape_cast %162 : vector<1x7x8x32xbf16> to vector<7x8x32xbf16>
    %164 = vector.shape_cast %163 : vector<7x8x32xbf16> to vector<56x32xbf16>
    %c16 = arith.constant 16 : index
    %c0_125 = arith.constant 0 : index
    %c0_126 = arith.constant 0 : index
    %165 = vector.load %arg3[%c16, %c0_125, %c0_126] : memref<36x32x64xbf16, #tpu.memory_space<vmem>>, vector<1x32x64xbf16>
    %166 = vector.shape_cast %165 : vector<1x32x64xbf16> to vector<32x64xbf16>
    %cst_127 = arith.constant dense<0.000000e+00> : vector<56x64xf32>
    %167 = tpu.matmul %164, %166, %cst_127 {dimension_numbers = #tpu.dot_dimension_numbers<[1], [0], [0], [1], [0, 0, 1, 1], [], []>} : vector<56x32xbf16>, vector<32x64xbf16>, vector<56x64xf32> -> vector<56x64xf32>
    %168 = arith.addf %158, %167 : vector<56x64xf32>
    %c0_i32_128 = arith.constant 0 : i32
    %169 = arith.addi %c0_i32_128, %0 : i32
    %c3_i32_129 = arith.constant 3 : i32
    %170 = arith.addi %169, %c3_i32_129 : i32
    %c0_130 = arith.constant 0 : index
    %171 = arith.index_cast %170 : i32 to index
    %c3_131 = arith.constant 3 : index
    %c0_132 = arith.constant 0 : index
    %172 = vector.load %arg2[%c0_130, %171, %c3_131, %c0_132] : memref<1x44x12x32xbf16, #tpu.memory_space<vmem>>, vector<1x7x8x32xbf16>
    %173 = vector.shape_cast %172 : vector<1x7x8x32xbf16> to vector<7x8x32xbf16>
    %174 = vector.shape_cast %173 : vector<7x8x32xbf16> to vector<56x32xbf16>
    %c17 = arith.constant 17 : index
    %c0_133 = arith.constant 0 : index
    %c0_134 = arith.constant 0 : index
    %175 = vector.load %arg3[%c17, %c0_133, %c0_134] : memref<36x32x64xbf16, #tpu.memory_space<vmem>>, vector<1x32x64xbf16>
    %176 = vector.shape_cast %175 : vector<1x32x64xbf16> to vector<32x64xbf16>
    %cst_135 = arith.constant dense<0.000000e+00> : vector<56x64xf32>
    %177 = tpu.matmul %174, %176, %cst_135 {dimension_numbers = #tpu.dot_dimension_numbers<[1], [0], [0], [1], [0, 0, 1, 1], [], []>} : vector<56x32xbf16>, vector<32x64xbf16>, vector<56x64xf32> -> vector<56x64xf32>
    %178 = arith.addf %168, %177 : vector<56x64xf32>
    %c33_i32_136 = arith.constant 33 : i32
    %179 = arith.addi %c33_i32_136, %0 : i32
    %c0_i32_137 = arith.constant 0 : i32
    %180 = arith.addi %179, %c0_i32_137 : i32
    %c0_138 = arith.constant 0 : index
    %181 = arith.index_cast %180 : i32 to index
    %c0_139 = arith.constant 0 : index
    %c0_140 = arith.constant 0 : index
    %182 = vector.load %arg2[%c0_138, %181, %c0_139, %c0_140] : memref<1x44x12x32xbf16, #tpu.memory_space<vmem>>, vector<1x7x8x32xbf16>
    %183 = vector.shape_cast %182 : vector<1x7x8x32xbf16> to vector<7x8x32xbf16>
    %184 = vector.shape_cast %183 : vector<7x8x32xbf16> to vector<56x32xbf16>
    %c18 = arith.constant 18 : index
    %c0_141 = arith.constant 0 : index
    %c0_142 = arith.constant 0 : index
    %185 = vector.load %arg3[%c18, %c0_141, %c0_142] : memref<36x32x64xbf16, #tpu.memory_space<vmem>>, vector<1x32x64xbf16>
    %186 = vector.shape_cast %185 : vector<1x32x64xbf16> to vector<32x64xbf16>
    %cst_143 = arith.constant dense<0.000000e+00> : vector<56x64xf32>
    %187 = tpu.matmul %184, %186, %cst_143 {dimension_numbers = #tpu.dot_dimension_numbers<[1], [0], [0], [1], [0, 0, 1, 1], [], []>} : vector<56x32xbf16>, vector<32x64xbf16>, vector<56x64xf32> -> vector<56x64xf32>
    %c22_i32_144 = arith.constant 22 : i32
    %188 = arith.addi %c22_i32_144, %0 : i32
    %c0_i32_145 = arith.constant 0 : i32
    %189 = arith.addi %188, %c0_i32_145 : i32
    %c0_146 = arith.constant 0 : index
    %190 = arith.index_cast %189 : i32 to index
    %c2_147 = arith.constant 2 : index
    %c0_148 = arith.constant 0 : index
    %191 = vector.load %arg2[%c0_146, %190, %c2_147, %c0_148] : memref<1x44x12x32xbf16, #tpu.memory_space<vmem>>, vector<1x7x8x32xbf16>
    %192 = vector.shape_cast %191 : vector<1x7x8x32xbf16> to vector<7x8x32xbf16>
    %193 = vector.shape_cast %192 : vector<7x8x32xbf16> to vector<56x32xbf16>
    %c19 = arith.constant 19 : index
    %c0_149 = arith.constant 0 : index
    %c0_150 = arith.constant 0 : index
    %194 = vector.load %arg3[%c19, %c0_149, %c0_150] : memref<36x32x64xbf16, #tpu.memory_space<vmem>>, vector<1x32x64xbf16>
    %195 = vector.shape_cast %194 : vector<1x32x64xbf16> to vector<32x64xbf16>
    %cst_151 = arith.constant dense<0.000000e+00> : vector<56x64xf32>
    %196 = tpu.matmul %193, %195, %cst_151 {dimension_numbers = #tpu.dot_dimension_numbers<[1], [0], [0], [1], [0, 0, 1, 1], [], []>} : vector<56x32xbf16>, vector<32x64xbf16>, vector<56x64xf32> -> vector<56x64xf32>
    %197 = arith.addf %187, %196 : vector<56x64xf32>
    %c33_i32_152 = arith.constant 33 : i32
    %198 = arith.addi %c33_i32_152, %0 : i32
    %c0_i32_153 = arith.constant 0 : i32
    %199 = arith.addi %198, %c0_i32_153 : i32
    %c0_154 = arith.constant 0 : index
    %200 = arith.index_cast %199 : i32 to index
    %c3_155 = arith.constant 3 : index
    %c0_156 = arith.constant 0 : index
    %201 = vector.load %arg2[%c0_154, %200, %c3_155, %c0_156] : memref<1x44x12x32xbf16, #tpu.memory_space<vmem>>, vector<1x7x8x32xbf16>
    %202 = vector.shape_cast %201 : vector<1x7x8x32xbf16> to vector<7x8x32xbf16>
    %203 = vector.shape_cast %202 : vector<7x8x32xbf16> to vector<56x32xbf16>
    %c20 = arith.constant 20 : index
    %c0_157 = arith.constant 0 : index
    %c0_158 = arith.constant 0 : index
    %204 = vector.load %arg3[%c20, %c0_157, %c0_158] : memref<36x32x64xbf16, #tpu.memory_space<vmem>>, vector<1x32x64xbf16>
    %205 = vector.shape_cast %204 : vector<1x32x64xbf16> to vector<32x64xbf16>
    %cst_159 = arith.constant dense<0.000000e+00> : vector<56x64xf32>
    %206 = tpu.matmul %203, %205, %cst_159 {dimension_numbers = #tpu.dot_dimension_numbers<[1], [0], [0], [1], [0, 0, 1, 1], [], []>} : vector<56x32xbf16>, vector<32x64xbf16>, vector<56x64xf32> -> vector<56x64xf32>
    %207 = arith.addf %197, %206 : vector<56x64xf32>
    %c11_i32_160 = arith.constant 11 : i32
    %208 = arith.addi %c11_i32_160, %0 : i32
    %c2_i32_161 = arith.constant 2 : i32
    %209 = arith.addi %208, %c2_i32_161 : i32
    %c0_162 = arith.constant 0 : index
    %210 = arith.index_cast %209 : i32 to index
    %c0_163 = arith.constant 0 : index
    %c0_164 = arith.constant 0 : index
    %211 = vector.load %arg2[%c0_162, %210, %c0_163, %c0_164] : memref<1x44x12x32xbf16, #tpu.memory_space<vmem>>, vector<1x7x8x32xbf16>
    %212 = vector.shape_cast %211 : vector<1x7x8x32xbf16> to vector<7x8x32xbf16>
    %213 = vector.shape_cast %212 : vector<7x8x32xbf16> to vector<56x32xbf16>
    %c21 = arith.constant 21 : index
    %c0_165 = arith.constant 0 : index
    %c0_166 = arith.constant 0 : index
    %214 = vector.load %arg3[%c21, %c0_165, %c0_166] : memref<36x32x64xbf16, #tpu.memory_space<vmem>>, vector<1x32x64xbf16>
    %215 = vector.shape_cast %214 : vector<1x32x64xbf16> to vector<32x64xbf16>
    %cst_167 = arith.constant dense<0.000000e+00> : vector<56x64xf32>
    %216 = tpu.matmul %213, %215, %cst_167 {dimension_numbers = #tpu.dot_dimension_numbers<[1], [0], [0], [1], [0, 0, 1, 1], [], []>} : vector<56x32xbf16>, vector<32x64xbf16>, vector<56x64xf32> -> vector<56x64xf32>
    %217 = arith.addf %207, %216 : vector<56x64xf32>
    %c0_i32_168 = arith.constant 0 : i32
    %218 = arith.addi %c0_i32_168, %0 : i32
    %c2_i32_169 = arith.constant 2 : i32
    %219 = arith.addi %218, %c2_i32_169 : i32
    %c0_170 = arith.constant 0 : index
    %220 = arith.index_cast %219 : i32 to index
    %c2_171 = arith.constant 2 : index
    %c0_172 = arith.constant 0 : index
    %221 = vector.load %arg2[%c0_170, %220, %c2_171, %c0_172] : memref<1x44x12x32xbf16, #tpu.memory_space<vmem>>, vector<1x7x8x32xbf16>
    %222 = vector.shape_cast %221 : vector<1x7x8x32xbf16> to vector<7x8x32xbf16>
    %223 = vector.shape_cast %222 : vector<7x8x32xbf16> to vector<56x32xbf16>
    %c22 = arith.constant 22 : index
    %c0_173 = arith.constant 0 : index
    %c0_174 = arith.constant 0 : index
    %224 = vector.load %arg3[%c22, %c0_173, %c0_174] : memref<36x32x64xbf16, #tpu.memory_space<vmem>>, vector<1x32x64xbf16>
    %225 = vector.shape_cast %224 : vector<1x32x64xbf16> to vector<32x64xbf16>
    %cst_175 = arith.constant dense<0.000000e+00> : vector<56x64xf32>
    %226 = tpu.matmul %223, %225, %cst_175 {dimension_numbers = #tpu.dot_dimension_numbers<[1], [0], [0], [1], [0, 0, 1, 1], [], []>} : vector<56x32xbf16>, vector<32x64xbf16>, vector<56x64xf32> -> vector<56x64xf32>
    %227 = arith.addf %217, %226 : vector<56x64xf32>
    %c11_i32_176 = arith.constant 11 : i32
    %228 = arith.addi %c11_i32_176, %0 : i32
    %c2_i32_177 = arith.constant 2 : i32
    %229 = arith.addi %228, %c2_i32_177 : i32
    %c0_178 = arith.constant 0 : index
    %230 = arith.index_cast %229 : i32 to index
    %c3_179 = arith.constant 3 : index
    %c0_180 = arith.constant 0 : index
    %231 = vector.load %arg2[%c0_178, %230, %c3_179, %c0_180] : memref<1x44x12x32xbf16, #tpu.memory_space<vmem>>, vector<1x7x8x32xbf16>
    %232 = vector.shape_cast %231 : vector<1x7x8x32xbf16> to vector<7x8x32xbf16>
    %233 = vector.shape_cast %232 : vector<7x8x32xbf16> to vector<56x32xbf16>
    %c23 = arith.constant 23 : index
    %c0_181 = arith.constant 0 : index
    %c0_182 = arith.constant 0 : index
    %234 = vector.load %arg3[%c23, %c0_181, %c0_182] : memref<36x32x64xbf16, #tpu.memory_space<vmem>>, vector<1x32x64xbf16>
    %235 = vector.shape_cast %234 : vector<1x32x64xbf16> to vector<32x64xbf16>
    %cst_183 = arith.constant dense<0.000000e+00> : vector<56x64xf32>
    %236 = tpu.matmul %233, %235, %cst_183 {dimension_numbers = #tpu.dot_dimension_numbers<[1], [0], [0], [1], [0, 0, 1, 1], [], []>} : vector<56x32xbf16>, vector<32x64xbf16>, vector<56x64xf32> -> vector<56x64xf32>
    %237 = arith.addf %227, %236 : vector<56x64xf32>
    %c33_i32_184 = arith.constant 33 : i32
    %238 = arith.addi %c33_i32_184, %0 : i32
    %c3_i32_185 = arith.constant 3 : i32
    %239 = arith.addi %238, %c3_i32_185 : i32
    %c0_186 = arith.constant 0 : index
    %240 = arith.index_cast %239 : i32 to index
    %c0_187 = arith.constant 0 : index
    %c0_188 = arith.constant 0 : index
    %241 = vector.load %arg2[%c0_186, %240, %c0_187, %c0_188] : memref<1x44x12x32xbf16, #tpu.memory_space<vmem>>, vector<1x7x8x32xbf16>
    %242 = vector.shape_cast %241 : vector<1x7x8x32xbf16> to vector<7x8x32xbf16>
    %243 = vector.shape_cast %242 : vector<7x8x32xbf16> to vector<56x32xbf16>
    %c24 = arith.constant 24 : index
    %c0_189 = arith.constant 0 : index
    %c0_190 = arith.constant 0 : index
    %244 = vector.load %arg3[%c24, %c0_189, %c0_190] : memref<36x32x64xbf16, #tpu.memory_space<vmem>>, vector<1x32x64xbf16>
    %245 = vector.shape_cast %244 : vector<1x32x64xbf16> to vector<32x64xbf16>
    %cst_191 = arith.constant dense<0.000000e+00> : vector<56x64xf32>
    %246 = tpu.matmul %243, %245, %cst_191 {dimension_numbers = #tpu.dot_dimension_numbers<[1], [0], [0], [1], [0, 0, 1, 1], [], []>} : vector<56x32xbf16>, vector<32x64xbf16>, vector<56x64xf32> -> vector<56x64xf32>
    %247 = arith.addf %237, %246 : vector<56x64xf32>
    %c22_i32_192 = arith.constant 22 : i32
    %248 = arith.addi %c22_i32_192, %0 : i32
    %c3_i32_193 = arith.constant 3 : i32
    %249 = arith.addi %248, %c3_i32_193 : i32
    %c0_194 = arith.constant 0 : index
    %250 = arith.index_cast %249 : i32 to index
    %c2_195 = arith.constant 2 : index
    %c0_196 = arith.constant 0 : index
    %251 = vector.load %arg2[%c0_194, %250, %c2_195, %c0_196] : memref<1x44x12x32xbf16, #tpu.memory_space<vmem>>, vector<1x7x8x32xbf16>
    %252 = vector.shape_cast %251 : vector<1x7x8x32xbf16> to vector<7x8x32xbf16>
    %253 = vector.shape_cast %252 : vector<7x8x32xbf16> to vector<56x32xbf16>
    %c25 = arith.constant 25 : index
    %c0_197 = arith.constant 0 : index
    %c0_198 = arith.constant 0 : index
    %254 = vector.load %arg3[%c25, %c0_197, %c0_198] : memref<36x32x64xbf16, #tpu.memory_space<vmem>>, vector<1x32x64xbf16>
    %255 = vector.shape_cast %254 : vector<1x32x64xbf16> to vector<32x64xbf16>
    %cst_199 = arith.constant dense<0.000000e+00> : vector<56x64xf32>
    %256 = tpu.matmul %253, %255, %cst_199 {dimension_numbers = #tpu.dot_dimension_numbers<[1], [0], [0], [1], [0, 0, 1, 1], [], []>} : vector<56x32xbf16>, vector<32x64xbf16>, vector<56x64xf32> -> vector<56x64xf32>
    %257 = arith.addf %247, %256 : vector<56x64xf32>
    %c33_i32_200 = arith.constant 33 : i32
    %258 = arith.addi %c33_i32_200, %0 : i32
    %c3_i32_201 = arith.constant 3 : i32
    %259 = arith.addi %258, %c3_i32_201 : i32
    %c0_202 = arith.constant 0 : index
    %260 = arith.index_cast %259 : i32 to index
    %c3_203 = arith.constant 3 : index
    %c0_204 = arith.constant 0 : index
    %261 = vector.load %arg2[%c0_202, %260, %c3_203, %c0_204] : memref<1x44x12x32xbf16, #tpu.memory_space<vmem>>, vector<1x7x8x32xbf16>
    %262 = vector.shape_cast %261 : vector<1x7x8x32xbf16> to vector<7x8x32xbf16>
    %263 = vector.shape_cast %262 : vector<7x8x32xbf16> to vector<56x32xbf16>
    %c26 = arith.constant 26 : index
    %c0_205 = arith.constant 0 : index
    %c0_206 = arith.constant 0 : index
    %264 = vector.load %arg3[%c26, %c0_205, %c0_206] : memref<36x32x64xbf16, #tpu.memory_space<vmem>>, vector<1x32x64xbf16>
    %265 = vector.shape_cast %264 : vector<1x32x64xbf16> to vector<32x64xbf16>
    %cst_207 = arith.constant dense<0.000000e+00> : vector<56x64xf32>
    %266 = tpu.matmul %263, %265, %cst_207 {dimension_numbers = #tpu.dot_dimension_numbers<[1], [0], [0], [1], [0, 0, 1, 1], [], []>} : vector<56x32xbf16>, vector<32x64xbf16>, vector<56x64xf32> -> vector<56x64xf32>
    %267 = arith.addf %257, %266 : vector<56x64xf32>
    %c0_i32_208 = arith.constant 0 : i32
    %268 = arith.addi %c0_i32_208, %0 : i32
    %c0_i32_209 = arith.constant 0 : i32
    %269 = arith.addi %268, %c0_i32_209 : i32
    %c0_210 = arith.constant 0 : index
    %270 = arith.index_cast %269 : i32 to index
    %c0_211 = arith.constant 0 : index
    %c0_212 = arith.constant 0 : index
    %271 = vector.load %arg2[%c0_210, %270, %c0_211, %c0_212] : memref<1x44x12x32xbf16, #tpu.memory_space<vmem>>, vector<1x7x8x32xbf16>
    %272 = vector.shape_cast %271 : vector<1x7x8x32xbf16> to vector<7x8x32xbf16>
    %273 = vector.shape_cast %272 : vector<7x8x32xbf16> to vector<56x32xbf16>
    %c27 = arith.constant 27 : index
    %c0_213 = arith.constant 0 : index
    %c0_214 = arith.constant 0 : index
    %274 = vector.load %arg3[%c27, %c0_213, %c0_214] : memref<36x32x64xbf16, #tpu.memory_space<vmem>>, vector<1x32x64xbf16>
    %275 = vector.shape_cast %274 : vector<1x32x64xbf16> to vector<32x64xbf16>
    %cst_215 = arith.constant dense<0.000000e+00> : vector<56x64xf32>
    %276 = tpu.matmul %273, %275, %cst_215 {dimension_numbers = #tpu.dot_dimension_numbers<[1], [0], [0], [1], [0, 0, 1, 1], [], []>} : vector<56x32xbf16>, vector<32x64xbf16>, vector<56x64xf32> -> vector<56x64xf32>
    %c0_i32_216 = arith.constant 0 : i32
    %277 = arith.addi %c0_i32_216, %0 : i32
    %c0_i32_217 = arith.constant 0 : i32
    %278 = arith.addi %277, %c0_i32_217 : i32
    %c0_218 = arith.constant 0 : index
    %279 = arith.index_cast %278 : i32 to index
    %c2_219 = arith.constant 2 : index
    %c0_220 = arith.constant 0 : index
    %280 = vector.load %arg2[%c0_218, %279, %c2_219, %c0_220] : memref<1x44x12x32xbf16, #tpu.memory_space<vmem>>, vector<1x7x8x32xbf16>
    %281 = vector.shape_cast %280 : vector<1x7x8x32xbf16> to vector<7x8x32xbf16>
    %282 = vector.shape_cast %281 : vector<7x8x32xbf16> to vector<56x32xbf16>
    %c28 = arith.constant 28 : index
    %c0_221 = arith.constant 0 : index
    %c0_222 = arith.constant 0 : index
    %283 = vector.load %arg3[%c28, %c0_221, %c0_222] : memref<36x32x64xbf16, #tpu.memory_space<vmem>>, vector<1x32x64xbf16>
    %284 = vector.shape_cast %283 : vector<1x32x64xbf16> to vector<32x64xbf16>
    %cst_223 = arith.constant dense<0.000000e+00> : vector<56x64xf32>
    %285 = tpu.matmul %282, %284, %cst_223 {dimension_numbers = #tpu.dot_dimension_numbers<[1], [0], [0], [1], [0, 0, 1, 1], [], []>} : vector<56x32xbf16>, vector<32x64xbf16>, vector<56x64xf32> -> vector<56x64xf32>
    %286 = arith.addf %276, %285 : vector<56x64xf32>
    %c0_i32_224 = arith.constant 0 : i32
    %287 = arith.addi %c0_i32_224, %0 : i32
    %c0_i32_225 = arith.constant 0 : i32
    %288 = arith.addi %287, %c0_i32_225 : i32
    %c0_226 = arith.constant 0 : index
    %289 = arith.index_cast %288 : i32 to index
    %c4_227 = arith.constant 4 : index
    %c0_228 = arith.constant 0 : index
    %290 = vector.load %arg2[%c0_226, %289, %c4_227, %c0_228] : memref<1x44x12x32xbf16, #tpu.memory_space<vmem>>, vector<1x7x8x32xbf16>
    %291 = vector.shape_cast %290 : vector<1x7x8x32xbf16> to vector<7x8x32xbf16>
    %292 = vector.shape_cast %291 : vector<7x8x32xbf16> to vector<56x32xbf16>
    %c29 = arith.constant 29 : index
    %c0_229 = arith.constant 0 : index
    %c0_230 = arith.constant 0 : index
    %293 = vector.load %arg3[%c29, %c0_229, %c0_230] : memref<36x32x64xbf16, #tpu.memory_space<vmem>>, vector<1x32x64xbf16>
    %294 = vector.shape_cast %293 : vector<1x32x64xbf16> to vector<32x64xbf16>
    %cst_231 = arith.constant dense<0.000000e+00> : vector<56x64xf32>
    %295 = tpu.matmul %292, %294, %cst_231 {dimension_numbers = #tpu.dot_dimension_numbers<[1], [0], [0], [1], [0, 0, 1, 1], [], []>} : vector<56x32xbf16>, vector<32x64xbf16>, vector<56x64xf32> -> vector<56x64xf32>
    %296 = arith.addf %286, %295 : vector<56x64xf32>
    %c0_i32_232 = arith.constant 0 : i32
    %297 = arith.addi %c0_i32_232, %0 : i32
    %c2_i32_233 = arith.constant 2 : i32
    %298 = arith.addi %297, %c2_i32_233 : i32
    %c0_234 = arith.constant 0 : index
    %299 = arith.index_cast %298 : i32 to index
    %c0_235 = arith.constant 0 : index
    %c0_236 = arith.constant 0 : index
    %300 = vector.load %arg2[%c0_234, %299, %c0_235, %c0_236] : memref<1x44x12x32xbf16, #tpu.memory_space<vmem>>, vector<1x7x8x32xbf16>
    %301 = vector.shape_cast %300 : vector<1x7x8x32xbf16> to vector<7x8x32xbf16>
    %302 = vector.shape_cast %301 : vector<7x8x32xbf16> to vector<56x32xbf16>
    %c30 = arith.constant 30 : index
    %c0_237 = arith.constant 0 : index
    %c0_238 = arith.constant 0 : index
    %303 = vector.load %arg3[%c30, %c0_237, %c0_238] : memref<36x32x64xbf16, #tpu.memory_space<vmem>>, vector<1x32x64xbf16>
    %304 = vector.shape_cast %303 : vector<1x32x64xbf16> to vector<32x64xbf16>
    %cst_239 = arith.constant dense<0.000000e+00> : vector<56x64xf32>
    %305 = tpu.matmul %302, %304, %cst_239 {dimension_numbers = #tpu.dot_dimension_numbers<[1], [0], [0], [1], [0, 0, 1, 1], [], []>} : vector<56x32xbf16>, vector<32x64xbf16>, vector<56x64xf32> -> vector<56x64xf32>
    %306 = arith.addf %296, %305 : vector<56x64xf32>
    %c0_i32_240 = arith.constant 0 : i32
    %307 = arith.addi %c0_i32_240, %0 : i32
    %c2_i32_241 = arith.constant 2 : i32
    %308 = arith.addi %307, %c2_i32_241 : i32
    %c0_242 = arith.constant 0 : index
    %309 = arith.index_cast %308 : i32 to index
    %c2_243 = arith.constant 2 : index
    %c0_244 = arith.constant 0 : index
    %310 = vector.load %arg2[%c0_242, %309, %c2_243, %c0_244] : memref<1x44x12x32xbf16, #tpu.memory_space<vmem>>, vector<1x7x8x32xbf16>
    %311 = vector.shape_cast %310 : vector<1x7x8x32xbf16> to vector<7x8x32xbf16>
    %312 = vector.shape_cast %311 : vector<7x8x32xbf16> to vector<56x32xbf16>
    %c31 = arith.constant 31 : index
    %c0_245 = arith.constant 0 : index
    %c0_246 = arith.constant 0 : index
    %313 = vector.load %arg3[%c31, %c0_245, %c0_246] : memref<36x32x64xbf16, #tpu.memory_space<vmem>>, vector<1x32x64xbf16>
    %314 = vector.shape_cast %313 : vector<1x32x64xbf16> to vector<32x64xbf16>
    %cst_247 = arith.constant dense<0.000000e+00> : vector<56x64xf32>
    %315 = tpu.matmul %312, %314, %cst_247 {dimension_numbers = #tpu.dot_dimension_numbers<[1], [0], [0], [1], [0, 0, 1, 1], [], []>} : vector<56x32xbf16>, vector<32x64xbf16>, vector<56x64xf32> -> vector<56x64xf32>
    %316 = arith.addf %306, %315 : vector<56x64xf32>
    %c0_i32_248 = arith.constant 0 : i32
    %317 = arith.addi %c0_i32_248, %0 : i32
    %c2_i32_249 = arith.constant 2 : i32
    %318 = arith.addi %317, %c2_i32_249 : i32
    %c0_250 = arith.constant 0 : index
    %319 = arith.index_cast %318 : i32 to index
    %c4_251 = arith.constant 4 : index
    %c0_252 = arith.constant 0 : index
    %320 = vector.load %arg2[%c0_250, %319, %c4_251, %c0_252] : memref<1x44x12x32xbf16, #tpu.memory_space<vmem>>, vector<1x7x8x32xbf16>
    %321 = vector.shape_cast %320 : vector<1x7x8x32xbf16> to vector<7x8x32xbf16>
    %322 = vector.shape_cast %321 : vector<7x8x32xbf16> to vector<56x32xbf16>
    %c32 = arith.constant 32 : index
    %c0_253 = arith.constant 0 : index
    %c0_254 = arith.constant 0 : index
    %323 = vector.load %arg3[%c32, %c0_253, %c0_254] : memref<36x32x64xbf16, #tpu.memory_space<vmem>>, vector<1x32x64xbf16>
    %324 = vector.shape_cast %323 : vector<1x32x64xbf16> to vector<32x64xbf16>
    %cst_255 = arith.constant dense<0.000000e+00> : vector<56x64xf32>
    %325 = tpu.matmul %322, %324, %cst_255 {dimension_numbers = #tpu.dot_dimension_numbers<[1], [0], [0], [1], [0, 0, 1, 1], [], []>} : vector<56x32xbf16>, vector<32x64xbf16>, vector<56x64xf32> -> vector<56x64xf32>
    %326 = arith.addf %316, %325 : vector<56x64xf32>
    %c0_i32_256 = arith.constant 0 : i32
    %327 = arith.addi %c0_i32_256, %0 : i32
    %c4_i32 = arith.constant 4 : i32
    %328 = arith.addi %327, %c4_i32 : i32
    %c0_257 = arith.constant 0 : index
    %329 = arith.index_cast %328 : i32 to index
    %c0_258 = arith.constant 0 : index
    %c0_259 = arith.constant 0 : index
    %330 = vector.load %arg2[%c0_257, %329, %c0_258, %c0_259] : memref<1x44x12x32xbf16, #tpu.memory_space<vmem>>, vector<1x7x8x32xbf16>
    %331 = vector.shape_cast %330 : vector<1x7x8x32xbf16> to vector<7x8x32xbf16>
    %332 = vector.shape_cast %331 : vector<7x8x32xbf16> to vector<56x32xbf16>
    %c33 = arith.constant 33 : index
    %c0_260 = arith.constant 0 : index
    %c0_261 = arith.constant 0 : index
    %333 = vector.load %arg3[%c33, %c0_260, %c0_261] : memref<36x32x64xbf16, #tpu.memory_space<vmem>>, vector<1x32x64xbf16>
    %334 = vector.shape_cast %333 : vector<1x32x64xbf16> to vector<32x64xbf16>
    %cst_262 = arith.constant dense<0.000000e+00> : vector<56x64xf32>
    %335 = tpu.matmul %332, %334, %cst_262 {dimension_numbers = #tpu.dot_dimension_numbers<[1], [0], [0], [1], [0, 0, 1, 1], [], []>} : vector<56x32xbf16>, vector<32x64xbf16>, vector<56x64xf32> -> vector<56x64xf32>
    %336 = arith.addf %326, %335 : vector<56x64xf32>
    %c0_i32_263 = arith.constant 0 : i32
    %337 = arith.addi %c0_i32_263, %0 : i32
    %c4_i32_264 = arith.constant 4 : i32
    %338 = arith.addi %337, %c4_i32_264 : i32
    %c0_265 = arith.constant 0 : index
    %339 = arith.index_cast %338 : i32 to index
    %c2_266 = arith.constant 2 : index
    %c0_267 = arith.constant 0 : index
    %340 = vector.load %arg2[%c0_265, %339, %c2_266, %c0_267] : memref<1x44x12x32xbf16, #tpu.memory_space<vmem>>, vector<1x7x8x32xbf16>
    %341 = vector.shape_cast %340 : vector<1x7x8x32xbf16> to vector<7x8x32xbf16>
    %342 = vector.shape_cast %341 : vector<7x8x32xbf16> to vector<56x32xbf16>
    %c34 = arith.constant 34 : index
    %c0_268 = arith.constant 0 : index
    %c0_269 = arith.constant 0 : index
    %343 = vector.load %arg3[%c34, %c0_268, %c0_269] : memref<36x32x64xbf16, #tpu.memory_space<vmem>>, vector<1x32x64xbf16>
    %344 = vector.shape_cast %343 : vector<1x32x64xbf16> to vector<32x64xbf16>
    %cst_270 = arith.constant dense<0.000000e+00> : vector<56x64xf32>
    %345 = tpu.matmul %342, %344, %cst_270 {dimension_numbers = #tpu.dot_dimension_numbers<[1], [0], [0], [1], [0, 0, 1, 1], [], []>} : vector<56x32xbf16>, vector<32x64xbf16>, vector<56x64xf32> -> vector<56x64xf32>
    %346 = arith.addf %336, %345 : vector<56x64xf32>
    %c0_i32_271 = arith.constant 0 : i32
    %347 = arith.addi %c0_i32_271, %0 : i32
    %c4_i32_272 = arith.constant 4 : i32
    %348 = arith.addi %347, %c4_i32_272 : i32
    %c0_273 = arith.constant 0 : index
    %349 = arith.index_cast %348 : i32 to index
    %c4_274 = arith.constant 4 : index
    %c0_275 = arith.constant 0 : index
    %350 = vector.load %arg2[%c0_273, %349, %c4_274, %c0_275] : memref<1x44x12x32xbf16, #tpu.memory_space<vmem>>, vector<1x7x8x32xbf16>
    %351 = vector.shape_cast %350 : vector<1x7x8x32xbf16> to vector<7x8x32xbf16>
    %352 = vector.shape_cast %351 : vector<7x8x32xbf16> to vector<56x32xbf16>
    %c35 = arith.constant 35 : index
    %c0_276 = arith.constant 0 : index
    %c0_277 = arith.constant 0 : index
    %353 = vector.load %arg3[%c35, %c0_276, %c0_277] : memref<36x32x64xbf16, #tpu.memory_space<vmem>>, vector<1x32x64xbf16>
    %354 = vector.shape_cast %353 : vector<1x32x64xbf16> to vector<32x64xbf16>
    %cst_278 = arith.constant dense<0.000000e+00> : vector<56x64xf32>
    %355 = tpu.matmul %352, %354, %cst_278 {dimension_numbers = #tpu.dot_dimension_numbers<[1], [0], [0], [1], [0, 0, 1, 1], [], []>} : vector<56x32xbf16>, vector<32x64xbf16>, vector<56x64xf32> -> vector<56x64xf32>
    %356 = arith.addf %346, %355 : vector<56x64xf32>
    %357 = tpu.concatenate %89, %178, %267, %356 in 1 : vector<56x64xf32>, vector<56x64xf32>, vector<56x64xf32>, vector<56x64xf32> -> vector<56x256xf32>
    %c0_279 = arith.constant 0 : index
    %c0_280 = arith.constant 0 : index
    %358 = vector.load %arg4[%c0_279, %c0_280] : memref<1x256xf32, #tpu.memory_space<vmem>>, vector<1x256xf32>
    %359 = vector.broadcast %358 : vector<1x256xf32> to vector<56x256xf32>
    %360 = arith.addf %357, %359 : vector<56x256xf32>
    %361 = arith.truncf %360 : vector<56x256xf32> to vector<56x256xbf16>
    %c0_281 = arith.constant 0 : index
    %c0_282 = arith.constant 0 : index
    %c0_283 = arith.constant 0 : index
    %362 = vector.load %arg5[%c0_281, %c0_282, %c0_283] : memref<1x56x256xbf16, #tpu.memory_space<vmem>>, vector<1x56x256xbf16>
    %363 = vector.shape_cast %362 : vector<1x56x256xbf16> to vector<56x256xbf16>
    %364 = vector.shape_cast %361 : vector<56x256xbf16> to vector<1x56x256xbf16>
    tpu.vector_store %arg5[%c0_281, %c0_282, %c0_283], %364 {strides = array<i32>} : memref<1x56x256xbf16, #tpu.memory_space<vmem>>, vector<1x56x256xbf16>,
    return
  }
  func.func @transform_0(%arg0: i32, %arg1: i32) -> (i32, i32, i32, i32) {
    %c0_i32 = arith.constant 0 : i32
    %c0_i32_0 = arith.constant 0 : i32
    %c0_i32_1 = arith.constant 0 : i32
    %c0_i32_2 = arith.constant 0 : i32
    return %arg0, %c0_i32, %c0_i32_0, %c0_i32_1 : i32, i32, i32, i32
  }
  func.func @transform_1(%arg0: i32, %arg1: i32) -> (i32, i32, i32) {
    %c0_i32 = arith.constant 0 : i32
    %c0_i32_0 = arith.constant 0 : i32
    %c0_i32_1 = arith.constant 0 : i32
    %c0_i32_2 = arith.constant 0 : i32
    return %c0_i32, %c0_i32_0, %c0_i32_1 : i32, i32, i32
  }
  func.func @transform_2(%arg0: i32, %arg1: i32) -> (i32, i32) {
    %c0_i32 = arith.constant 0 : i32
    %c0_i32_0 = arith.constant 0 : i32
    %c0_i32_1 = arith.constant 0 : i32
    return %c0_i32, %c0_i32_0 : i32, i32
  }
  func.func @transform_3(%arg0: i32, %arg1: i32) -> (i32, i32, i32) {
    %c0_i32 = arith.constant 0 : i32
    %c0_i32_0 = arith.constant 0 : i32
    return %arg0, %arg1, %c0_i32 : i32, i32, i32
  }
}

</mosaic_0001>

<llo_original>
// kernel: dilatedconv_reduction_forward.1
$region0: #{dilatedconv_reduction_forward.1}
  #allocation0 [shape = 'u32[]', space=smem, size = 0x4, offset = 0x4, fixed_abs, tag = 'smem constant byte address 0x4 - core index']
  #allocation1 [shape = 'u32[144,128]{1,0:T(1,128)}', space=vmem, size = 0x12000, scoped, tag = 'internal scratch']
  %s0 = inlined_call_operand.vmem [shape: bf16[2,44,12,32], index: 0, kind: input, shape index: {}]
  %s1 = inlined_call_operand.vmem [shape: bf16[36,32,64], index: 1, kind: input, shape index: {}]
  %s2 = inlined_call_operand.vmem [shape: f32[1,256], index: 2, kind: input, shape index: {}]
  %s3 = inlined_call_operand.vmem [shape: bf16[2,56,256], index: 3, kind: output, shape index: {}]
  %s4 = sld [smem:[#allocation0]]
  $region45: #{dilatedconv_reduction_forward.1} parent=0
    _
  %s6 = ssub.s32 1, %s4
  %s7 = scalar_select 0, %s6, %s4
  loop: start=0, step=1, limit=4
  $region2: #{dilatedconv_reduction_forward.1} parent=0 // loop_pre_header
    _
  $region3: #{dilatedconv_reduction_forward.1} parent=0 // loop_header
    %s9 = sphi 0, %s13
    %p10 = scmp.ge.s32.totalorder %s9, 4
    %s16 = sphi 0, %s28
    %s17 = sphi 0, %s24
    %s18 = sphi 0, %s16
    %s19 = sphi 0, %s17
    %s20 = sphi 0, %s18
    %s21 = sphi 0, %s19
    %s31 = sphi 0, %s33
    %s34 = sphi 0, %s31
    %s35 = sphi 0, %s34
    %s51 = sphi 0, %s35
    %s55 = sphi 0, %s55
    %s57 = sphi 0, %s55
    %s58 = sphi 0, %s57
    %s72 = sphi 0, %s58
    %s76 = sphi 0, %s76
    %s78 = sphi 0, %s76
    %s79 = sphi 0, %s78
    %s93 = sphi 0, %s79
    %s101 = sphi 0, %s103
    %s104 = sphi 0, %s101
    %s105 = sphi 0, %s104
    %s121 = sphi 0, %s105
  $region4: #{dilatedconv_reduction_forward.1} parent=0 // loop_header_branch
    %12 = sbr.rel (%p10) target = $region8
  $region5: #{dilatedconv_reduction_forward.1} parent=0 // loop_body
    %s14 = ssub.s32 %s9, 1
    %s15 = ssub.s32 %s9, 2
    %s22 = sadd.s32 1, %s17
    %p23 = scmp.ge.s32.totalorder %s22, 1
    %s24 = scalar_select %p23, 0, %s22
    %s25 = sadd.s32 1, %s16
    %s26 = scalar_select %p23, %s25, %s16
    %p27 = scmp.ge.s32.totalorder %s26, 2
    %s28 = scalar_select %p27, 0, %s26
    %s29 = ssub.s32 %s16, %s28
    %p30 = scmp.eq.s32.totalorder %s29, 0
    %s32 = sadd.s32 %s31, 1
    %s33 = scalar_select %p30, %s31, %s32
    %p36 = pneg %p30
    %p37 = scmp.eq.s32.totalorder %s9, 1
    %p38 = por %p36, %p37
    %p39 = scmp.ne.s32.totalorder %s31, %s34
    %p40 = scmp.eq.s32.totalorder %s9, 0
    %p41 = por %p39, %p40
    %p42 = scmp.ne.s32.totalorder %s31, %s34
    %p43 = scmp.eq.s32.totalorder %s14, 1
    %p44 = por %p42, %p43
    %p45 = scmp.ne.s32.totalorder %s34, %s35
    %p46 = scmp.eq.s32.totalorder %s14, 0
    %p47 = por %p45, %p46
    %p48 = scmp.ne.s32.totalorder %s34, %s35
    %p49 = scmp.eq.s32.totalorder %s15, 1
    %p50 = por %p48, %p49
    %p52 = scmp.ne.s32.totalorder %s35, %s51
    %p53 = scmp.eq.s32.totalorder %s15, 0
    %p54 = por %p52, %p53
    %s56 = sadd.s32 %s55, 1
    %p59 = scmp.eq.s32.totalorder %s9, 1
    %p60 = scmp.ne.s32.totalorder %s55, %s57
    %p61 = scmp.eq.s32.totalorder %s9, 0
    %p62 = por %p60, %p61
    %p63 = scmp.ne.s32.totalorder %s55, %s57
    %p64 = scmp.eq.s32.totalorder %s14, 1
    %p65 = por %p63, %p64
    %p66 = scmp.ne.s32.totalorder %s57, %s58
    %p67 = scmp.eq.s32.totalorder %s14, 0
    %p68 = por %p66, %p67
    %p69 = scmp.ne.s32.totalorder %s57, %s58
    %p70 = scmp.eq.s32.totalorder %s15, 1
    %p71 = por %p69, %p70
    %p73 = scmp.ne.s32.totalorder %s58, %s72
    %p74 = scmp.eq.s32.totalorder %s15, 0
    %p75 = por %p73, %p74
    %s77 = sadd.s32 %s76, 1
    %p80 = scmp.eq.s32.totalorder %s9, 1
    %p81 = scmp.ne.s32.totalorder %s76, %s78
    %p82 = scmp.eq.s32.totalorder %s9, 0
    %p83 = por %p81, %p82
    %p84 = scmp.ne.s32.totalorder %s76, %s78
    %p85 = scmp.eq.s32.totalorder %s14, 1
    %p86 = por %p84, %p85
    %p87 = scmp.ne.s32.totalorder %s78, %s79
    %p88 = scmp.eq.s32.totalorder %s14, 0
    %p89 = por %p87, %p88
    %p90 = scmp.ne.s32.totalorder %s78, %s79
    %p91 = scmp.eq.s32.totalorder %s15, 1
    %p92 = por %p90, %p91
    %p94 = scmp.ne.s32.totalorder %s79, %s93
    %p95 = scmp.eq.s32.totalorder %s15, 0
    %p96 = por %p94, %p95
    %s97 = ssub.s32 %s16, %s28
    %s98 = ssub.s32 %s17, %s24
    %s99 = sor.u32 %s97, %s98
    %p100 = scmp.eq.s32.totalorder %s99, 0
    %s102 = sadd.s32 %s101, 1
    %s103 = scalar_select %p100, %s101, %s102
    %p106 = pneg %p100
    %p107 = scmp.eq.s32.totalorder %s9, 1
    %p108 = por %p106, %p107
    %p109 = scmp.ne.s32.totalorder %s101, %s104
    %p110 = scmp.eq.s32.totalorder %s9, 0
    %p111 = por %p109, %p110
    %p112 = scmp.ne.s32.totalorder %s101, %s104
    %p113 = scmp.eq.s32.totalorder %s14, 1
    %p114 = por %p112, %p113
    %p115 = scmp.ne.s32.totalorder %s104, %s105
    %p116 = scmp.eq.s32.totalorder %s14, 0
    %p117 = por %p115, %p116
    %p118 = scmp.ne.s32.totalorder %s104, %s105
    %p119 = scmp.eq.s32.totalorder %s15, 1
    %p120 = por %p118, %p119
    %p122 = scmp.ne.s32.totalorder %s105, %s121
    %p123 = scmp.eq.s32.totalorder %s15, 0
    %p124 = por %p122, %p123
    %p125 = scmp.le.s32.totalorder 1, %s9
    %p126 = scmp.lt.s32.totalorder %s9, 3
    %p127 = pnand %p125, %p126
    %p128 = pneg %p127
    // Predicated region
    $region9: #{dilatedconv_reduction_forward.1} parent=5 // pred_check
      _
    $region10: #{dilatedconv_reduction_forward.1} parent=5 // pred_check_branch
      %130 = sbr.rel (%p127) target = $region12
    $region11: #{dilatedconv_reduction_forward.1} parent=5 // pred_region
      %s131 = ssub.s32 %s9, 1
      // Predicated region
      $region13: #{dilatedconv_reduction_forward.1} parent=11 // pred_check
        %p132 = pneg %p68
      $region14: #{dilatedconv_reduction_forward.1} parent=11 // pred_check_branch
        %134 = sbr.rel (%p132) target = $region16
      $region15: #{dilatedconv_reduction_forward.1} parent=11 // pred_region
        _
      $region16: #{dilatedconv_reduction_forward.1} parent=11 // pred_fallthru
        _
      // Predicated region
      $region17: #{dilatedconv_reduction_forward.1} parent=11 // pred_check
        %p135 = pneg %p89
      $region18: #{dilatedconv_reduction_forward.1} parent=11 // pred_check_branch
        %137 = sbr.rel (%p135) target = $region20
      $region19: #{dilatedconv_reduction_forward.1} parent=11 // pred_region
        _
      $region20: #{dilatedconv_reduction_forward.1} parent=11 // pred_fallthru
        _
    $region12: #{dilatedconv_reduction_forward.1} parent=5 // pred_fallthru
      _
    %p138 = scmp.lt.s32.totalorder %s9, 2
    // Predicated region
    $region21: #{dilatedconv_reduction_forward.1} parent=5 // pred_check
      %p139 = pneg %p138
    $region22: #{dilatedconv_reduction_forward.1} parent=5 // pred_check_branch
      %141 = sbr.rel (%p139) target = $region24
    $region23: #{dilatedconv_reduction_forward.1} parent=5 // pred_region
      // Predicated region
      $region25: #{dilatedconv_reduction_forward.1} parent=23 // pred_check
        %p142 = pneg %p41
      $region26: #{dilatedconv_reduction_forward.1} parent=23 // pred_check_branch
        %144 = sbr.rel (%p142) target = $region28
      $region27: #{dilatedconv_reduction_forward.1} parent=23 // pred_region
        %p145 = scmp.lt.s32.totalorder %s16, 1
        %s146 = scalar_select %p145, %s16, 1
        %s147 = smul.addr %s146, 88
        %s148 = smul.addr %s147, 4
        %s149 = scalar_lea.vmem %s0, %s148
      $region28: #{dilatedconv_reduction_forward.1} parent=23 // pred_fallthru
        _
    $region24: #{dilatedconv_reduction_forward.1} parent=5 // pred_fallthru
      _
    %p150 = scmp.le.s32.totalorder 1, %s9
    %p151 = scmp.lt.s32.totalorder %s9, 3
    %p152 = pnand %p150, %p151
    %p153 = pneg %p152
    // Predicated region
    $region29: #{dilatedconv_reduction_forward.1} parent=5 // pred_check
      _
    $region30: #{dilatedconv_reduction_forward.1} parent=5 // pred_check_branch
      %155 = sbr.rel (%p152) target = $region32
    $region31: #{dilatedconv_reduction_forward.1} parent=5 // pred_region
      %s156 = ssub.s32 %s9, 1
      %p157 = scmp.lt.s32.totalorder %s18, 1
      %s158 = scalar_select %p157, %s18, 1
      %s159 = smul.addr %s158, 88
      %s160 = smul.addr %s159, 4
      %s161 = scalar_lea.vmem %s0, %s160
      %p162 = pneg %p47
      %p163 = pneg %p44
      %p164 = pneg %p68
      %p165 = pneg %p65
      %p166 = pneg %p89
      %p167 = pneg %p86
      %p168 = pneg %p117
      %p169 = pneg %p114
      %s170 = smul.u32 7, %s19
      %p171 = scmp.lt.s32.totalorder %s18, 1
      %s172 = scalar_select %p171, %s18, 1
      %p173 = scmp.lt.s32.totalorder %s170, 6
      %s174 = scalar_select %p173, %s170, 6
      %s175 = smul.addr %s174, 2
      %s176 = smul.addr %s172, 14
      %s177 = sadd.s32 %s175, %s176
      %s178 = smul.addr %s177, 4
      %s179 = scalar_lea.vmem %s3, %s178
      %p180 = scmp.lt.s32.totalorder %s18, 1
      %s181 = scalar_select %p180, %s18, 1
      %s182 = smul.addr %s181, 88
      %s183 = smul.addr %s182, 4
      %s184 = scalar_lea.vmem %s0, %s183
      %s185 = smul.u32 7, %s19
      %p186 = scmp.lt.s32.totalorder %s18, 1
      %s187 = scalar_select %p186, %s18, 1
      %p188 = scmp.lt.s32.totalorder %s185, 6
      %s189 = scalar_select %p188, %s185, 6
      %s190 = smul.addr %s189, 2
      %s191 = smul.addr %s187, 14
      %s192 = sadd.s32 %s190, %s191
      %s193 = smul.addr %s192, 4
      %s194 = scalar_lea.vmem %s3, %s193
      %s195 = smul.u32 7, %s19
      %s197 = smul.u32 %s19, 7
      %s198 = sadd.s32 %s197, 1
      %s199 = smul.u32 %s198, 2
      %s200 = smul.addr %s199, 4
      %s201 = scalar_lea.vmem %s184, %s200
      %v202 = vld [vmem:[%s201] sm:$0xf]
      %v203 = vld [vmem:[%s201 + $0x4] sm:$0x1]
      %v204 = vld [vmem:[%s201 + $0x8] sm:$0xf]
      %v205 = vld [vmem:[%s201 + $0xc] sm:$0x1]
      %v206 = vld [vmem:[%s201 + $0x10] sm:$0xf]
      %v207 = vld [vmem:[%s201 + $0x14] sm:$0x1]
      %v208 = vld [vmem:[%s201 + $0x18] sm:$0xf]
      %v209 = vld [vmem:[%s201 + $0x1c] sm:$0x1]
      %v210 = vld [vmem:[%s201 + $0x20] sm:$0xf]
      %v211 = vld [vmem:[%s201 + $0x24] sm:$0x1]
      %v212 = vld [vmem:[%s201 + $0x28] sm:$0xf]
      %v213 = vld [vmem:[%s201 + $0x2c] sm:$0x1]
      %v214 = vld [vmem:[%s201 + $0x30] sm:$0xf]
      %v215 = vld [vmem:[%s201 + $0x34] sm:$0x1]
      %vm216 = vsmask.f32 3328
      %vm217 = vsmask.f32 7440
      %vm218 = vmor %vm216, %vm217
      %v220 = vshrl.u32 %v202, 16
      %v222 = vrot.slane %v220, 4
      %v223 = vshll.u32 %v202, 16
      %v225 = vrot.slane %v223, 5
      %v226 = vor.u32 %v222, %v225
      %v227 = vrot.slane %v226, 4
      %v229 = vshll.u32 %v203, 16
      %v231 = vrot.slane %v229, 5
      %v232 = vsel %vm218, %v227, %v231
      %v234 = vshrl.u32 %v204, 16
      %v236 = vrot.slane %v234, 4
      %v237 = vshll.u32 %v204, 16
      %v239 = vrot.slane %v237, 5
      %v240 = vor.u32 %v236, %v239
      %v241 = vrot.slane %v240, 4
      %v243 = vshll.u32 %v205, 16
      %v245 = vrot.slane %v243, 5
      %v246 = vsel %vm218, %v241, %v245
      %v248 = vshrl.u32 %v206, 16
      %v250 = vrot.slane %v248, 4
      %v251 = vshll.u32 %v206, 16
      %v253 = vrot.slane %v251, 5
      %v254 = vor.u32 %v250, %v253
      %v255 = vrot.slane %v254, 4
      %v257 = vshll.u32 %v207, 16
      %v259 = vrot.slane %v257, 5
      %v260 = vsel %vm218, %v255, %v259
      %v262 = vshrl.u32 %v208, 16
      %v264 = vrot.slane %v262, 4
      %v265 = vshll.u32 %v208, 16
      %v267 = vrot.slane %v265, 5
      %v268 = vor.u32 %v264, %v267
      %v269 = vrot.slane %v268, 4
      %v271 = vshll.u32 %v209, 16
      %v273 = vrot.slane %v271, 5
      %v274 = vsel %vm218, %v269, %v273
      %v276 = vshrl.u32 %v210, 16
      %v278 = vrot.slane %v276, 4
      %v279 = vshll.u32 %v210, 16
      %v281 = vrot.slane %v279, 5
      %v282 = vor.u32 %v278, %v281
      %v283 = vrot.slane %v282, 4
      %v285 = vshll.u32 %v211, 16
      %v287 = vrot.slane %v285, 5
      %v288 = vsel %vm218, %v283, %v287
      %v290 = vshrl.u32 %v212, 16
      %v292 = vrot.slane %v290, 4
      %v293 = vshll.u32 %v212, 16
      %v295 = vrot.slane %v293, 5
      %v296 = vor.u32 %v292, %v295
      %v297 = vrot.slane %v296, 4
      %v299 = vshll.u32 %v213, 16
      %v301 = vrot.slane %v299, 5
      %v302 = vsel %vm218, %v297, %v301
      %v304 = vshrl.u32 %v214, 16
      %v306 = vrot.slane %v304, 4
      %v307 = vshll.u32 %v214, 16
      %v309 = vrot.slane %v307, 5
      %v310 = vor.u32 %v306, %v309
      %v311 = vrot.slane %v310, 4
      %v313 = vshll.u32 %v215, 16
      %v315 = vrot.slane %v313, 5
      %v316 = vsel %vm218, %v311, %v315
      %v317 = vld [vmem:[%s1] sm:$0xf]
      %v318 = vld [vmem:[%s1 + $0x4] sm:$0xf]
      %v319 = vld [vmem:[%s1 + $0x8] sm:$0xf]
      %v320 = vld [vmem:[%s1 + $0xc] sm:$0xf]
      %s321 = sadd.s32 %s197, 12
      %s322 = smul.u32 %s321, 2
      %s323 = smul.addr %s322, 4
      %s324 = scalar_lea.vmem %s184, %s323
      %v325 = vld [vmem:[%s324] sm:$0xf]
      %v326 = vld [vmem:[%s324 + $0x4] sm:$0x1]
      %v327 = vld [vmem:[%s324 + $0x8] sm:$0xf]
      %v328 = vld [vmem:[%s324 + $0xc] sm:$0x1]
      %v329 = vld [vmem:[%s324 + $0x10] sm:$0xf]
      %v330 = vld [vmem:[%s324 + $0x14] sm:$0x1]
      %v331 = vld [vmem:[%s324 + $0x18] sm:$0xf]
      %v332 = vld [vmem:[%s324 + $0x1c] sm:$0x1]
      %v333 = vld [vmem:[%s324 + $0x20] sm:$0xf]
      %v334 = vld [vmem:[%s324 + $0x24] sm:$0x1]
      %v335 = vld [vmem:[%s324 + $0x28] sm:$0xf]
      %v336 = vld [vmem:[%s324 + $0x2c] sm:$0x1]
      %v337 = vld [vmem:[%s324 + $0x30] sm:$0xf]
      %v338 = vld [vmem:[%s324 + $0x34] sm:$0x1]
      %v340 = vshrl.u32 %v325, 16
      %v342 = vrot.slane %v340, 4
      %v343 = vshll.u32 %v325, 16
      %v345 = vrot.slane %v343, 5
      %v346 = vor.u32 %v342, %v345
      %v347 = vrot.slane %v346, 4
      %v349 = vshll.u32 %v326, 16
      %v351 = vrot.slane %v349, 5
      %v352 = vsel %vm218, %v347, %v351
      %v354 = vshrl.u32 %v327, 16
      %v356 = vrot.slane %v354, 4
      %v357 = vshll.u32 %v327, 16
      %v359 = vrot.slane %v357, 5
      %v360 = vor.u32 %v356, %v359
      %v361 = vrot.slane %v360, 4
      %v363 = vshll.u32 %v328, 16
      %v365 = vrot.slane %v363, 5
      %v366 = vsel %vm218, %v361, %v365
      %v368 = vshrl.u32 %v329, 16
      %v370 = vrot.slane %v368, 4
      %v371 = vshll.u32 %v329, 16
      %v373 = vrot.slane %v371, 5
      %v374 = vor.u32 %v370, %v373
      %v375 = vrot.slane %v374, 4
      %v377 = vshll.u32 %v330, 16
      %v379 = vrot.slane %v377, 5
      %v380 = vsel %vm218, %v375, %v379
      %v382 = vshrl.u32 %v331, 16
      %v384 = vrot.slane %v382, 4
      %v385 = vshll.u32 %v331, 16
      %v387 = vrot.slane %v385, 5
      %v388 = vor.u32 %v384, %v387
      %v389 = vrot.slane %v388, 4
      %v391 = vshll.u32 %v332, 16
      %v393 = vrot.slane %v391, 5
      %v394 = vsel %vm218, %v389, %v393
      %v396 = vshrl.u32 %v333, 16
      %v398 = vrot.slane %v396, 4
      %v399 = vshll.u32 %v333, 16
      %v401 = vrot.slane %v399, 5
      %v402 = vor.u32 %v398, %v401
      %v403 = vrot.slane %v402, 4
      %v405 = vshll.u32 %v334, 16
      %v407 = vrot.slane %v405, 5
      %v408 = vsel %vm218, %v403, %v407
      %v410 = vshrl.u32 %v335, 16
      %v412 = vrot.slane %v410, 4
      %v413 = vshll.u32 %v335, 16
      %v415 = vrot.slane %v413, 5
      %v416 = vor.u32 %v412, %v415
      %v417 = vrot.slane %v416, 4
      %v419 = vshll.u32 %v336, 16
      %v421 = vrot.slane %v419, 5
      %v422 = vsel %vm218, %v417, %v421
      %v424 = vshrl.u32 %v337, 16
      %v426 = vrot.slane %v424, 4
      %v427 = vshll.u32 %v337, 16
      %v429 = vrot.slane %v427, 5
      %v430 = vor.u32 %v426, %v429
      %v431 = vrot.slane %v430, 4
      %v433 = vshll.u32 %v338, 16
      %v435 = vrot.slane %v433, 5
      %v436 = vsel %vm218, %v431, %v435
      %s437 = scalar_lea.vmem %s1, 16
      %v438 = vld [vmem:[%s437] sm:$0xf]
      %v439 = vld [vmem:[%s437 + $0x4] sm:$0xf]
      %v440 = vld [vmem:[%s437 + $0x8] sm:$0xf]
      %v441 = vld [vmem:[%s437 + $0xc] sm:$0xf]
      %v442 = vunpack.c.l.b16 %v352
      %v443 = vunpack.c.l.b16 %v366
      %v444 = vunpack.c.l.b16 %v380
      %v445 = vunpack.c.l.b16 %v394
      %v446 = vunpack.c.l.b16 %v408
      %v447 = vunpack.c.l.b16 %v422
      %v448 = vunpack.c.l.b16 %v436
      %v449 = vpack.c.b16 %v443, %v442
      %v450 = vpack.c.b16 %v445, %v444
      %v451 = vpack.c.b16 %v447, %v446
      %v452 = vpack.c.b16 %v448, %v448
      %v457 = vunpack.c.l.b16 %v438
      %v458 = vunpack.c.l.b16 %v439
      %v459 = vunpack.c.l.b16 %v440
      %v460 = vunpack.c.l.b16 %v441
      %v461 = vpack.c.b16 %v458, %v457
      %v462 = vpack.c.b16 %v460, %v459
      %vm465 = vcmask 261120
      %v467 = vsel %vm465, %v449, 0
      %v470 = vsel %vm465, %v450, 0
      %v473 = vsel %vm465, %v451, 0
      %v476 = vsel %vm465, %v452, 0
      %478 = vmatprep.subr.bf16.mxu0 0
      %479 = vmatpush1.bf16.msra.mxu0 %v461
      %480 = vmatprep.subr.bf16.mxu0 0
      %481 = vmatpush1.bf16.msra.mxu0 %v462
      %482 = vmatprep.subr.bf16.mxu0 0
      %483 = vmatpush1.bf16.msra.mxu0 0
      %484 = vmatprep.subr.bf16.mxu0 0
      %485 = vmatpush1.bf16.msra.mxu0 0
      %486 = vmatprep.subr.bf16.mxu0 0
      %487 = vmatpush1.bf16.msra.mxu0 0
      %488 = vmatprep.subr.bf16.mxu0 0
      %489 = vmatpush1.bf16.msra.mxu0 0
      %490 = vmatprep.subr.bf16.mxu0 0
      %491 = vmatpush1.bf16.msra.mxu0 0
      %492 = vmatprep.subr.bf16.mxu0 0
      %493 = vmatpush1.bf16.msra.mxu0 0
      %494 = vmatprep.subr.bf16.mxu0 0
      %495 = vmatpush1.bf16.msra.mxu0 0
      %496 = vmatprep.subr.bf16.mxu0 0
      %497 = vmatpush1.bf16.msra.mxu0 0
      %498 = vmatprep.subr.bf16.mxu0 0
      %499 = vmatpush1.bf16.msra.mxu0 0
      %500 = vmatprep.subr.bf16.mxu0 0
      %501 = vmatpush1.bf16.msra.mxu0 0
      %502 = vmatprep.subr.bf16.mxu0 0
      %503 = vmatpush1.bf16.msra.mxu0 0
      %504 = vmatprep.subr.bf16.mxu0 0
      %505 = vmatpush1.bf16.msra.mxu0 0
      %506 = vmatprep.subr.bf16.mxu0 0
      %507 = vmatpush1.bf16.msra.mxu0 0
      %508 = vmatprep.subr.bf16.mxu0 0
      %509 = vmatpush1.bf16.msra.mxu0 0
      %510 = vmatprep.mubr.bf16.mxu0 0
      %511 = vmatmul.mubr.bf16.gmra.mrb[0].mxu0 %v467
      %v512 = vpop.f32.mrb[0].mxu0
      %v513 = vadd.f32 0.0, %v512
      %v514 = vpop.f32.mrb[0].mxu0
      %v515 = vpop.f32.mrb[0].mxu0
      %v516 = vadd.f32 0.0, %v515
      %v517 = vpop.f32.mrb[0].mxu0
      %518 = vmatprep.mubr.bf16.mxu0 0
      %519 = vmatmul.mubr.bf16.gmra.mrb[0].mxu0 %v470
      %v520 = vpop.f32.mrb[0].mxu0
      %v521 = vadd.f32 0.0, %v520
      %v522 = vpop.f32.mrb[0].mxu0
      %v523 = vpop.f32.mrb[0].mxu0
      %v524 = vadd.f32 0.0, %v523
      %v525 = vpop.f32.mrb[0].mxu0
      %526 = vmatprep.mubr.bf16.mxu0 0
      %527 = vmatmul.mubr.bf16.gmra.mrb[0].mxu0 %v473
      %v528 = vpop.f32.mrb[0].mxu0
      %v529 = vadd.f32 0.0, %v528
      %v530 = vpop.f32.mrb[0].mxu0
      %v531 = vpop.f32.mrb[0].mxu0
      %v532 = vadd.f32 0.0, %v531
      %v533 = vpop.f32.mrb[0].mxu0
      %534 = vmatprep.mubr.bf16.mxu0 0
      %535 = vmatmul.mubr.bf16.gmra.mrb[0].mxu0 %v476
      %v536 = vpop.f32.mrb[0].mxu0
      %v537 = vadd.f32 0.0, %v536
      %v538 = vpop.f32.mrb[0].mxu0
      %v539 = vpop.f32.mrb[0].mxu0
      %v540 = vpop.f32.mrb[0].mxu0
      %541 = vdwg.mxu0
      %v542 = vunpack.c.l.b16 %v232
      %v543 = vunpack.c.l.b16 %v246
      %v544 = vunpack.c.l.b16 %v260
      %v545 = vunpack.c.l.b16 %v274
      %v546 = vunpack.c.l.b16 %v288
      %v547 = vunpack.c.l.b16 %v302
      %v548 = vunpack.c.l.b16 %v316
      %v549 = vpack.c.b16 %v543, %v542
      %v550 = vpack.c.b16 %v545, %v544
      %v551 = vpack.c.b16 %v547, %v546
      %v552 = vpack.c.b16 %v548, %v548
      %v557 = vunpack.c.l.b16 %v317
      %v558 = vunpack.c.l.b16 %v318
      %v559 = vunpack.c.l.b16 %v319
      %v560 = vunpack.c.l.b16 %v320
      %v561 = vpack.c.b16 %v558, %v557
      %v562 = vpack.c.b16 %v560, %v559
      %v566 = vsel %vm465, %v549, 0
      %v569 = vsel %vm465, %v550, 0
      %v572 = vsel %vm465, %v551, 0
      %v575 = vsel %vm465, %v552, 0
      %577 = vmatprep.subr.bf16.mxu0 0
      %578 = vmatpush1.bf16.msra.mxu0 %v561
      %579 = vmatprep.subr.bf16.mxu0 0
      %580 = vmatpush1.bf16.msra.mxu0 %v562
      %581 = vmatprep.subr.bf16.mxu0 0
      %582 = vmatpush1.bf16.msra.mxu0 0
      %583 = vmatprep.subr.bf16.mxu0 0
      %584 = vmatpush1.bf16.msra.mxu0 0
      %585 = vmatprep.subr.bf16.mxu0 0
      %586 = vmatpush1.bf16.msra.mxu0 0
      %587 = vmatprep.subr.bf16.mxu0 0
      %588 = vmatpush1.bf16.msra.mxu0 0
      %589 = vmatprep.subr.bf16.mxu0 0
      %590 = vmatpush1.bf16.msra.mxu0 0
      %591 = vmatprep.subr.bf16.mxu0 0
      %592 = vmatpush1.bf16.msra.mxu0 0
      %593 = vmatprep.subr.bf16.mxu0 0
      %594 = vmatpush1.bf16.msra.mxu0 0
      %595 = vmatprep.subr.bf16.mxu0 0
      %596 = vmatpush1.bf16.msra.mxu0 0
      %597 = vmatprep.subr.bf16.mxu0 0
      %598 = vmatpush1.bf16.msra.mxu0 0
      %599 = vmatprep.subr.bf16.mxu0 0
      %600 = vmatpush1.bf16.msra.mxu0 0
      %601 = vmatprep.subr.bf16.mxu0 0
      %602 = vmatpush1.bf16.msra.mxu0 0
      %603 = vmatprep.subr.bf16.mxu0 0
      %604 = vmatpush1.bf16.msra.mxu0 0
      %605 = vmatprep.subr.bf16.mxu0 0
      %606 = vmatpush1.bf16.msra.mxu0 0
      %607 = vmatprep.subr.bf16.mxu0 0
      %608 = vmatpush1.bf16.msra.mxu0 0
      %609 = vmatprep.mubr.bf16.mxu0 0
      %610 = vmatmul.mubr.bf16.gmra.mrb[0].mxu0 %v566
      %v611 = vpop.f32.mrb[0].mxu0
      %v612 = vadd.f32 %v513, %v611
      %v613 = vpop.f32.mrb[0].mxu0
      %v614 = vpop.f32.mrb[0].mxu0
      %v615 = vadd.f32 %v516, %v614
      %v616 = vpop.f32.mrb[0].mxu0
      %617 = vmatprep.mubr.bf16.mxu0 0
      %618 = vmatmul.mubr.bf16.gmra.mrb[0].mxu0 %v569
      %v619 = vpop.f32.mrb[0].mxu0
      %v620 = vadd.f32 %v521, %v619
      %v621 = vpop.f32.mrb[0].mxu0
      %v622 = vpop.f32.mrb[0].mxu0
      %v623 = vadd.f32 %v524, %v622
      %v624 = vpop.f32.mrb[0].mxu0
      %625 = vmatprep.mubr.bf16.mxu0 0
      %626 = vmatmul.mubr.bf16.gmra.mrb[0].mxu0 %v572
      %v627 = vpop.f32.mrb[0].mxu0
      %v628 = vadd.f32 %v529, %v627
      %v629 = vpop.f32.mrb[0].mxu0
      %v630 = vpop.f32.mrb[0].mxu0
      %v631 = vadd.f32 %v532, %v630
      %v632 = vpop.f32.mrb[0].mxu0
      %633 = vmatprep.mubr.bf16.mxu0 0
      %634 = vmatmul.mubr.bf16.gmra.mrb[0].mxu0 %v575
      %v635 = vpop.f32.mrb[0].mxu0
      %v636 = vadd.f32 %v537, %v635
      %v637 = vpop.f32.mrb[0].mxu0
      %v638 = vpop.f32.mrb[0].mxu0
      %v639 = vpop.f32.mrb[0].mxu0
      %640 = vdwg.mxu0
      %v641 = vld [vmem:[%s201] sm:$0xe]
      %v642 = vld [vmem:[%s201 + $0x8] sm:$0xe]
      %v643 = vld [vmem:[%s201 + $0x10] sm:$0xe]
      %v644 = vld [vmem:[%s201 + $0x18] sm:$0xe]
      %v645 = vld [vmem:[%s201 + $0x20] sm:$0xe]
      %v646 = vld [vmem:[%s201 + $0x28] sm:$0xe]
      %v647 = vld [vmem:[%s201 + $0x30] sm:$0xe]
      %vm662 = vcmask 1042432
      %vm663 = vcmask 1046532
      %vm664 = vmor %vm662, %vm663
      %v665 = vrot.slane %v641, 5
      %v666 = vrot.slane %v665, 4
      %v667 = vrot.slane %v203, 5
      %v668 = vsel %vm664, %v666, %v667
      %v669 = vrot.slane %v642, 5
      %v670 = vrot.slane %v669, 4
      %v671 = vrot.slane %v205, 5
      %v672 = vsel %vm664, %v670, %v671
      %v673 = vrot.slane %v643, 5
      %v674 = vrot.slane %v673, 4
      %v675 = vrot.slane %v207, 5
      %v676 = vsel %vm664, %v674, %v675
      %v677 = vrot.slane %v644, 5
      %v678 = vrot.slane %v677, 4
      %v679 = vrot.slane %v209, 5
      %v680 = vsel %vm664, %v678, %v679
      %v681 = vrot.slane %v645, 5
      %v682 = vrot.slane %v681, 4
      %v683 = vrot.slane %v211, 5
      %v684 = vsel %vm664, %v682, %v683
      %v685 = vrot.slane %v646, 5
      %v686 = vrot.slane %v685, 4
      %v687 = vrot.slane %v213, 5
      %v688 = vsel %vm664, %v686, %v687
      %v689 = vrot.slane %v647, 5
      %v690 = vrot.slane %v689, 4
      %v691 = vrot.slane %v215, 5
      %v692 = vsel %vm664, %v690, %v691
      %s693 = scalar_lea.vmem %s1, 32
      %v694 = vld [vmem:[%s693] sm:$0xf]
      %v695 = vld [vmem:[%s693 + $0x4] sm:$0xf]
      %v696 = vld [vmem:[%s693 + $0x8] sm:$0xf]
      %v697 = vld [vmem:[%s693 + $0xc] sm:$0xf]
      %v698 = vunpack.c.l.b16 %v668
      %v699 = vunpack.c.l.b16 %v672
      %v700 = vunpack.c.l.b16 %v676
      %v701 = vunpack.c.l.b16 %v680
      %v702 = vunpack.c.l.b16 %v684
      %v703 = vunpack.c.l.b16 %v688
      %v704 = vunpack.c.l.b16 %v692
      %v705 = vpack.c.b16 %v699, %v698
      %v706 = vpack.c.b16 %v701, %v700
      %v707 = vpack.c.b16 %v703, %v702
      %v708 = vpack.c.b16 %v704, %v704
      %v713 = vunpack.c.l.b16 %v694
      %v714 = vunpack.c.l.b16 %v695
      %v715 = vunpack.c.l.b16 %v696
      %v716 = vunpack.c.l.b16 %v697
      %v717 = vpack.c.b16 %v714, %v713
      %v718 = vpack.c.b16 %v716, %v715
      %v722 = vsel %vm465, %v705, 0
      %v725 = vsel %vm465, %v706, 0
      %v728 = vsel %vm465, %v707, 0
      %v731 = vsel %vm465, %v708, 0
      %733 = vmatprep.subr.bf16.mxu0 0
      %734 = vmatpush1.bf16.msra.mxu0 %v717
      %735 = vmatprep.subr.bf16.mxu0 0
      %736 = vmatpush1.bf16.msra.mxu0 %v718
      %737 = vmatprep.subr.bf16.mxu0 0
      %738 = vmatpush1.bf16.msra.mxu0 0
      %739 = vmatprep.subr.bf16.mxu0 0
      %740 = vmatpush1.bf16.msra.mxu0 0
      %741 = vmatprep.subr.bf16.mxu0 0
      %742 = vmatpush1.bf16.msra.mxu0 0
      %743 = vmatprep.subr.bf16.mxu0 0
      %744 = vmatpush1.bf16.msra.mxu0 0
      %745 = vmatprep.subr.bf16.mxu0 0
      %746 = vmatpush1.bf16.msra.mxu0 0
      %747 = vmatprep.subr.bf16.mxu0 0
      %748 = vmatpush1.bf16.msra.mxu0 0
      %749 = vmatprep.subr.bf16.mxu0 0
      %750 = vmatpush1.bf16.msra.mxu0 0
      %751 = vmatprep.subr.bf16.mxu0 0
      %752 = vmatpush1.bf16.msra.mxu0 0
      %753 = vmatprep.subr.bf16.mxu0 0
      %754 = vmatpush1.bf16.msra.mxu0 0
      %755 = vmatprep.subr.bf16.mxu0 0
      %756 = vmatpush1.bf16.msra.mxu0 0
      %757 = vmatprep.subr.bf16.mxu0 0
      %758 = vmatpush1.bf16.msra.mxu0 0
      %759 = vmatprep.subr.bf16.mxu0 0
      %760 = vmatpush1.bf16.msra.mxu0 0
      %761 = vmatprep.subr.bf16.mxu0 0
      %762 = vmatpush1.bf16.msra.mxu0 0
      %763 = vmatprep.subr.bf16.mxu0 0
      %764 = vmatpush1.bf16.msra.mxu0 0
      %765 = vmatprep.mubr.bf16.mxu0 0
      %766 = vmatmul.mubr.bf16.gmra.mrb[0].mxu0 %v722
      %v767 = vpop.f32.mrb[0].mxu0
      %v768 = vadd.f32 0.0, %v767
      %v769 = vpop.f32.mrb[0].mxu0
      %v770 = vpop.f32.mrb[0].mxu0
      %v771 = vadd.f32 0.0, %v770
      %v772 = vpop.f32.mrb[0].mxu0
      %773 = vmatprep.mubr.bf16.mxu0 0
      %774 = vmatmul.mubr.bf16.gmra.mrb[0].mxu0 %v725
      %v775 = vpop.f32.mrb[0].mxu0
      %v776 = vadd.f32 0.0, %v775
      %v777 = vpop.f32.mrb[0].mxu0
      %v778 = vpop.f32.mrb[0].mxu0
      %v779 = vadd.f32 0.0, %v778
      %v780 = vpop.f32.mrb[0].mxu0
      %781 = vmatprep.mubr.bf16.mxu0 0
      %782 = vmatmul.mubr.bf16.gmra.mrb[0].mxu0 %v728
      %v783 = vpop.f32.mrb[0].mxu0
      %v784 = vadd.f32 0.0, %v783
      %v785 = vpop.f32.mrb[0].mxu0
      %v786 = vpop.f32.mrb[0].mxu0
      %v787 = vadd.f32 0.0, %v786
      %v788 = vpop.f32.mrb[0].mxu0
      %789 = vmatprep.mubr.bf16.mxu0 0
      %790 = vmatmul.mubr.bf16.gmra.mrb[0].mxu0 %v731
      %v791 = vpop.f32.mrb[0].mxu0
      %v792 = vadd.f32 0.0, %v791
      %v793 = vpop.f32.mrb[0].mxu0
      %v794 = vpop.f32.mrb[0].mxu0
      %v795 = vpop.f32.mrb[0].mxu0
      %796 = vdwg.mxu0
      %v797 = vadd.f32 %v612, %v768
      %v798 = vadd.f32 %v615, %v771
      %v799 = vadd.f32 %v620, %v776
      %v800 = vadd.f32 %v623, %v779
      %v801 = vadd.f32 %v628, %v784
      %v802 = vadd.f32 %v631, %v787
      %v803 = vadd.f32 %v636, %v792
      %s804 = sadd.s32 %s197, 23
      %s805 = smul.u32 %s804, 2
      %s806 = smul.addr %s805, 4
      %s807 = scalar_lea.vmem %s184, %s806
      %v808 = vld [vmem:[%s807] sm:$0xf]
      %v809 = vld [vmem:[%s807 + $0x4] sm:$0x1]
      %v810 = vld [vmem:[%s807 + $0x8] sm:$0xf]
      %v811 = vld [vmem:[%s807 + $0xc] sm:$0x1]
      %v812 = vld [vmem:[%s807 + $0x10] sm:$0xf]
      %v813 = vld [vmem:[%s807 + $0x14] sm:$0x1]
      %v814 = vld [vmem:[%s807 + $0x18] sm:$0xf]
      %v815 = vld [vmem:[%s807 + $0x1c] sm:$0x1]
      %v816 = vld [vmem:[%s807 + $0x20] sm:$0xf]
      %v817 = vld [vmem:[%s807 + $0x24] sm:$0x1]
      %v818 = vld [vmem:[%s807 + $0x28] sm:$0xf]
      %v819 = vld [vmem:[%s807 + $0x2c] sm:$0x1]
      %v820 = vld [vmem:[%s807 + $0x30] sm:$0xf]
      %v821 = vld [vmem:[%s807 + $0x34] sm:$0x1]
      %v823 = vshrl.u32 %v808, 16
      %v825 = vrot.slane %v823, 4
      %v826 = vshll.u32 %v808, 16
      %v828 = vrot.slane %v826, 5
      %v829 = vor.u32 %v825, %v828
      %v830 = vrot.slane %v829, 4
      %v832 = vshll.u32 %v809, 16
      %v834 = vrot.slane %v832, 5
      %v835 = vsel %vm218, %v830, %v834
      %v837 = vshrl.u32 %v810, 16
      %v839 = vrot.slane %v837, 4
      %v840 = vshll.u32 %v810, 16
      %v842 = vrot.slane %v840, 5
      %v843 = vor.u32 %v839, %v842
      %v844 = vrot.slane %v843, 4
      %v846 = vshll.u32 %v811, 16
      %v848 = vrot.slane %v846, 5
      %v849 = vsel %vm218, %v844, %v848
      %v851 = vshrl.u32 %v812, 16
      %v853 = vrot.slane %v851, 4
      %v854 = vshll.u32 %v812, 16
      %v856 = vrot.slane %v854, 5
      %v857 = vor.u32 %v853, %v856
      %v858 = vrot.slane %v857, 4
      %v860 = vshll.u32 %v813, 16
      %v862 = vrot.slane %v860, 5
      %v863 = vsel %vm218, %v858, %v862
      %v865 = vshrl.u32 %v814, 16
      %v867 = vrot.slane %v865, 4
      %v868 = vshll.u32 %v814, 16
      %v870 = vrot.slane %v868, 5
      %v871 = vor.u32 %v867, %v870
      %v872 = vrot.slane %v871, 4
      %v874 = vshll.u32 %v815, 16
      %v876 = vrot.slane %v874, 5
      %v877 = vsel %vm218, %v872, %v876
      %v879 = vshrl.u32 %v816, 16
      %v881 = vrot.slane %v879, 4
      %v882 = vshll.u32 %v816, 16
      %v884 = vrot.slane %v882, 5
      %v885 = vor.u32 %v881, %v884
      %v886 = vrot.slane %v885, 4
      %v888 = vshll.u32 %v817, 16
      %v890 = vrot.slane %v888, 5
      %v891 = vsel %vm218, %v886, %v890
      %v893 = vshrl.u32 %v818, 16
      %v895 = vrot.slane %v893, 4
      %v896 = vshll.u32 %v818, 16
      %v898 = vrot.slane %v896, 5
      %v899 = vor.u32 %v895, %v898
      %v900 = vrot.slane %v899, 4
      %v902 = vshll.u32 %v819, 16
      %v904 = vrot.slane %v902, 5
      %v905 = vsel %vm218, %v900, %v904
      %v907 = vshrl.u32 %v820, 16
      %v909 = vrot.slane %v907, 4
      %v910 = vshll.u32 %v820, 16
      %v912 = vrot.slane %v910, 5
      %v913 = vor.u32 %v909, %v912
      %v914 = vrot.slane %v913, 4
      %v916 = vshll.u32 %v821, 16
      %v918 = vrot.slane %v916, 5
      %v919 = vsel %vm218, %v914, %v918
      %s920 = scalar_lea.vmem %s1, 48
      %v921 = vld [vmem:[%s920] sm:$0xf]
      %v922 = vld [vmem:[%s920 + $0x4] sm:$0xf]
      %v923 = vld [vmem:[%s920 + $0x8] sm:$0xf]
      %v924 = vld [vmem:[%s920 + $0xc] sm:$0xf]
      %v925 = vunpack.c.l.b16 %v835
      %v926 = vunpack.c.l.b16 %v849
      %v927 = vunpack.c.l.b16 %v863
      %v928 = vunpack.c.l.b16 %v877
      %v929 = vunpack.c.l.b16 %v891
      %v930 = vunpack.c.l.b16 %v905
      %v931 = vunpack.c.l.b16 %v919
      %v932 = vpack.c.b16 %v926, %v925
      %v933 = vpack.c.b16 %v928, %v927
      %v934 = vpack.c.b16 %v930, %v929
      %v935 = vpack.c.b16 %v931, %v931
      %v940 = vunpack.c.l.b16 %v921
      %v941 = vunpack.c.l.b16 %v922
      %v942 = vunpack.c.l.b16 %v923
      %v943 = vunpack.c.l.b16 %v924
      %v944 = vpack.c.b16 %v941, %v940
      %v945 = vpack.c.b16 %v943, %v942
      %v949 = vsel %vm465, %v932, 0
      %v952 = vsel %vm465, %v933, 0
      %v955 = vsel %vm465, %v934, 0
      %v958 = vsel %vm465, %v935, 0
      %960 = vmatprep.subr.bf16.mxu0 0
      %961 = vmatpush1.bf16.msra.mxu0 %v944
      %962 = vmatprep.subr.bf16.mxu0 0
      %963 = vmatpush1.bf16.msra.mxu0 %v945
      %964 = vmatprep.subr.bf16.mxu0 0
      %965 = vmatpush1.bf16.msra.mxu0 0
      %966 = vmatprep.subr.bf16.mxu0 0
      %967 = vmatpush1.bf16.msra.mxu0 0
      %968 = vmatprep.subr.bf16.mxu0 0
      %969 = vmatpush1.bf16.msra.mxu0 0
      %970 = vmatprep.subr.bf16.mxu0 0
      %971 = vmatpush1.bf16.msra.mxu0 0
      %972 = vmatprep.subr.bf16.mxu0 0
      %973 = vmatpush1.bf16.msra.mxu0 0
      %974 = vmatprep.subr.bf16.mxu0 0
      %975 = vmatpush1.bf16.msra.mxu0 0
      %976 = vmatprep.subr.bf16.mxu0 0
      %977 = vmatpush1.bf16.msra.mxu0 0
      %978 = vmatprep.subr.bf16.mxu0 0
      %979 = vmatpush1.bf16.msra.mxu0 0
      %980 = vmatprep.subr.bf16.mxu0 0
      %981 = vmatpush1.bf16.msra.mxu0 0
      %982 = vmatprep.subr.bf16.mxu0 0
      %983 = vmatpush1.bf16.msra.mxu0 0
      %984 = vmatprep.subr.bf16.mxu0 0
      %985 = vmatpush1.bf16.msra.mxu0 0
      %986 = vmatprep.subr.bf16.mxu0 0
      %987 = vmatpush1.bf16.msra.mxu0 0
      %988 = vmatprep.subr.bf16.mxu0 0
      %989 = vmatpush1.bf16.msra.mxu0 0
      %990 = vmatprep.subr.bf16.mxu0 0
      %991 = vmatpush1.bf16.msra.mxu0 0
      %992 = vmatprep.mubr.bf16.mxu0 0
      %993 = vmatmul.mubr.bf16.gmra.mrb[0].mxu0 %v949
      %v994 = vpop.f32.mrb[0].mxu0
      %v995 = vadd.f32 0.0, %v994
      %v996 = vpop.f32.mrb[0].mxu0
      %v997 = vpop.f32.mrb[0].mxu0
      %v998 = vadd.f32 0.0, %v997
      %v999 = vpop.f32.mrb[0].mxu0
      %1000 = vmatprep.mubr.bf16.mxu0 0
      %1001 = vmatmul.mubr.bf16.gmra.mrb[0].mxu0 %v952
      %v1002 = vpop.f32.mrb[0].mxu0
      %v1003 = vadd.f32 0.0, %v1002
      %v1004 = vpop.f32.mrb[0].mxu0
      %v1005 = vpop.f32.mrb[0].mxu0
      %v1006 = vadd.f32 0.0, %v1005
      %v1007 = vpop.f32.mrb[0].mxu0
      %1008 = vmatprep.mubr.bf16.mxu0 0
      %1009 = vmatmul.mubr.bf16.gmra.mrb[0].mxu0 %v955
      %v1010 = vpop.f32.mrb[0].mxu0
      %v1011 = vadd.f32 0.0, %v1010
      %v1012 = vpop.f32.mrb[0].mxu0
      %v1013 = vpop.f32.mrb[0].mxu0
      %v1014 = vadd.f32 0.0, %v1013
      %v1015 = vpop.f32.mrb[0].mxu0
      %1016 = vmatprep.mubr.bf16.mxu0 0
      %1017 = vmatmul.mubr.bf16.gmra.mrb[0].mxu0 %v958
      %v1018 = vpop.f32.mrb[0].mxu0
      %v1019 = vadd.f32 0.0, %v1018
      %v1020 = vpop.f32.mrb[0].mxu0
      %v1021 = vpop.f32.mrb[0].mxu0
      %v1022 = vpop.f32.mrb[0].mxu0
      %1023 = vdwg.mxu0
      %v1024 = vadd.f32 %v797, %v995
      %v1025 = vadd.f32 %v798, %v998
      %v1026 = vadd.f32 %v799, %v1003
      %v1027 = vadd.f32 %v800, %v1006
      %v1028 = vadd.f32 %v801, %v1011
      %v1029 = vadd.f32 %v802, %v1014
      %v1030 = vadd.f32 %v803, %v1019
      %s1031 = sadd.s32 %s197, 34
      %s1032 = smul.u32 %s1031, 2
      %s1033 = smul.addr %s1032, 4
      %s1034 = scalar_lea.vmem %s184, %s1033
      %v1035 = vld [vmem:[%s1034] sm:$0xf]
      %v1036 = vld [vmem:[%s1034 + $0x4] sm:$0x1]
      %v1037 = vld [vmem:[%s1034 + $0x8] sm:$0xf]
      %v1038 = vld [vmem:[%s1034 + $0xc] sm:$0x1]
      %v1039 = vld [vmem:[%s1034 + $0x10] sm:$0xf]
      %v1040 = vld [vmem:[%s1034 + $0x14] sm:$0x1]
      %v1041 = vld [vmem:[%s1034 + $0x18] sm:$0xf]
      %v1042 = vld [vmem:[%s1034 + $0x1c] sm:$0x1]
      %v1043 = vld [vmem:[%s1034 + $0x20] sm:$0xf]
      %v1044 = vld [vmem:[%s1034 + $0x24] sm:$0x1]
      %v1045 = vld [vmem:[%s1034 + $0x28] sm:$0xf]
      %v1046 = vld [vmem:[%s1034 + $0x2c] sm:$0x1]
      %v1047 = vld [vmem:[%s1034 + $0x30] sm:$0xf]
      %v1048 = vld [vmem:[%s1034 + $0x34] sm:$0x1]
      %v1050 = vshrl.u32 %v1035, 16
      %v1052 = vrot.slane %v1050, 4
      %v1053 = vshll.u32 %v1035, 16
      %v1055 = vrot.slane %v1053, 5
      %v1056 = vor.u32 %v1052, %v1055
      %v1057 = vrot.slane %v1056, 4
      %v1059 = vshll.u32 %v1036, 16
      %v1061 = vrot.slane %v1059, 5
      %v1062 = vsel %vm218, %v1057, %v1061
      %v1064 = vshrl.u32 %v1037, 16
      %v1066 = vrot.slane %v1064, 4
      %v1067 = vshll.u32 %v1037, 16
      %v1069 = vrot.slane %v1067, 5
      %v1070 = vor.u32 %v1066, %v1069
      %v1071 = vrot.slane %v1070, 4
      %v1073 = vshll.u32 %v1038, 16
      %v1075 = vrot.slane %v1073, 5
      %v1076 = vsel %vm218, %v1071, %v1075
      %v1078 = vshrl.u32 %v1039, 16
      %v1080 = vrot.slane %v1078, 4
      %v1081 = vshll.u32 %v1039, 16
      %v1083 = vrot.slane %v1081, 5
      %v1084 = vor.u32 %v1080, %v1083
      %v1085 = vrot.slane %v1084, 4
      %v1087 = vshll.u32 %v1040, 16
      %v1089 = vrot.slane %v1087, 5
      %v1090 = vsel %vm218, %v1085, %v1089
      %v1092 = vshrl.u32 %v1041, 16
      %v1094 = vrot.slane %v1092, 4
      %v1095 = vshll.u32 %v1041, 16
      %v1097 = vrot.slane %v1095, 5
      %v1098 = vor.u32 %v1094, %v1097
      %v1099 = vrot.slane %v1098, 4
      %v1101 = vshll.u32 %v1042, 16
      %v1103 = vrot.slane %v1101, 5
      %v1104 = vsel %vm218, %v1099, %v1103
      %v1106 = vshrl.u32 %v1043, 16
      %v1108 = vrot.slane %v1106, 4
      %v1109 = vshll.u32 %v1043, 16
      %v1111 = vrot.slane %v1109, 5
      %v1112 = vor.u32 %v1108, %v1111
      %v1113 = vrot.slane %v1112, 4
      %v1115 = vshll.u32 %v1044, 16
      %v1117 = vrot.slane %v1115, 5
      %v1118 = vsel %vm218, %v1113, %v1117
      %v1120 = vshrl.u32 %v1045, 16
      %v1122 = vrot.slane %v1120, 4
      %v1123 = vshll.u32 %v1045, 16
      %v1125 = vrot.slane %v1123, 5
      %v1126 = vor.u32 %v1122, %v1125
      %v1127 = vrot.slane %v1126, 4
      %v1129 = vshll.u32 %v1046, 16
      %v1131 = vrot.slane %v1129, 5
      %v1132 = vsel %vm218, %v1127, %v1131
      %v1134 = vshrl.u32 %v1047, 16
      %v1136 = vrot.slane %v1134, 4
      %v1137 = vshll.u32 %v1047, 16
      %v1139 = vrot.slane %v1137, 5
      %v1140 = vor.u32 %v1136, %v1139
      %v1141 = vrot.slane %v1140, 4
      %v1143 = vshll.u32 %v1048, 16
      %v1145 = vrot.slane %v1143, 5
      %v1146 = vsel %vm218, %v1141, %v1145
      %s1147 = scalar_lea.vmem %s1, 64
      %v1148 = vld [vmem:[%s1147] sm:$0xf]
      %v1149 = vld [vmem:[%s1147 + $0x4] sm:$0xf]
      %v1150 = vld [vmem:[%s1147 + $0x8] sm:$0xf]
      %v1151 = vld [vmem:[%s1147 + $0xc] sm:$0xf]
      %v1152 = vunpack.c.l.b16 %v1062
      %v1153 = vunpack.c.l.b16 %v1076
      %v1154 = vunpack.c.l.b16 %v1090
      %v1155 = vunpack.c.l.b16 %v1104
      %v1156 = vunpack.c.l.b16 %v1118
      %v1157 = vunpack.c.l.b16 %v1132
      %v1158 = vunpack.c.l.b16 %v1146
      %v1159 = vpack.c.b16 %v1153, %v1152
      %v1160 = vpack.c.b16 %v1155, %v1154
      %v1161 = vpack.c.b16 %v1157, %v1156
      %v1162 = vpack.c.b16 %v1158, %v1158
      %v1167 = vunpack.c.l.b16 %v1148
      %v1168 = vunpack.c.l.b16 %v1149
      %v1169 = vunpack.c.l.b16 %v1150
      %v1170 = vunpack.c.l.b16 %v1151
      %v1171 = vpack.c.b16 %v1168, %v1167
      %v1172 = vpack.c.b16 %v1170, %v1169
      %v1176 = vsel %vm465, %v1159, 0
      %v1179 = vsel %vm465, %v1160, 0
      %v1182 = vsel %vm465, %v1161, 0
      %v1185 = vsel %vm465, %v1162, 0
      %1187 = vmatprep.subr.bf16.mxu0 0
      %1188 = vmatpush1.bf16.msra.mxu0 %v1171
      %1189 = vmatprep.subr.bf16.mxu0 0
      %1190 = vmatpush1.bf16.msra.mxu0 %v1172
      %1191 = vmatprep.subr.bf16.mxu0 0
      %1192 = vmatpush1.bf16.msra.mxu0 0
      %1193 = vmatprep.subr.bf16.mxu0 0
      %1194 = vmatpush1.bf16.msra.mxu0 0
      %1195 = vmatprep.subr.bf16.mxu0 0
      %1196 = vmatpush1.bf16.msra.mxu0 0
      %1197 = vmatprep.subr.bf16.mxu0 0
      %1198 = vmatpush1.bf16.msra.mxu0 0
      %1199 = vmatprep.subr.bf16.mxu0 0
      %1200 = vmatpush1.bf16.msra.mxu0 0
      %1201 = vmatprep.subr.bf16.mxu0 0
      %1202 = vmatpush1.bf16.msra.mxu0 0
      %1203 = vmatprep.subr.bf16.mxu0 0
      %1204 = vmatpush1.bf16.msra.mxu0 0
      %1205 = vmatprep.subr.bf16.mxu0 0
      %1206 = vmatpush1.bf16.msra.mxu0 0
      %1207 = vmatprep.subr.bf16.mxu0 0
      %1208 = vmatpush1.bf16.msra.mxu0 0
      %1209 = vmatprep.subr.bf16.mxu0 0
      %1210 = vmatpush1.bf16.msra.mxu0 0
      %1211 = vmatprep.subr.bf16.mxu0 0
      %1212 = vmatpush1.bf16.msra.mxu0 0
      %1213 = vmatprep.subr.bf16.mxu0 0
      %1214 = vmatpush1.bf16.msra.mxu0 0
      %1215 = vmatprep.subr.bf16.mxu0 0
      %1216 = vmatpush1.bf16.msra.mxu0 0
      %1217 = vmatprep.subr.bf16.mxu0 0
      %1218 = vmatpush1.bf16.msra.mxu0 0
      %1219 = vmatprep.mubr.bf16.mxu0 0
      %1220 = vmatmul.mubr.bf16.gmra.mrb[0].mxu0 %v1176
      %v1221 = vpop.f32.mrb[0].mxu0
      %v1222 = vadd.f32 0.0, %v1221
      %v1223 = vpop.f32.mrb[0].mxu0
      %v1224 = vpop.f32.mrb[0].mxu0
      %v1225 = vadd.f32 0.0, %v1224
      %v1226 = vpop.f32.mrb[0].mxu0
      %1227 = vmatprep.mubr.bf16.mxu0 0
      %1228 = vmatmul.mubr.bf16.gmra.mrb[0].mxu0 %v1179
      %v1229 = vpop.f32.mrb[0].mxu0
      %v1230 = vadd.f32 0.0, %v1229
      %v1231 = vpop.f32.mrb[0].mxu0
      %v1232 = vpop.f32.mrb[0].mxu0
      %v1233 = vadd.f32 0.0, %v1232
      %v1234 = vpop.f32.mrb[0].mxu0
      %1235 = vmatprep.mubr.bf16.mxu0 0
      %1236 = vmatmul.mubr.bf16.gmra.mrb[0].mxu0 %v1182
      %v1237 = vpop.f32.mrb[0].mxu0
      %v1238 = vadd.f32 0.0, %v1237
      %v1239 = vpop.f32.mrb[0].mxu0
      %v1240 = vpop.f32.mrb[0].mxu0
      %v1241 = vadd.f32 0.0, %v1240
      %v1242 = vpop.f32.mrb[0].mxu0
      %1243 = vmatprep.mubr.bf16.mxu0 0
      %1244 = vmatmul.mubr.bf16.gmra.mrb[0].mxu0 %v1185
      %v1245 = vpop.f32.mrb[0].mxu0
      %v1246 = vadd.f32 0.0, %v1245
      %v1247 = vpop.f32.mrb[0].mxu0
      %v1248 = vpop.f32.mrb[0].mxu0
      %v1249 = vpop.f32.mrb[0].mxu0
      %1250 = vdwg.mxu0
      %v1251 = vadd.f32 %v1024, %v1222
      %v1252 = vadd.f32 %v1025, %v1225
      %v1253 = vadd.f32 %v1026, %v1230
      %v1254 = vadd.f32 %v1027, %v1233
      %v1255 = vadd.f32 %v1028, %v1238
      %v1256 = vadd.f32 %v1029, %v1241
      %v1257 = vadd.f32 %v1030, %v1246
      %v1258 = vld [vmem:[%s807] sm:$0xe]
      %v1259 = vld [vmem:[%s807 + $0x8] sm:$0xe]
      %v1260 = vld [vmem:[%s807 + $0x10] sm:$0xe]
      %v1261 = vld [vmem:[%s807 + $0x18] sm:$0xe]
      %v1262 = vld [vmem:[%s807 + $0x20] sm:$0xe]
      %v1263 = vld [vmem:[%s807 + $0x28] sm:$0xe]
      %v1264 = vld [vmem:[%s807 + $0x30] sm:$0xe]
      %v1279 = vrot.slane %v1258, 5
      %v1280 = vrot.slane %v1279, 4
      %v1281 = vrot.slane %v809, 5
      %v1282 = vsel %vm664, %v1280, %v1281
      %v1283 = vrot.slane %v1259, 5
      %v1284 = vrot.slane %v1283, 4
      %v1285 = vrot.slane %v811, 5
      %v1286 = vsel %vm664, %v1284, %v1285
      %v1287 = vrot.slane %v1260, 5
      %v1288 = vrot.slane %v1287, 4
      %v1289 = vrot.slane %v813, 5
      %v1290 = vsel %vm664, %v1288, %v1289
      %v1291 = vrot.slane %v1261, 5
      %v1292 = vrot.slane %v1291, 4
      %v1293 = vrot.slane %v815, 5
      %v1294 = vsel %vm664, %v1292, %v1293
      %v1295 = vrot.slane %v1262, 5
      %v1296 = vrot.slane %v1295, 4
      %v1297 = vrot.slane %v817, 5
      %v1298 = vsel %vm664, %v1296, %v1297
      %v1299 = vrot.slane %v1263, 5
      %v1300 = vrot.slane %v1299, 4
      %v1301 = vrot.slane %v819, 5
      %v1302 = vsel %vm664, %v1300, %v1301
      %v1303 = vrot.slane %v1264, 5
      %v1304 = vrot.slane %v1303, 4
      %v1305 = vrot.slane %v821, 5
      %v1306 = vsel %vm664, %v1304, %v1305
      %s1307 = scalar_lea.vmem %s1, 80
      %v1308 = vld [vmem:[%s1307] sm:$0xf]
      %v1309 = vld [vmem:[%s1307 + $0x4] sm:$0xf]
      %v1310 = vld [vmem:[%s1307 + $0x8] sm:$0xf]
      %v1311 = vld [vmem:[%s1307 + $0xc] sm:$0xf]
      %v1312 = vunpack.c.l.b16 %v1282
      %v1313 = vunpack.c.l.b16 %v1286
      %v1314 = vunpack.c.l.b16 %v1290
      %v1315 = vunpack.c.l.b16 %v1294
      %v1316 = vunpack.c.l.b16 %v1298
      %v1317 = vunpack.c.l.b16 %v1302
      %v1318 = vunpack.c.l.b16 %v1306
      %v1319 = vpack.c.b16 %v1313, %v1312
      %v1320 = vpack.c.b16 %v1315, %v1314
      %v1321 = vpack.c.b16 %v1317, %v1316
      %v1322 = vpack.c.b16 %v1318, %v1318
      %v1327 = vunpack.c.l.b16 %v1308
      %v1328 = vunpack.c.l.b16 %v1309
      %v1329 = vunpack.c.l.b16 %v1310
      %v1330 = vunpack.c.l.b16 %v1311
      %v1331 = vpack.c.b16 %v1328, %v1327
      %v1332 = vpack.c.b16 %v1330, %v1329
      %v1336 = vsel %vm465, %v1319, 0
      %v1339 = vsel %vm465, %v1320, 0
      %v1342 = vsel %vm465, %v1321, 0
      %v1345 = vsel %vm465, %v1322, 0
      %1347 = vmatprep.subr.bf16.mxu0 0
      %1348 = vmatpush1.bf16.msra.mxu0 %v1331
      %1349 = vmatprep.subr.bf16.mxu0 0
      %1350 = vmatpush1.bf16.msra.mxu0 %v1332
      %1351 = vmatprep.subr.bf16.mxu0 0
      %1352 = vmatpush1.bf16.msra.mxu0 0
      %1353 = vmatprep.subr.bf16.mxu0 0
      %1354 = vmatpush1.bf16.msra.mxu0 0
      %1355 = vmatprep.subr.bf16.mxu0 0
      %1356 = vmatpush1.bf16.msra.mxu0 0
      %1357 = vmatprep.subr.bf16.mxu0 0
      %1358 = vmatpush1.bf16.msra.mxu0 0
      %1359 = vmatprep.subr.bf16.mxu0 0
      %1360 = vmatpush1.bf16.msra.mxu0 0
      %1361 = vmatprep.subr.bf16.mxu0 0
      %1362 = vmatpush1.bf16.msra.mxu0 0
      %1363 = vmatprep.subr.bf16.mxu0 0
      %1364 = vmatpush1.bf16.msra.mxu0 0
      %1365 = vmatprep.subr.bf16.mxu0 0
      %1366 = vmatpush1.bf16.msra.mxu0 0
      %1367 = vmatprep.subr.bf16.mxu0 0
      %1368 = vmatpush1.bf16.msra.mxu0 0
      %1369 = vmatprep.subr.bf16.mxu0 0
      %1370 = vmatpush1.bf16.msra.mxu0 0
      %1371 = vmatprep.subr.bf16.mxu0 0
      %1372 = vmatpush1.bf16.msra.mxu0 0
      %1373 = vmatprep.subr.bf16.mxu0 0
      %1374 = vmatpush1.bf16.msra.mxu0 0
      %1375 = vmatprep.subr.bf16.mxu0 0
      %1376 = vmatpush1.bf16.msra.mxu0 0
      %1377 = vmatprep.subr.bf16.mxu0 0
      %1378 = vmatpush1.bf16.msra.mxu0 0
      %1379 = vmatprep.mubr.bf16.mxu0 0
      %1380 = vmatmul.mubr.bf16.gmra.mrb[0].mxu0 %v1336
      %v1381 = vpop.f32.mrb[0].mxu0
      %v1382 = vadd.f32 0.0, %v1381
      %v1383 = vpop.f32.mrb[0].mxu0
      %v1384 = vpop.f32.mrb[0].mxu0
      %v1385 = vadd.f32 0.0, %v1384
      %v1386 = vpop.f32.mrb[0].mxu0
      %1387 = vmatprep.mubr.bf16.mxu0 0
      %1388 = vmatmul.mubr.bf16.gmra.mrb[0].mxu0 %v1339
      %v1389 = vpop.f32.mrb[0].mxu0
      %v1390 = vadd.f32 0.0, %v1389
      %v1391 = vpop.f32.mrb[0].mxu0
      %v1392 = vpop.f32.mrb[0].mxu0
      %v1393 = vadd.f32 0.0, %v1392
      %v1394 = vpop.f32.mrb[0].mxu0
      %1395 = vmatprep.mubr.bf16.mxu0 0
      %1396 = vmatmul.mubr.bf16.gmra.mrb[0].mxu0 %v1342
      %v1397 = vpop.f32.mrb[0].mxu0
      %v1398 = vadd.f32 0.0, %v1397
      %v1399 = vpop.f32.mrb[0].mxu0
      %v1400 = vpop.f32.mrb[0].mxu0
      %v1401 = vadd.f32 0.0, %v1400
      %v1402 = vpop.f32.mrb[0].mxu0
      %1403 = vmatprep.mubr.bf16.mxu0 0
      %1404 = vmatmul.mubr.bf16.gmra.mrb[0].mxu0 %v1345
      %v1405 = vpop.f32.mrb[0].mxu0
      %v1406 = vadd.f32 0.0, %v1405
      %v1407 = vpop.f32.mrb[0].mxu0
      %v1408 = vpop.f32.mrb[0].mxu0
      %v1409 = vpop.f32.mrb[0].mxu0
      %1410 = vdwg.mxu0
      %v1411 = vadd.f32 %v1251, %v1382
      %v1412 = vadd.f32 %v1252, %v1385
      %v1413 = vadd.f32 %v1253, %v1390
      %v1414 = vadd.f32 %v1254, %v1393
      %v1415 = vadd.f32 %v1255, %v1398
      %v1416 = vadd.f32 %v1256, %v1401
      %v1417 = vadd.f32 %v1257, %v1406
      %s1418 = sadd.s32 %s197, 2
      %s1419 = smul.u32 %s1418, 2
      %s1420 = smul.addr %s1419, 4
      %s1421 = scalar_lea.vmem %s184, %s1420
      %v1422 = vld [vmem:[%s1421] sm:$0xf]
      %v1423 = vld [vmem:[%s1421 + $0x4] sm:$0x1]
      %v1424 = vld [vmem:[%s1421 + $0x8] sm:$0xf]
      %v1425 = vld [vmem:[%s1421 + $0xc] sm:$0x1]
      %v1426 = vld [vmem:[%s1421 + $0x10] sm:$0xf]
      %v1427 = vld [vmem:[%s1421 + $0x14] sm:$0x1]
      %v1428 = vld [vmem:[%s1421 + $0x18] sm:$0xf]
      %v1429 = vld [vmem:[%s1421 + $0x1c] sm:$0x1]
      %v1430 = vld [vmem:[%s1421 + $0x20] sm:$0xf]
      %v1431 = vld [vmem:[%s1421 + $0x24] sm:$0x1]
      %v1432 = vld [vmem:[%s1421 + $0x28] sm:$0xf]
      %v1433 = vld [vmem:[%s1421 + $0x2c] sm:$0x1]
      %v1434 = vld [vmem:[%s1421 + $0x30] sm:$0xf]
      %v1435 = vld [vmem:[%s1421 + $0x34] sm:$0x1]
      %v1437 = vshrl.u32 %v1422, 16
      %v1439 = vrot.slane %v1437, 4
      %v1440 = vshll.u32 %v1422, 16
      %v1442 = vrot.slane %v1440, 5
      %v1443 = vor.u32 %v1439, %v1442
      %v1444 = vrot.slane %v1443, 4
      %v1446 = vshll.u32 %v1423, 16
      %v1448 = vrot.slane %v1446, 5
      %v1449 = vsel %vm218, %v1444, %v1448
      %v1451 = vshrl.u32 %v1424, 16
      %v1453 = vrot.slane %v1451, 4
      %v1454 = vshll.u32 %v1424, 16
      %v1456 = vrot.slane %v1454, 5
      %v1457 = vor.u32 %v1453, %v1456
      %v1458 = vrot.slane %v1457, 4
      %v1460 = vshll.u32 %v1425, 16
      %v1462 = vrot.slane %v1460, 5
      %v1463 = vsel %vm218, %v1458, %v1462
      %v1465 = vshrl.u32 %v1426, 16
      %v1467 = vrot.slane %v1465, 4
      %v1468 = vshll.u32 %v1426, 16
      %v1470 = vrot.slane %v1468, 5
      %v1471 = vor.u32 %v1467, %v1470
      %v1472 = vrot.slane %v1471, 4
      %v1474 = vshll.u32 %v1427, 16
      %v1476 = vrot.slane %v1474, 5
      %v1477 = vsel %vm218, %v1472, %v1476
      %v1479 = vshrl.u32 %v1428, 16
      %v1481 = vrot.slane %v1479, 4
      %v1482 = vshll.u32 %v1428, 16
      %v1484 = vrot.slane %v1482, 5
      %v1485 = vor.u32 %v1481, %v1484
      %v1486 = vrot.slane %v1485, 4
      %v1488 = vshll.u32 %v1429, 16
      %v1490 = vrot.slane %v1488, 5
      %v1491 = vsel %vm218, %v1486, %v1490
      %v1493 = vshrl.u32 %v1430, 16
      %v1495 = vrot.slane %v1493, 4
      %v1496 = vshll.u32 %v1430, 16
      %v1498 = vrot.slane %v1496, 5
      %v1499 = vor.u32 %v1495, %v1498
      %v1500 = vrot.slane %v1499, 4
      %v1502 = vshll.u32 %v1431, 16
      %v1504 = vrot.slane %v1502, 5
      %v1505 = vsel %vm218, %v1500, %v1504
      %v1507 = vshrl.u32 %v1432, 16
      %v1509 = vrot.slane %v1507, 4
      %v1510 = vshll.u32 %v1432, 16
      %v1512 = vrot.slane %v1510, 5
      %v1513 = vor.u32 %v1509, %v1512
      %v1514 = vrot.slane %v1513, 4
      %v1516 = vshll.u32 %v1433, 16
      %v1518 = vrot.slane %v1516, 5
      %v1519 = vsel %vm218, %v1514, %v1518
      %v1521 = vshrl.u32 %v1434, 16
      %v1523 = vrot.slane %v1521, 4
      %v1524 = vshll.u32 %v1434, 16
      %v1526 = vrot.slane %v1524, 5
      %v1527 = vor.u32 %v1523, %v1526
      %v1528 = vrot.slane %v1527, 4
      %v1530 = vshll.u32 %v1435, 16
      %v1532 = vrot.slane %v1530, 5
      %v1533 = vsel %vm218, %v1528, %v1532
      %s1534 = scalar_lea.vmem %s1, 96
      %v1535 = vld [vmem:[%s1534] sm:$0xf]
      %v1536 = vld [vmem:[%s1534 + $0x4] sm:$0xf]
      %v1537 = vld [vmem:[%s1534 + $0x8] sm:$0xf]
      %v1538 = vld [vmem:[%s1534 + $0xc] sm:$0xf]
      %v1539 = vunpack.c.l.b16 %v1449
      %v1540 = vunpack.c.l.b16 %v1463
      %v1541 = vunpack.c.l.b16 %v1477
      %v1542 = vunpack.c.l.b16 %v1491
      %v1543 = vunpack.c.l.b16 %v1505
      %v1544 = vunpack.c.l.b16 %v1519
      %v1545 = vunpack.c.l.b16 %v1533
      %v1546 = vpack.c.b16 %v1540, %v1539
      %v1547 = vpack.c.b16 %v1542, %v1541
      %v1548 = vpack.c.b16 %v1544, %v1543
      %v1549 = vpack.c.b16 %v1545, %v1545
      %v1554 = vunpack.c.l.b16 %v1535
      %v1555 = vunpack.c.l.b16 %v1536
      %v1556 = vunpack.c.l.b16 %v1537
      %v1557 = vunpack.c.l.b16 %v1538
      %v1558 = vpack.c.b16 %v1555, %v1554
      %v1559 = vpack.c.b16 %v1557, %v1556
      %v1563 = vsel %vm465, %v1546, 0
      %v1566 = vsel %vm465, %v1547, 0
      %v1569 = vsel %vm465, %v1548, 0
      %v1572 = vsel %vm465, %v1549, 0
      %1574 = vmatprep.subr.bf16.mxu0 0
      %1575 = vmatpush1.bf16.msra.mxu0 %v1558
      %1576 = vmatprep.subr.bf16.mxu0 0
      %1577 = vmatpush1.bf16.msra.mxu0 %v1559
      %1578 = vmatprep.subr.bf16.mxu0 0
      %1579 = vmatpush1.bf16.msra.mxu0 0
      %1580 = vmatprep.subr.bf16.mxu0 0
      %1581 = vmatpush1.bf16.msra.mxu0 0
      %1582 = vmatprep.subr.bf16.mxu0 0
      %1583 = vmatpush1.bf16.msra.mxu0 0
      %1584 = vmatprep.subr.bf16.mxu0 0
      %1585 = vmatpush1.bf16.msra.mxu0 0
      %1586 = vmatprep.subr.bf16.mxu0 0
      %1587 = vmatpush1.bf16.msra.mxu0 0
      %1588 = vmatprep.subr.bf16.mxu0 0
      %1589 = vmatpush1.bf16.msra.mxu0 0
      %1590 = vmatprep.subr.bf16.mxu0 0
      %1591 = vmatpush1.bf16.msra.mxu0 0
      %1592 = vmatprep.subr.bf16.mxu0 0
      %1593 = vmatpush1.bf16.msra.mxu0 0
      %1594 = vmatprep.subr.bf16.mxu0 0
      %1595 = vmatpush1.bf16.msra.mxu0 0
      %1596 = vmatprep.subr.bf16.mxu0 0
      %1597 = vmatpush1.bf16.msra.mxu0 0
      %1598 = vmatprep.subr.bf16.mxu0 0
      %1599 = vmatpush1.bf16.msra.mxu0 0
      %1600 = vmatprep.subr.bf16.mxu0 0
      %1601 = vmatpush1.bf16.msra.mxu0 0
      %1602 = vmatprep.subr.bf16.mxu0 0
      %1603 = vmatpush1.bf16.msra.mxu0 0
      %1604 = vmatprep.subr.bf16.mxu0 0
      %1605 = vmatpush1.bf16.msra.mxu0 0
      %1606 = vmatprep.mubr.bf16.mxu0 0
      %1607 = vmatmul.mubr.bf16.gmra.mrb[0].mxu0 %v1563
      %v1608 = vpop.f32.mrb[0].mxu0
      %v1609 = vadd.f32 0.0, %v1608
      %v1610 = vpop.f32.mrb[0].mxu0
      %v1611 = vpop.f32.mrb[0].mxu0
      %v1612 = vadd.f32 0.0, %v1611
      %v1613 = vpop.f32.mrb[0].mxu0
      %1614 = vmatprep.mubr.bf16.mxu0 0
      %1615 = vmatmul.mubr.bf16.gmra.mrb[0].mxu0 %v1566
      %v1616 = vpop.f32.mrb[0].mxu0
      %v1617 = vadd.f32 0.0, %v1616
      %v1618 = vpop.f32.mrb[0].mxu0
      %v1619 = vpop.f32.mrb[0].mxu0
      %v1620 = vadd.f32 0.0, %v1619
      %v1621 = vpop.f32.mrb[0].mxu0
      %1622 = vmatprep.mubr.bf16.mxu0 0
      %1623 = vmatmul.mubr.bf16.gmra.mrb[0].mxu0 %v1569
      %v1624 = vpop.f32.mrb[0].mxu0
      %v1625 = vadd.f32 0.0, %v1624
      %v1626 = vpop.f32.mrb[0].mxu0
      %v1627 = vpop.f32.mrb[0].mxu0
      %v1628 = vadd.f32 0.0, %v1627
      %v1629 = vpop.f32.mrb[0].mxu0
      %1630 = vmatprep.mubr.bf16.mxu0 0
      %1631 = vmatmul.mubr.bf16.gmra.mrb[0].mxu0 %v1572
      %v1632 = vpop.f32.mrb[0].mxu0
      %v1633 = vadd.f32 0.0, %v1632
      %v1634 = vpop.f32.mrb[0].mxu0
      %v1635 = vpop.f32.mrb[0].mxu0
      %v1636 = vpop.f32.mrb[0].mxu0
      %1637 = vdwg.mxu0
      %v1638 = vadd.f32 %v1411, %v1609
      %v1639 = vadd.f32 %v1412, %v1612
      %v1640 = vadd.f32 %v1413, %v1617
      %v1641 = vadd.f32 %v1414, %v1620
      %v1642 = vadd.f32 %v1415, %v1625
      %v1643 = vadd.f32 %v1416, %v1628
      %v1644 = vadd.f32 %v1417, %v1633
      %s1645 = sadd.s32 %s197, 13
      %s1646 = smul.u32 %s1645, 2
      %s1647 = smul.addr %s1646, 4
      %s1648 = scalar_lea.vmem %s184, %s1647
      %v1649 = vld [vmem:[%s1648] sm:$0xf]
      %v1650 = vld [vmem:[%s1648 + $0x4] sm:$0x1]
      %v1651 = vld [vmem:[%s1648 + $0x8] sm:$0xf]
      %v1652 = vld [vmem:[%s1648 + $0xc] sm:$0x1]
      %v1653 = vld [vmem:[%s1648 + $0x10] sm:$0xf]
      %v1654 = vld [vmem:[%s1648 + $0x14] sm:$0x1]
      %v1655 = vld [vmem:[%s1648 + $0x18] sm:$0xf]
      %v1656 = vld [vmem:[%s1648 + $0x1c] sm:$0x1]
      %v1657 = vld [vmem:[%s1648 + $0x20] sm:$0xf]
      %v1658 = vld [vmem:[%s1648 + $0x24] sm:$0x1]
      %v1659 = vld [vmem:[%s1648 + $0x28] sm:$0xf]
      %v1660 = vld [vmem:[%s1648 + $0x2c] sm:$0x1]
      %v1661 = vld [vmem:[%s1648 + $0x30] sm:$0xf]
      %v1662 = vld [vmem:[%s1648 + $0x34] sm:$0x1]
      %v1664 = vshrl.u32 %v1649, 16
      %v1666 = vrot.slane %v1664, 4
      %v1667 = vshll.u32 %v1649, 16
      %v1669 = vrot.slane %v1667, 5
      %v1670 = vor.u32 %v1666, %v1669
      %v1671 = vrot.slane %v1670, 4
      %v1673 = vshll.u32 %v1650, 16
      %v1675 = vrot.slane %v1673, 5
      %v1676 = vsel %vm218, %v1671, %v1675
      %v1678 = vshrl.u32 %v1651, 16
      %v1680 = vrot.slane %v1678, 4
      %v1681 = vshll.u32 %v1651, 16
      %v1683 = vrot.slane %v1681, 5
      %v1684 = vor.u32 %v1680, %v1683
      %v1685 = vrot.slane %v1684, 4
      %v1687 = vshll.u32 %v1652, 16
      %v1689 = vrot.slane %v1687, 5
      %v1690 = vsel %vm218, %v1685, %v1689
      %v1692 = vshrl.u32 %v1653, 16
      %v1694 = vrot.slane %v1692, 4
      %v1695 = vshll.u32 %v1653, 16
      %v1697 = vrot.slane %v1695, 5
      %v1698 = vor.u32 %v1694, %v1697
      %v1699 = vrot.slane %v1698, 4
      %v1701 = vshll.u32 %v1654, 16
      %v1703 = vrot.slane %v1701, 5
      %v1704 = vsel %vm218, %v1699, %v1703
      %v1706 = vshrl.u32 %v1655, 16
      %v1708 = vrot.slane %v1706, 4
      %v1709 = vshll.u32 %v1655, 16
      %v1711 = vrot.slane %v1709, 5
      %v1712 = vor.u32 %v1708, %v1711
      %v1713 = vrot.slane %v1712, 4
      %v1715 = vshll.u32 %v1656, 16
      %v1717 = vrot.slane %v1715, 5
      %v1718 = vsel %vm218, %v1713, %v1717
      %v1720 = vshrl.u32 %v1657, 16
      %v1722 = vrot.slane %v1720, 4
      %v1723 = vshll.u32 %v1657, 16
      %v1725 = vrot.slane %v1723, 5
      %v1726 = vor.u32 %v1722, %v1725
      %v1727 = vrot.slane %v1726, 4
      %v1729 = vshll.u32 %v1658, 16
      %v1731 = vrot.slane %v1729, 5
      %v1732 = vsel %vm218, %v1727, %v1731
      %v1734 = vshrl.u32 %v1659, 16
      %v1736 = vrot.slane %v1734, 4
      %v1737 = vshll.u32 %v1659, 16
      %v1739 = vrot.slane %v1737, 5
      %v1740 = vor.u32 %v1736, %v1739
      %v1741 = vrot.slane %v1740, 4
      %v1743 = vshll.u32 %v1660, 16
      %v1745 = vrot.slane %v1743, 5
      %v1746 = vsel %vm218, %v1741, %v1745
      %v1748 = vshrl.u32 %v1661, 16
      %v1750 = vrot.slane %v1748, 4
      %v1751 = vshll.u32 %v1661, 16
      %v1753 = vrot.slane %v1751, 5
      %v1754 = vor.u32 %v1750, %v1753
      %v1755 = vrot.slane %v1754, 4
      %v1757 = vshll.u32 %v1662, 16
      %v1759 = vrot.slane %v1757, 5
      %v1760 = vsel %vm218, %v1755, %v1759
      %s1761 = scalar_lea.vmem %s1, 112
      %v1762 = vld [vmem:[%s1761] sm:$0xf]
      %v1763 = vld [vmem:[%s1761 + $0x4] sm:$0xf]
      %v1764 = vld [vmem:[%s1761 + $0x8] sm:$0xf]
      %v1765 = vld [vmem:[%s1761 + $0xc] sm:$0xf]
      %v1766 = vunpack.c.l.b16 %v1676
      %v1767 = vunpack.c.l.b16 %v1690
      %v1768 = vunpack.c.l.b16 %v1704
      %v1769 = vunpack.c.l.b16 %v1718
      %v1770 = vunpack.c.l.b16 %v1732
      %v1771 = vunpack.c.l.b16 %v1746
      %v1772 = vunpack.c.l.b16 %v1760
      %v1773 = vpack.c.b16 %v1767, %v1766
      %v1774 = vpack.c.b16 %v1769, %v1768
      %v1775 = vpack.c.b16 %v1771, %v1770
      %v1776 = vpack.c.b16 %v1772, %v1772
      %v1781 = vunpack.c.l.b16 %v1762
      %v1782 = vunpack.c.l.b16 %v1763
      %v1783 = vunpack.c.l.b16 %v1764
      %v1784 = vunpack.c.l.b16 %v1765
      %v1785 = vpack.c.b16 %v1782, %v1781
      %v1786 = vpack.c.b16 %v1784, %v1783
      %v1790 = vsel %vm465, %v1773, 0
      %v1793 = vsel %vm465, %v1774, 0
      %v1796 = vsel %vm465, %v1775, 0
      %v1799 = vsel %vm465, %v1776, 0
      %1801 = vmatprep.subr.bf16.mxu0 0
      %1802 = vmatpush1.bf16.msra.mxu0 %v1785
      %1803 = vmatprep.subr.bf16.mxu0 0
      %1804 = vmatpush1.bf16.msra.mxu0 %v1786
      %1805 = vmatprep.subr.bf16.mxu0 0
      %1806 = vmatpush1.bf16.msra.mxu0 0
      %1807 = vmatprep.subr.bf16.mxu0 0
      %1808 = vmatpush1.bf16.msra.mxu0 0
      %1809 = vmatprep.subr.bf16.mxu0 0
      %1810 = vmatpush1.bf16.msra.mxu0 0
      %1811 = vmatprep.subr.bf16.mxu0 0
      %1812 = vmatpush1.bf16.msra.mxu0 0
      %1813 = vmatprep.subr.bf16.mxu0 0
      %1814 = vmatpush1.bf16.msra.mxu0 0
      %1815 = vmatprep.subr.bf16.mxu0 0
      %1816 = vmatpush1.bf16.msra.mxu0 0
      %1817 = vmatprep.subr.bf16.mxu0 0
      %1818 = vmatpush1.bf16.msra.mxu0 0
      %1819 = vmatprep.subr.bf16.mxu0 0
      %1820 = vmatpush1.bf16.msra.mxu0 0
      %1821 = vmatprep.subr.bf16.mxu0 0
      %1822 = vmatpush1.bf16.msra.mxu0 0
      %1823 = vmatprep.subr.bf16.mxu0 0
      %1824 = vmatpush1.bf16.msra.mxu0 0
      %1825 = vmatprep.subr.bf16.mxu0 0
      %1826 = vmatpush1.bf16.msra.mxu0 0
      %1827 = vmatprep.subr.bf16.mxu0 0
      %1828 = vmatpush1.bf16.msra.mxu0 0
      %1829 = vmatprep.subr.bf16.mxu0 0
      %1830 = vmatpush1.bf16.msra.mxu0 0
      %1831 = vmatprep.subr.bf16.mxu0 0
      %1832 = vmatpush1.bf16.msra.mxu0 0
      %1833 = vmatprep.mubr.bf16.mxu0 0
      %1834 = vmatmul.mubr.bf16.gmra.mrb[0].mxu0 %v1790
      %v1835 = vpop.f32.mrb[0].mxu0
      %v1836 = vadd.f32 0.0, %v1835
      %v1837 = vpop.f32.mrb[0].mxu0
      %v1838 = vpop.f32.mrb[0].mxu0
      %v1839 = vadd.f32 0.0, %v1838
      %v1840 = vpop.f32.mrb[0].mxu0
      %1841 = vmatprep.mubr.bf16.mxu0 0
      %1842 = vmatmul.mubr.bf16.gmra.mrb[0].mxu0 %v1793
      %v1843 = vpop.f32.mrb[0].mxu0
      %v1844 = vadd.f32 0.0, %v1843
      %v1845 = vpop.f32.mrb[0].mxu0
      %v1846 = vpop.f32.mrb[0].mxu0
      %v1847 = vadd.f32 0.0, %v1846
      %v1848 = vpop.f32.mrb[0].mxu0
      %1849 = vmatprep.mubr.bf16.mxu0 0
      %1850 = vmatmul.mubr.bf16.gmra.mrb[0].mxu0 %v1796
      %v1851 = vpop.f32.mrb[0].mxu0
      %v1852 = vadd.f32 0.0, %v1851
      %v1853 = vpop.f32.mrb[0].mxu0
      %v1854 = vpop.f32.mrb[0].mxu0
      %v1855 = vadd.f32 0.0, %v1854
      %v1856 = vpop.f32.mrb[0].mxu0
      %1857 = vmatprep.mubr.bf16.mxu0 0
      %1858 = vmatmul.mubr.bf16.gmra.mrb[0].mxu0 %v1799
      %v1859 = vpop.f32.mrb[0].mxu0
      %v1860 = vadd.f32 0.0, %v1859
      %v1861 = vpop.f32.mrb[0].mxu0
      %v1862 = vpop.f32.mrb[0].mxu0
      %v1863 = vpop.f32.mrb[0].mxu0
      %1864 = vdwg.mxu0
      %v1865 = vadd.f32 %v1638, %v1836
      %v1866 = vadd.f32 %v1639, %v1839
      %v1867 = vadd.f32 %v1640, %v1844
      %v1868 = vadd.f32 %v1641, %v1847
      %v1869 = vadd.f32 %v1642, %v1852
      %v1870 = vadd.f32 %v1643, %v1855
      %v1871 = vadd.f32 %v1644, %v1860
      %v1872 = vld [vmem:[%s1421] sm:$0xe]
      %v1873 = vld [vmem:[%s1421 + $0x8] sm:$0xe]
      %v1874 = vld [vmem:[%s1421 + $0x10] sm:$0xe]
      %v1875 = vld [vmem:[%s1421 + $0x18] sm:$0xe]
      %v1876 = vld [vmem:[%s1421 + $0x20] sm:$0xe]
      %v1877 = vld [vmem:[%s1421 + $0x28] sm:$0xe]
      %v1878 = vld [vmem:[%s1421 + $0x30] sm:$0xe]
      %v1893 = vrot.slane %v1872, 5
      %v1894 = vrot.slane %v1893, 4
      %v1895 = vrot.slane %v1423, 5
      %v1896 = vsel %vm664, %v1894, %v1895
      %v1897 = vrot.slane %v1873, 5
      %v1898 = vrot.slane %v1897, 4
      %v1899 = vrot.slane %v1425, 5
      %v1900 = vsel %vm664, %v1898, %v1899
      %v1901 = vrot.slane %v1874, 5
      %v1902 = vrot.slane %v1901, 4
      %v1903 = vrot.slane %v1427, 5
      %v1904 = vsel %vm664, %v1902, %v1903
      %v1905 = vrot.slane %v1875, 5
      %v1906 = vrot.slane %v1905, 4
      %v1907 = vrot.slane %v1429, 5
      %v1908 = vsel %vm664, %v1906, %v1907
      %v1909 = vrot.slane %v1876, 5
      %v1910 = vrot.slane %v1909, 4
      %v1911 = vrot.slane %v1431, 5
      %v1912 = vsel %vm664, %v1910, %v1911
      %v1913 = vrot.slane %v1877, 5
      %v1914 = vrot.slane %v1913, 4
      %v1915 = vrot.slane %v1433, 5
      %v1916 = vsel %vm664, %v1914, %v1915
      %v1917 = vrot.slane %v1878, 5
      %v1918 = vrot.slane %v1917, 4
      %v1919 = vrot.slane %v1435, 5
      %v1920 = vsel %vm664, %v1918, %v1919
      %s1921 = scalar_lea.vmem %s1, 128
      %v1922 = vld [vmem:[%s1921] sm:$0xf]
      %v1923 = vld [vmem:[%s1921 + $0x4] sm:$0xf]
      %v1924 = vld [vmem:[%s1921 + $0x8] sm:$0xf]
      %v1925 = vld [vmem:[%s1921 + $0xc] sm:$0xf]
      %v1926 = vunpack.c.l.b16 %v1896
      %v1927 = vunpack.c.l.b16 %v1900
      %v1928 = vunpack.c.l.b16 %v1904
      %v1929 = vunpack.c.l.b16 %v1908
      %v1930 = vunpack.c.l.b16 %v1912
      %v1931 = vunpack.c.l.b16 %v1916
      %v1932 = vunpack.c.l.b16 %v1920
      %v1933 = vpack.c.b16 %v1927, %v1926
      %v1934 = vpack.c.b16 %v1929, %v1928
      %v1935 = vpack.c.b16 %v1931, %v1930
      %v1936 = vpack.c.b16 %v1932, %v1932
      %v1941 = vunpack.c.l.b16 %v1922
      %v1942 = vunpack.c.l.b16 %v1923
      %v1943 = vunpack.c.l.b16 %v1924
      %v1944 = vunpack.c.l.b16 %v1925
      %v1945 = vpack.c.b16 %v1942, %v1941
      %v1946 = vpack.c.b16 %v1944, %v1943
      %v1950 = vsel %vm465, %v1933, 0
      %v1953 = vsel %vm465, %v1934, 0
      %v1956 = vsel %vm465, %v1935, 0
      %v1959 = vsel %vm465, %v1936, 0
      %1961 = vmatprep.subr.bf16.mxu0 0
      %1962 = vmatpush1.bf16.msra.mxu0 %v1945
      %1963 = vmatprep.subr.bf16.mxu0 0
      %1964 = vmatpush1.bf16.msra.mxu0 %v1946
      %1965 = vmatprep.subr.bf16.mxu0 0
      %1966 = vmatpush1.bf16.msra.mxu0 0
      %1967 = vmatprep.subr.bf16.mxu0 0
      %1968 = vmatpush1.bf16.msra.mxu0 0
      %1969 = vmatprep.subr.bf16.mxu0 0
      %1970 = vmatpush1.bf16.msra.mxu0 0
      %1971 = vmatprep.subr.bf16.mxu0 0
      %1972 = vmatpush1.bf16.msra.mxu0 0
      %1973 = vmatprep.subr.bf16.mxu0 0
      %1974 = vmatpush1.bf16.msra.mxu0 0
      %1975 = vmatprep.subr.bf16.mxu0 0
      %1976 = vmatpush1.bf16.msra.mxu0 0
      %1977 = vmatprep.subr.bf16.mxu0 0
      %1978 = vmatpush1.bf16.msra.mxu0 0
      %1979 = vmatprep.subr.bf16.mxu0 0
      %1980 = vmatpush1.bf16.msra.mxu0 0
      %1981 = vmatprep.subr.bf16.mxu0 0
      %1982 = vmatpush1.bf16.msra.mxu0 0
      %1983 = vmatprep.subr.bf16.mxu0 0
      %1984 = vmatpush1.bf16.msra.mxu0 0
      %1985 = vmatprep.subr.bf16.mxu0 0
      %1986 = vmatpush1.bf16.msra.mxu0 0
      %1987 = vmatprep.subr.bf16.mxu0 0
      %1988 = vmatpush1.bf16.msra.mxu0 0
      %1989 = vmatprep.subr.bf16.mxu0 0
      %1990 = vmatpush1.bf16.msra.mxu0 0
      %1991 = vmatprep.subr.bf16.mxu0 0
      %1992 = vmatpush1.bf16.msra.mxu0 0
      %1993 = vmatprep.mubr.bf16.mxu0 0
      %1994 = vmatmul.mubr.bf16.gmra.mrb[0].mxu0 %v1950
      %v1995 = vpop.f32.mrb[0].mxu0
      %v1996 = vadd.f32 0.0, %v1995
      %v1997 = vpop.f32.mrb[0].mxu0
      %v1998 = vpop.f32.mrb[0].mxu0
      %v1999 = vadd.f32 0.0, %v1998
      %v2000 = vpop.f32.mrb[0].mxu0
      %2001 = vmatprep.mubr.bf16.mxu0 0
      %2002 = vmatmul.mubr.bf16.gmra.mrb[0].mxu0 %v1953
      %v2003 = vpop.f32.mrb[0].mxu0
      %v2004 = vadd.f32 0.0, %v2003
      %v2005 = vpop.f32.mrb[0].mxu0
      %v2006 = vpop.f32.mrb[0].mxu0
      %v2007 = vadd.f32 0.0, %v2006
      %v2008 = vpop.f32.mrb[0].mxu0
      %2009 = vmatprep.mubr.bf16.mxu0 0
      %2010 = vmatmul.mubr.bf16.gmra.mrb[0].mxu0 %v1956
      %v2011 = vpop.f32.mrb[0].mxu0
      %v2012 = vadd.f32 0.0, %v2011
      %v2013 = vpop.f32.mrb[0].mxu0
      %v2014 = vpop.f32.mrb[0].mxu0
      %v2015 = vadd.f32 0.0, %v2014
      %v2016 = vpop.f32.mrb[0].mxu0
      %2017 = vmatprep.mubr.bf16.mxu0 0
      %2018 = vmatmul.mubr.bf16.gmra.mrb[0].mxu0 %v1959
      %v2019 = vpop.f32.mrb[0].mxu0
      %v2020 = vadd.f32 0.0, %v2019
      %v2021 = vpop.f32.mrb[0].mxu0
      %v2022 = vpop.f32.mrb[0].mxu0
      %v2023 = vpop.f32.mrb[0].mxu0
      %2024 = vdwg.mxu0
      %v2025 = vadd.f32 %v1865, %v1996
      %v2026 = vadd.f32 %v1866, %v1999
      %v2027 = vadd.f32 %v1867, %v2004
      %v2028 = vadd.f32 %v1868, %v2007
      %v2029 = vadd.f32 %v1869, %v2012
      %v2030 = vadd.f32 %v1870, %v2015
      %v2031 = vadd.f32 %v1871, %v2020
      %s2032 = scalar_lea.vmem %s1, 144
      %v2033 = vld [vmem:[%s2032] sm:$0xf]
      %v2034 = vld [vmem:[%s2032 + $0x4] sm:$0xf]
      %v2035 = vld [vmem:[%s2032 + $0x8] sm:$0xf]
      %v2036 = vld [vmem:[%s2032 + $0xc] sm:$0xf]
      %s2037 = scalar_lea.vmem %s1, 160
      %v2038 = vld [vmem:[%s2037] sm:$0xf]
      %v2039 = vld [vmem:[%s2037 + $0x4] sm:$0xf]
      %v2040 = vld [vmem:[%s2037 + $0x8] sm:$0xf]
      %v2041 = vld [vmem:[%s2037 + $0xc] sm:$0xf]
      %v2046 = vunpack.c.l.b16 %v2038
      %v2047 = vunpack.c.l.b16 %v2039
      %v2048 = vunpack.c.l.b16 %v2040
      %v2049 = vunpack.c.l.b16 %v2041
      %v2050 = vpack.c.b16 %v2047, %v2046
      %v2051 = vpack.c.b16 %v2049, %v2048
      %2054 = vmatprep.subr.bf16.mxu0 0
      %2055 = vmatpush1.bf16.msra.mxu0 %v2050
      %2056 = vmatprep.subr.bf16.mxu0 0
      %2057 = vmatpush1.bf16.msra.mxu0 %v2051
      %2058 = vmatprep.subr.bf16.mxu0 0
      %2059 = vmatpush1.bf16.msra.mxu0 0
      %2060 = vmatprep.subr.bf16.mxu0 0
      %2061 = vmatpush1.bf16.msra.mxu0 0
      %2062 = vmatprep.subr.bf16.mxu0 0
      %2063 = vmatpush1.bf16.msra.mxu0 0
      %2064 = vmatprep.subr.bf16.mxu0 0
      %2065 = vmatpush1.bf16.msra.mxu0 0
      %2066 = vmatprep.subr.bf16.mxu0 0
      %2067 = vmatpush1.bf16.msra.mxu0 0
      %2068 = vmatprep.subr.bf16.mxu0 0
      %2069 = vmatpush1.bf16.msra.mxu0 0
      %2070 = vmatprep.subr.bf16.mxu0 0
      %2071 = vmatpush1.bf16.msra.mxu0 0
      %2072 = vmatprep.subr.bf16.mxu0 0
      %2073 = vmatpush1.bf16.msra.mxu0 0
      %2074 = vmatprep.subr.bf16.mxu0 0
      %2075 = vmatpush1.bf16.msra.mxu0 0
      %2076 = vmatprep.subr.bf16.mxu0 0
      %2077 = vmatpush1.bf16.msra.mxu0 0
      %2078 = vmatprep.subr.bf16.mxu0 0
      %2079 = vmatpush1.bf16.msra.mxu0 0
      %2080 = vmatprep.subr.bf16.mxu0 0
      %2081 = vmatpush1.bf16.msra.mxu0 0
      %2082 = vmatprep.subr.bf16.mxu0 0
      %2083 = vmatpush1.bf16.msra.mxu0 0
      %2084 = vmatprep.subr.bf16.mxu0 0
      %2085 = vmatpush1.bf16.msra.mxu0 0
      %2086 = vmatprep.mubr.bf16.mxu0 0
      %2087 = vmatmul.mubr.bf16.gmra.mrb[0].mxu0 %v722
      %v2088 = vpop.f32.mrb[0].mxu0
      %v2089 = vadd.f32 0.0, %v2088
      %v2090 = vpop.f32.mrb[0].mxu0
      %v2091 = vpop.f32.mrb[0].mxu0
      %v2092 = vadd.f32 0.0, %v2091
      %v2093 = vpop.f32.mrb[0].mxu0
      %2094 = vmatprep.mubr.bf16.mxu0 0
      %2095 = vmatmul.mubr.bf16.gmra.mrb[0].mxu0 %v725
      %v2096 = vpop.f32.mrb[0].mxu0
      %v2097 = vadd.f32 0.0, %v2096
      %v2098 = vpop.f32.mrb[0].mxu0
      %v2099 = vpop.f32.mrb[0].mxu0
      %v2100 = vadd.f32 0.0, %v2099
      %v2101 = vpop.f32.mrb[0].mxu0
      %2102 = vmatprep.mubr.bf16.mxu0 0
      %2103 = vmatmul.mubr.bf16.gmra.mrb[0].mxu0 %v728
      %v2104 = vpop.f32.mrb[0].mxu0
      %v2105 = vadd.f32 0.0, %v2104
      %v2106 = vpop.f32.mrb[0].mxu0
      %v2107 = vpop.f32.mrb[0].mxu0
      %v2108 = vadd.f32 0.0, %v2107
      %v2109 = vpop.f32.mrb[0].mxu0
      %2110 = vmatprep.mubr.bf16.mxu0 0
      %2111 = vmatmul.mubr.bf16.gmra.mrb[0].mxu0 %v731
      %v2112 = vpop.f32.mrb[0].mxu0
      %v2113 = vadd.f32 0.0, %v2112
      %v2114 = vpop.f32.mrb[0].mxu0
      %v2115 = vpop.f32.mrb[0].mxu0
      %v2116 = vpop.f32.mrb[0].mxu0
      %2117 = vdwg.mxu0
      %v2122 = vunpack.c.l.b16 %v2033
      %v2123 = vunpack.c.l.b16 %v2034
      %v2124 = vunpack.c.l.b16 %v2035
      %v2125 = vunpack.c.l.b16 %v2036
      %v2126 = vpack.c.b16 %v2123, %v2122
      %v2127 = vpack.c.b16 %v2125, %v2124
      %2130 = vmatprep.subr.bf16.mxu0 0
      %2131 = vmatpush1.bf16.msra.mxu0 %v2126
      %2132 = vmatprep.subr.bf16.mxu0 0
      %2133 = vmatpush1.bf16.msra.mxu0 %v2127
      %2134 = vmatprep.subr.bf16.mxu0 0
      %2135 = vmatpush1.bf16.msra.mxu0 0
      %2136 = vmatprep.subr.bf16.mxu0 0
      %2137 = vmatpush1.bf16.msra.mxu0 0
      %2138 = vmatprep.subr.bf16.mxu0 0
      %2139 = vmatpush1.bf16.msra.mxu0 0
      %2140 = vmatprep.subr.bf16.mxu0 0
      %2141 = vmatpush1.bf16.msra.mxu0 0
      %2142 = vmatprep.subr.bf16.mxu0 0
      %2143 = vmatpush1.bf16.msra.mxu0 0
      %2144 = vmatprep.subr.bf16.mxu0 0
      %2145 = vmatpush1.bf16.msra.mxu0 0
      %2146 = vmatprep.subr.bf16.mxu0 0
      %2147 = vmatpush1.bf16.msra.mxu0 0
      %2148 = vmatprep.subr.bf16.mxu0 0
      %2149 = vmatpush1.bf16.msra.mxu0 0
      %2150 = vmatprep.subr.bf16.mxu0 0
      %2151 = vmatpush1.bf16.msra.mxu0 0
      %2152 = vmatprep.subr.bf16.mxu0 0
      %2153 = vmatpush1.bf16.msra.mxu0 0
      %2154 = vmatprep.subr.bf16.mxu0 0
      %2155 = vmatpush1.bf16.msra.mxu0 0
      %2156 = vmatprep.subr.bf16.mxu0 0
      %2157 = vmatpush1.bf16.msra.mxu0 0
      %2158 = vmatprep.subr.bf16.mxu0 0
      %2159 = vmatpush1.bf16.msra.mxu0 0
      %2160 = vmatprep.subr.bf16.mxu0 0
      %2161 = vmatpush1.bf16.msra.mxu0 0
      %2162 = vmatprep.mubr.bf16.mxu0 0
      %2163 = vmatmul.mubr.bf16.gmra.mrb[0].mxu0 %v566
      %v2164 = vpop.f32.mrb[0].mxu0
      %v2165 = vadd.f32 %v2089, %v2164
      %v2166 = vpop.f32.mrb[0].mxu0
      %v2167 = vpop.f32.mrb[0].mxu0
      %v2168 = vadd.f32 %v2092, %v2167
      %v2169 = vpop.f32.mrb[0].mxu0
      %2170 = vmatprep.mubr.bf16.mxu0 0
      %2171 = vmatmul.mubr.bf16.gmra.mrb[0].mxu0 %v569
      %v2172 = vpop.f32.mrb[0].mxu0
      %v2173 = vadd.f32 %v2097, %v2172
      %v2174 = vpop.f32.mrb[0].mxu0
      %v2175 = vpop.f32.mrb[0].mxu0
      %v2176 = vadd.f32 %v2100, %v2175
      %v2177 = vpop.f32.mrb[0].mxu0
      %2178 = vmatprep.mubr.bf16.mxu0 0
      %2179 = vmatmul.mubr.bf16.gmra.mrb[0].mxu0 %v572
      %v2180 = vpop.f32.mrb[0].mxu0
      %v2181 = vadd.f32 %v2105, %v2180
      %v2182 = vpop.f32.mrb[0].mxu0
      %v2183 = vpop.f32.mrb[0].mxu0
      %v2184 = vadd.f32 %v2108, %v2183
      %v2185 = vpop.f32.mrb[0].mxu0
      %2186 = vmatprep.mubr.bf16.mxu0 0
      %2187 = vmatmul.mubr.bf16.gmra.mrb[0].mxu0 %v575
      %v2188 = vpop.f32.mrb[0].mxu0
      %v2189 = vadd.f32 %v2113, %v2188
      %v2190 = vpop.f32.mrb[0].mxu0
      %v2191 = vpop.f32.mrb[0].mxu0
      %v2192 = vpop.f32.mrb[0].mxu0
      %2193 = vdwg.mxu0
      %v2194 = vld [vmem:[%s201 + $0x4] sm:$0x3]
      %v2195 = vld [vmem:[%s201 + $0xc] sm:$0x3]
      %v2196 = vld [vmem:[%s201 + $0x14] sm:$0x3]
      %v2197 = vld [vmem:[%s201 + $0x1c] sm:$0x3]
      %v2198 = vld [vmem:[%s201 + $0x24] sm:$0x3]
      %v2199 = vld [vmem:[%s201 + $0x2c] sm:$0x3]
      %v2200 = vld [vmem:[%s201 + $0x34] sm:$0x3]
      %vm2201 = vsmask.f32 2304
      %vm2202 = vsmask.f32 6416
      %vm2203 = vmor %vm2201, %vm2202
      %v2205 = vshrl.u32 %v641, 16
      %v2207 = vrot.slane %v2205, 5
      %v2208 = vshll.u32 %v641, 16
      %v2210 = vrot.slane %v2208, 6
      %v2211 = vor.u32 %v2207, %v2210
      %v2212 = vrot.slane %v2211, 4
      %v2214 = vshrl.u32 %v2194, 16
      %v2216 = vrot.slane %v2214, 5
      %v2217 = vshll.u32 %v2194, 16
      %v2219 = vrot.slane %v2217, 6
      %v2220 = vor.u32 %v2216, %v2219
      %v2221 = vsel %vm2203, %v2212, %v2220
      %v2223 = vshrl.u32 %v642, 16
      %v2225 = vrot.slane %v2223, 5
      %v2226 = vshll.u32 %v642, 16
      %v2228 = vrot.slane %v2226, 6
      %v2229 = vor.u32 %v2225, %v2228
      %v2230 = vrot.slane %v2229, 4
      %v2232 = vshrl.u32 %v2195, 16
      %v2234 = vrot.slane %v2232, 5
      %v2235 = vshll.u32 %v2195, 16
      %v2237 = vrot.slane %v2235, 6
      %v2238 = vor.u32 %v2234, %v2237
      %v2239 = vsel %vm2203, %v2230, %v2238
      %v2241 = vshrl.u32 %v643, 16
      %v2243 = vrot.slane %v2241, 5
      %v2244 = vshll.u32 %v643, 16
      %v2246 = vrot.slane %v2244, 6
      %v2247 = vor.u32 %v2243, %v2246
      %v2248 = vrot.slane %v2247, 4
      %v2250 = vshrl.u32 %v2196, 16
      %v2252 = vrot.slane %v2250, 5
      %v2253 = vshll.u32 %v2196, 16
      %v2255 = vrot.slane %v2253, 6
      %v2256 = vor.u32 %v2252, %v2255
      %v2257 = vsel %vm2203, %v2248, %v2256
      %v2259 = vshrl.u32 %v644, 16
      %v2261 = vrot.slane %v2259, 5
      %v2262 = vshll.u32 %v644, 16
      %v2264 = vrot.slane %v2262, 6
      %v2265 = vor.u32 %v2261, %v2264
      %v2266 = vrot.slane %v2265, 4
      %v2268 = vshrl.u32 %v2197, 16
      %v2270 = vrot.slane %v2268, 5
      %v2271 = vshll.u32 %v2197, 16
      %v2273 = vrot.slane %v2271, 6
      %v2274 = vor.u32 %v2270, %v2273
      %v2275 = vsel %vm2203, %v2266, %v2274
      %v2277 = vshrl.u32 %v645, 16
      %v2279 = vrot.slane %v2277, 5
      %v2280 = vshll.u32 %v645, 16
      %v2282 = vrot.slane %v2280, 6
      %v2283 = vor.u32 %v2279, %v2282
      %v2284 = vrot.slane %v2283, 4
      %v2286 = vshrl.u32 %v2198, 16
      %v2288 = vrot.slane %v2286, 5
      %v2289 = vshll.u32 %v2198, 16
      %v2291 = vrot.slane %v2289, 6
      %v2292 = vor.u32 %v2288, %v2291
      %v2293 = vsel %vm2203, %v2284, %v2292
      %v2295 = vshrl.u32 %v646, 16
      %v2297 = vrot.slane %v2295, 5
      %v2298 = vshll.u32 %v646, 16
      %v2300 = vrot.slane %v2298, 6
      %v2301 = vor.u32 %v2297, %v2300
      %v2302 = vrot.slane %v2301, 4
      %v2304 = vshrl.u32 %v2199, 16
      %v2306 = vrot.slane %v2304, 5
      %v2307 = vshll.u32 %v2199, 16
      %v2309 = vrot.slane %v2307, 6
      %v2310 = vor.u32 %v2306, %v2309
      %v2311 = vsel %vm2203, %v2302, %v2310
      %v2313 = vshrl.u32 %v647, 16
      %v2315 = vrot.slane %v2313, 5
      %v2316 = vshll.u32 %v647, 16
      %v2318 = vrot.slane %v2316, 6
      %v2319 = vor.u32 %v2315, %v2318
      %v2320 = vrot.slane %v2319, 4
      %v2322 = vshrl.u32 %v2200, 16
      %v2324 = vrot.slane %v2322, 5
      %v2325 = vshll.u32 %v2200, 16
      %v2327 = vrot.slane %v2325, 6
      %v2328 = vor.u32 %v2324, %v2327
      %v2329 = vsel %vm2203, %v2320, %v2328
      %s2330 = scalar_lea.vmem %s1, 176
      %v2331 = vld [vmem:[%s2330] sm:$0xf]
      %v2332 = vld [vmem:[%s2330 + $0x4] sm:$0xf]
      %v2333 = vld [vmem:[%s2330 + $0x8] sm:$0xf]
      %v2334 = vld [vmem:[%s2330 + $0xc] sm:$0xf]
      %v2335 = vunpack.c.l.b16 %v2221
      %v2336 = vunpack.c.l.b16 %v2239
      %v2337 = vunpack.c.l.b16 %v2257
      %v2338 = vunpack.c.l.b16 %v2275
      %v2339 = vunpack.c.l.b16 %v2293
      %v2340 = vunpack.c.l.b16 %v2311
      %v2341 = vunpack.c.l.b16 %v2329
      %v2342 = vpack.c.b16 %v2336, %v2335
      %v2343 = vpack.c.b16 %v2338, %v2337
      %v2344 = vpack.c.b16 %v2340, %v2339
      %v2345 = vpack.c.b16 %v2341, %v2341
      %v2350 = vunpack.c.l.b16 %v2331
      %v2351 = vunpack.c.l.b16 %v2332
      %v2352 = vunpack.c.l.b16 %v2333
      %v2353 = vunpack.c.l.b16 %v2334
      %v2354 = vpack.c.b16 %v2351, %v2350
      %v2355 = vpack.c.b16 %v2353, %v2352
      %v2359 = vsel %vm465, %v2342, 0
      %v2362 = vsel %vm465, %v2343, 0
      %v2365 = vsel %vm465, %v2344, 0
      %v2368 = vsel %vm465, %v2345, 0
      %2370 = vmatprep.subr.bf16.mxu0 0
      %2371 = vmatpush1.bf16.msra.mxu0 %v2354
      %2372 = vmatprep.subr.bf16.mxu0 0
      %2373 = vmatpush1.bf16.msra.mxu0 %v2355
      %2374 = vmatprep.subr.bf16.mxu0 0
      %2375 = vmatpush1.bf16.msra.mxu0 0
      %2376 = vmatprep.subr.bf16.mxu0 0
      %2377 = vmatpush1.bf16.msra.mxu0 0
      %2378 = vmatprep.subr.bf16.mxu0 0
      %2379 = vmatpush1.bf16.msra.mxu0 0
      %2380 = vmatprep.subr.bf16.mxu0 0
      %2381 = vmatpush1.bf16.msra.mxu0 0
      %2382 = vmatprep.subr.bf16.mxu0 0
      %2383 = vmatpush1.bf16.msra.mxu0 0
      %2384 = vmatprep.subr.bf16.mxu0 0
      %2385 = vmatpush1.bf16.msra.mxu0 0
      %2386 = vmatprep.subr.bf16.mxu0 0
      %2387 = vmatpush1.bf16.msra.mxu0 0
      %2388 = vmatprep.subr.bf16.mxu0 0
      %2389 = vmatpush1.bf16.msra.mxu0 0
      %2390 = vmatprep.subr.bf16.mxu0 0
      %2391 = vmatpush1.bf16.msra.mxu0 0
      %2392 = vmatprep.subr.bf16.mxu0 0
      %2393 = vmatpush1.bf16.msra.mxu0 0
      %2394 = vmatprep.subr.bf16.mxu0 0
      %2395 = vmatpush1.bf16.msra.mxu0 0
      %2396 = vmatprep.subr.bf16.mxu0 0
      %2397 = vmatpush1.bf16.msra.mxu0 0
      %2398 = vmatprep.subr.bf16.mxu0 0
      %2399 = vmatpush1.bf16.msra.mxu0 0
      %2400 = vmatprep.subr.bf16.mxu0 0
      %2401 = vmatpush1.bf16.msra.mxu0 0
      %2402 = vmatprep.mubr.bf16.mxu0 0
      %2403 = vmatmul.mubr.bf16.gmra.mrb[0].mxu0 %v2359
      %v2404 = vpop.f32.mrb[0].mxu0
      %v2405 = vadd.f32 0.0, %v2404
      %v2406 = vpop.f32.mrb[0].mxu0
      %v2407 = vpop.f32.mrb[0].mxu0
      %v2408 = vadd.f32 0.0, %v2407
      %v2409 = vpop.f32.mrb[0].mxu0
      %2410 = vmatprep.mubr.bf16.mxu0 0
      %2411 = vmatmul.mubr.bf16.gmra.mrb[0].mxu0 %v2362
      %v2412 = vpop.f32.mrb[0].mxu0
      %v2413 = vadd.f32 0.0, %v2412
      %v2414 = vpop.f32.mrb[0].mxu0
      %v2415 = vpop.f32.mrb[0].mxu0
      %v2416 = vadd.f32 0.0, %v2415
      %v2417 = vpop.f32.mrb[0].mxu0
      %2418 = vmatprep.mubr.bf16.mxu0 0
      %2419 = vmatmul.mubr.bf16.gmra.mrb[0].mxu0 %v2365
      %v2420 = vpop.f32.mrb[0].mxu0
      %v2421 = vadd.f32 0.0, %v2420
      %v2422 = vpop.f32.mrb[0].mxu0
      %v2423 = vpop.f32.mrb[0].mxu0
      %v2424 = vadd.f32 0.0, %v2423
      %v2425 = vpop.f32.mrb[0].mxu0
      %2426 = vmatprep.mubr.bf16.mxu0 0
      %2427 = vmatmul.mubr.bf16.gmra.mrb[0].mxu0 %v2368
      %v2428 = vpop.f32.mrb[0].mxu0
      %v2429 = vadd.f32 0.0, %v2428
      %v2430 = vpop.f32.mrb[0].mxu0
      %v2431 = vpop.f32.mrb[0].mxu0
      %v2432 = vpop.f32.mrb[0].mxu0
      %2433 = vdwg.mxu0
      %v2434 = vadd.f32 %v2165, %v2405
      %v2435 = vadd.f32 %v2168, %v2408
      %v2436 = vadd.f32 %v2173, %v2413
      %v2437 = vadd.f32 %v2176, %v2416
      %v2438 = vadd.f32 %v2181, %v2421
      %v2439 = vadd.f32 %v2184, %v2424
      %v2440 = vadd.f32 %v2189, %v2429
      %s2441 = scalar_lea.vmem %s1, 192
      %v2442 = vld [vmem:[%s2441] sm:$0xf]
      %v2443 = vld [vmem:[%s2441 + $0x4] sm:$0xf]
      %v2444 = vld [vmem:[%s2441 + $0x8] sm:$0xf]
      %v2445 = vld [vmem:[%s2441 + $0xc] sm:$0xf]
      %v2450 = vunpack.c.l.b16 %v2442
      %v2451 = vunpack.c.l.b16 %v2443
      %v2452 = vunpack.c.l.b16 %v2444
      %v2453 = vunpack.c.l.b16 %v2445
      %v2454 = vpack.c.b16 %v2451, %v2450
      %v2455 = vpack.c.b16 %v2453, %v2452
      %2458 = vmatprep.subr.bf16.mxu0 0
      %2459 = vmatpush1.bf16.msra.mxu0 %v2454
      %2460 = vmatprep.subr.bf16.mxu0 0
      %2461 = vmatpush1.bf16.msra.mxu0 %v2455
      %2462 = vmatprep.subr.bf16.mxu0 0
      %2463 = vmatpush1.bf16.msra.mxu0 0
      %2464 = vmatprep.subr.bf16.mxu0 0
      %2465 = vmatpush1.bf16.msra.mxu0 0
      %2466 = vmatprep.subr.bf16.mxu0 0
      %2467 = vmatpush1.bf16.msra.mxu0 0
      %2468 = vmatprep.subr.bf16.mxu0 0
      %2469 = vmatpush1.bf16.msra.mxu0 0
      %2470 = vmatprep.subr.bf16.mxu0 0
      %2471 = vmatpush1.bf16.msra.mxu0 0
      %2472 = vmatprep.subr.bf16.mxu0 0
      %2473 = vmatpush1.bf16.msra.mxu0 0
      %2474 = vmatprep.subr.bf16.mxu0 0
      %2475 = vmatpush1.bf16.msra.mxu0 0
      %2476 = vmatprep.subr.bf16.mxu0 0
      %2477 = vmatpush1.bf16.msra.mxu0 0
      %2478 = vmatprep.subr.bf16.mxu0 0
      %2479 = vmatpush1.bf16.msra.mxu0 0
      %2480 = vmatprep.subr.bf16.mxu0 0
      %2481 = vmatpush1.bf16.msra.mxu0 0
      %2482 = vmatprep.subr.bf16.mxu0 0
      %2483 = vmatpush1.bf16.msra.mxu0 0
      %2484 = vmatprep.subr.bf16.mxu0 0
      %2485 = vmatpush1.bf16.msra.mxu0 0
      %2486 = vmatprep.subr.bf16.mxu0 0
      %2487 = vmatpush1.bf16.msra.mxu0 0
      %2488 = vmatprep.subr.bf16.mxu0 0
      %2489 = vmatpush1.bf16.msra.mxu0 0
      %2490 = vmatprep.mubr.bf16.mxu0 0
      %2491 = vmatmul.mubr.bf16.gmra.mrb[0].mxu0 %v1563
      %v2492 = vpop.f32.mrb[0].mxu0
      %v2493 = vadd.f32 0.0, %v2492
      %v2494 = vpop.f32.mrb[0].mxu0
      %v2495 = vpop.f32.mrb[0].mxu0
      %v2496 = vadd.f32 0.0, %v2495
      %v2497 = vpop.f32.mrb[0].mxu0
      %2498 = vmatprep.mubr.bf16.mxu0 0
      %2499 = vmatmul.mubr.bf16.gmra.mrb[0].mxu0 %v1566
      %v2500 = vpop.f32.mrb[0].mxu0
      %v2501 = vadd.f32 0.0, %v2500
      %v2502 = vpop.f32.mrb[0].mxu0
      %v2503 = vpop.f32.mrb[0].mxu0
      %v2504 = vadd.f32 0.0, %v2503
      %v2505 = vpop.f32.mrb[0].mxu0
      %2506 = vmatprep.mubr.bf16.mxu0 0
      %2507 = vmatmul.mubr.bf16.gmra.mrb[0].mxu0 %v1569
      %v2508 = vpop.f32.mrb[0].mxu0
      %v2509 = vadd.f32 0.0, %v2508
      %v2510 = vpop.f32.mrb[0].mxu0
      %v2511 = vpop.f32.mrb[0].mxu0
      %v2512 = vadd.f32 0.0, %v2511
      %v2513 = vpop.f32.mrb[0].mxu0
      %2514 = vmatprep.mubr.bf16.mxu0 0
      %2515 = vmatmul.mubr.bf16.gmra.mrb[0].mxu0 %v1572
      %v2516 = vpop.f32.mrb[0].mxu0
      %v2517 = vadd.f32 0.0, %v2516
      %v2518 = vpop.f32.mrb[0].mxu0
      %v2519 = vpop.f32.mrb[0].mxu0
      %v2520 = vpop.f32.mrb[0].mxu0
      %2521 = vdwg.mxu0
      %v2522 = vadd.f32 %v2434, %v2493
      %v2523 = vadd.f32 %v2435, %v2496
      %v2524 = vadd.f32 %v2436, %v2501
      %v2525 = vadd.f32 %v2437, %v2504
      %v2526 = vadd.f32 %v2438, %v2509
      %v2527 = vadd.f32 %v2439, %v2512
      %v2528 = vadd.f32 %v2440, %v2517
      %s2529 = scalar_lea.vmem %s1, 208
      %v2530 = vld [vmem:[%s2529] sm:$0xf]
      %v2531 = vld [vmem:[%s2529 + $0x4] sm:$0xf]
      %v2532 = vld [vmem:[%s2529 + $0x8] sm:$0xf]
      %v2533 = vld [vmem:[%s2529 + $0xc] sm:$0xf]
      %v2538 = vunpack.c.l.b16 %v2530
      %v2539 = vunpack.c.l.b16 %v2531
      %v2540 = vunpack.c.l.b16 %v2532
      %v2541 = vunpack.c.l.b16 %v2533
      %v2542 = vpack.c.b16 %v2539, %v2538
      %v2543 = vpack.c.b16 %v2541, %v2540
      %2546 = vmatprep.subr.bf16.mxu0 0
      %2547 = vmatpush1.bf16.msra.mxu0 %v2542
      %2548 = vmatprep.subr.bf16.mxu0 0
      %2549 = vmatpush1.bf16.msra.mxu0 %v2543
      %2550 = vmatprep.subr.bf16.mxu0 0
      %2551 = vmatpush1.bf16.msra.mxu0 0
      %2552 = vmatprep.subr.bf16.mxu0 0
      %2553 = vmatpush1.bf16.msra.mxu0 0
      %2554 = vmatprep.subr.bf16.mxu0 0
      %2555 = vmatpush1.bf16.msra.mxu0 0
      %2556 = vmatprep.subr.bf16.mxu0 0
      %2557 = vmatpush1.bf16.msra.mxu0 0
      %2558 = vmatprep.subr.bf16.mxu0 0
      %2559 = vmatpush1.bf16.msra.mxu0 0
      %2560 = vmatprep.subr.bf16.mxu0 0
      %2561 = vmatpush1.bf16.msra.mxu0 0
      %2562 = vmatprep.subr.bf16.mxu0 0
      %2563 = vmatpush1.bf16.msra.mxu0 0
      %2564 = vmatprep.subr.bf16.mxu0 0
      %2565 = vmatpush1.bf16.msra.mxu0 0
      %2566 = vmatprep.subr.bf16.mxu0 0
      %2567 = vmatpush1.bf16.msra.mxu0 0
      %2568 = vmatprep.subr.bf16.mxu0 0
      %2569 = vmatpush1.bf16.msra.mxu0 0
      %2570 = vmatprep.subr.bf16.mxu0 0
      %2571 = vmatpush1.bf16.msra.mxu0 0
      %2572 = vmatprep.subr.bf16.mxu0 0
      %2573 = vmatpush1.bf16.msra.mxu0 0
      %2574 = vmatprep.subr.bf16.mxu0 0
      %2575 = vmatpush1.bf16.msra.mxu0 0
      %2576 = vmatprep.subr.bf16.mxu0 0
      %2577 = vmatpush1.bf16.msra.mxu0 0
      %2578 = vmatprep.mubr.bf16.mxu0 0
      %2579 = vmatmul.mubr.bf16.gmra.mrb[0].mxu0 %v1950
      %v2580 = vpop.f32.mrb[0].mxu0
      %v2581 = vadd.f32 0.0, %v2580
      %v2582 = vpop.f32.mrb[0].mxu0
      %v2583 = vpop.f32.mrb[0].mxu0
      %v2584 = vadd.f32 0.0, %v2583
      %v2585 = vpop.f32.mrb[0].mxu0
      %2586 = vmatprep.mubr.bf16.mxu0 0
      %2587 = vmatmul.mubr.bf16.gmra.mrb[0].mxu0 %v1953
      %v2588 = vpop.f32.mrb[0].mxu0
      %v2589 = vadd.f32 0.0, %v2588
      %v2590 = vpop.f32.mrb[0].mxu0
      %v2591 = vpop.f32.mrb[0].mxu0
      %v2592 = vadd.f32 0.0, %v2591
      %v2593 = vpop.f32.mrb[0].mxu0
      %2594 = vmatprep.mubr.bf16.mxu0 0
      %2595 = vmatmul.mubr.bf16.gmra.mrb[0].mxu0 %v1956
      %v2596 = vpop.f32.mrb[0].mxu0
      %v2597 = vadd.f32 0.0, %v2596
      %v2598 = vpop.f32.mrb[0].mxu0
      %v2599 = vpop.f32.mrb[0].mxu0
      %v2600 = vadd.f32 0.0, %v2599
      %v2601 = vpop.f32.mrb[0].mxu0
      %2602 = vmatprep.mubr.bf16.mxu0 0
      %2603 = vmatmul.mubr.bf16.gmra.mrb[0].mxu0 %v1959
      %v2604 = vpop.f32.mrb[0].mxu0
      %v2605 = vadd.f32 0.0, %v2604
      %v2606 = vpop.f32.mrb[0].mxu0
      %v2607 = vpop.f32.mrb[0].mxu0
      %v2608 = vpop.f32.mrb[0].mxu0
      %2609 = vdwg.mxu0
      %v2610 = vadd.f32 %v2522, %v2581
      %v2611 = vadd.f32 %v2523, %v2584
      %v2612 = vadd.f32 %v2524, %v2589
      %v2613 = vadd.f32 %v2525, %v2592
      %v2614 = vadd.f32 %v2526, %v2597
      %v2615 = vadd.f32 %v2527, %v2600
      %v2616 = vadd.f32 %v2528, %v2605
      %v2617 = vld [vmem:[%s1421 + $0x4] sm:$0x3]
      %v2618 = vld [vmem:[%s1421 + $0xc] sm:$0x3]
      %v2619 = vld [vmem:[%s1421 + $0x14] sm:$0x3]
      %v2620 = vld [vmem:[%s1421 + $0x1c] sm:$0x3]
      %v2621 = vld [vmem:[%s1421 + $0x24] sm:$0x3]
      %v2622 = vld [vmem:[%s1421 + $0x2c] sm:$0x3]
      %v2623 = vld [vmem:[%s1421 + $0x34] sm:$0x3]
      %v2625 = vshrl.u32 %v1872, 16
      %v2627 = vrot.slane %v2625, 5
      %v2628 = vshll.u32 %v1872, 16
      %v2630 = vrot.slane %v2628, 6
      %v2631 = vor.u32 %v2627, %v2630
      %v2632 = vrot.slane %v2631, 4
      %v2634 = vshrl.u32 %v2617, 16
      %v2636 = vrot.slane %v2634, 5
      %v2637 = vshll.u32 %v2617, 16
      %v2639 = vrot.slane %v2637, 6
      %v2640 = vor.u32 %v2636, %v2639
      %v2641 = vsel %vm2203, %v2632, %v2640
      %v2643 = vshrl.u32 %v1873, 16
      %v2645 = vrot.slane %v2643, 5
      %v2646 = vshll.u32 %v1873, 16
      %v2648 = vrot.slane %v2646, 6
      %v2649 = vor.u32 %v2645, %v2648
      %v2650 = vrot.slane %v2649, 4
      %v2652 = vshrl.u32 %v2618, 16
      %v2654 = vrot.slane %v2652, 5
      %v2655 = vshll.u32 %v2618, 16
      %v2657 = vrot.slane %v2655, 6
      %v2658 = vor.u32 %v2654, %v2657
      %v2659 = vsel %vm2203, %v2650, %v2658
      %v2661 = vshrl.u32 %v1874, 16
      %v2663 = vrot.slane %v2661, 5
      %v2664 = vshll.u32 %v1874, 16
      %v2666 = vrot.slane %v2664, 6
      %v2667 = vor.u32 %v2663, %v2666
      %v2668 = vrot.slane %v2667, 4
      %v2670 = vshrl.u32 %v2619, 16
      %v2672 = vrot.slane %v2670, 5
      %v2673 = vshll.u32 %v2619, 16
      %v2675 = vrot.slane %v2673, 6
      %v2676 = vor.u32 %v2672, %v2675
      %v2677 = vsel %vm2203, %v2668, %v2676
      %v2679 = vshrl.u32 %v1875, 16
      %v2681 = vrot.slane %v2679, 5
      %v2682 = vshll.u32 %v1875, 16
      %v2684 = vrot.slane %v2682, 6
      %v2685 = vor.u32 %v2681, %v2684
      %v2686 = vrot.slane %v2685, 4
      %v2688 = vshrl.u32 %v2620, 16
      %v2690 = vrot.slane %v2688, 5
      %v2691 = vshll.u32 %v2620, 16
      %v2693 = vrot.slane %v2691, 6
      %v2694 = vor.u32 %v2690, %v2693
      %v2695 = vsel %vm2203, %v2686, %v2694
      %v2697 = vshrl.u32 %v1876, 16
      %v2699 = vrot.slane %v2697, 5
      %v2700 = vshll.u32 %v1876, 16
      %v2702 = vrot.slane %v2700, 6
      %v2703 = vor.u32 %v2699, %v2702
      %v2704 = vrot.slane %v2703, 4
      %v2706 = vshrl.u32 %v2621, 16
      %v2708 = vrot.slane %v2706, 5
      %v2709 = vshll.u32 %v2621, 16
      %v2711 = vrot.slane %v2709, 6
      %v2712 = vor.u32 %v2708, %v2711
      %v2713 = vsel %vm2203, %v2704, %v2712
      %v2715 = vshrl.u32 %v1877, 16
      %v2717 = vrot.slane %v2715, 5
      %v2718 = vshll.u32 %v1877, 16
      %v2720 = vrot.slane %v2718, 6
      %v2721 = vor.u32 %v2717, %v2720
      %v2722 = vrot.slane %v2721, 4
      %v2724 = vshrl.u32 %v2622, 16
      %v2726 = vrot.slane %v2724, 5
      %v2727 = vshll.u32 %v2622, 16
      %v2729 = vrot.slane %v2727, 6
      %v2730 = vor.u32 %v2726, %v2729
      %v2731 = vsel %vm2203, %v2722, %v2730
      %v2733 = vshrl.u32 %v1878, 16
      %v2735 = vrot.slane %v2733, 5
      %v2736 = vshll.u32 %v1878, 16
      %v2738 = vrot.slane %v2736, 6
      %v2739 = vor.u32 %v2735, %v2738
      %v2740 = vrot.slane %v2739, 4
      %v2742 = vshrl.u32 %v2623, 16
      %v2744 = vrot.slane %v2742, 5
      %v2745 = vshll.u32 %v2623, 16
      %v2747 = vrot.slane %v2745, 6
      %v2748 = vor.u32 %v2744, %v2747
      %v2749 = vsel %vm2203, %v2740, %v2748
      %s2750 = scalar_lea.vmem %s1, 224
      %v2751 = vld [vmem:[%s2750] sm:$0xf]
      %v2752 = vld [vmem:[%s2750 + $0x4] sm:$0xf]
      %v2753 = vld [vmem:[%s2750 + $0x8] sm:$0xf]
      %v2754 = vld [vmem:[%s2750 + $0xc] sm:$0xf]
      %v2755 = vunpack.c.l.b16 %v2641
      %v2756 = vunpack.c.l.b16 %v2659
      %v2757 = vunpack.c.l.b16 %v2677
      %v2758 = vunpack.c.l.b16 %v2695
      %v2759 = vunpack.c.l.b16 %v2713
      %v2760 = vunpack.c.l.b16 %v2731
      %v2761 = vunpack.c.l.b16 %v2749
      %v2762 = vpack.c.b16 %v2756, %v2755
      %v2763 = vpack.c.b16 %v2758, %v2757
      %v2764 = vpack.c.b16 %v2760, %v2759
      %v2765 = vpack.c.b16 %v2761, %v2761
      %v2770 = vunpack.c.l.b16 %v2751
      %v2771 = vunpack.c.l.b16 %v2752
      %v2772 = vunpack.c.l.b16 %v2753
      %v2773 = vunpack.c.l.b16 %v2754
      %v2774 = vpack.c.b16 %v2771, %v2770
      %v2775 = vpack.c.b16 %v2773, %v2772
      %v2779 = vsel %vm465, %v2762, 0
      %v2782 = vsel %vm465, %v2763, 0
      %v2785 = vsel %vm465, %v2764, 0
      %v2788 = vsel %vm465, %v2765, 0
      %2790 = vmatprep.subr.bf16.mxu0 0
      %2791 = vmatpush1.bf16.msra.mxu0 %v2774
      %2792 = vmatprep.subr.bf16.mxu0 0
      %2793 = vmatpush1.bf16.msra.mxu0 %v2775
      %2794 = vmatprep.subr.bf16.mxu0 0
      %2795 = vmatpush1.bf16.msra.mxu0 0
      %2796 = vmatprep.subr.bf16.mxu0 0
      %2797 = vmatpush1.bf16.msra.mxu0 0
      %2798 = vmatprep.subr.bf16.mxu0 0
      %2799 = vmatpush1.bf16.msra.mxu0 0
      %2800 = vmatprep.subr.bf16.mxu0 0
      %2801 = vmatpush1.bf16.msra.mxu0 0
      %2802 = vmatprep.subr.bf16.mxu0 0
      %2803 = vmatpush1.bf16.msra.mxu0 0
      %2804 = vmatprep.subr.bf16.mxu0 0
      %2805 = vmatpush1.bf16.msra.mxu0 0
      %2806 = vmatprep.subr.bf16.mxu0 0
      %2807 = vmatpush1.bf16.msra.mxu0 0
      %2808 = vmatprep.subr.bf16.mxu0 0
      %2809 = vmatpush1.bf16.msra.mxu0 0
      %2810 = vmatprep.subr.bf16.mxu0 0
      %2811 = vmatpush1.bf16.msra.mxu0 0
      %2812 = vmatprep.subr.bf16.mxu0 0
      %2813 = vmatpush1.bf16.msra.mxu0 0
      %2814 = vmatprep.subr.bf16.mxu0 0
      %2815 = vmatpush1.bf16.msra.mxu0 0
      %2816 = vmatprep.subr.bf16.mxu0 0
      %2817 = vmatpush1.bf16.msra.mxu0 0
      %2818 = vmatprep.subr.bf16.mxu0 0
      %2819 = vmatpush1.bf16.msra.mxu0 0
      %2820 = vmatprep.subr.bf16.mxu0 0
      %2821 = vmatpush1.bf16.msra.mxu0 0
      %2822 = vmatprep.mubr.bf16.mxu0 0
      %2823 = vmatmul.mubr.bf16.gmra.mrb[0].mxu0 %v2779
      %v2824 = vpop.f32.mrb[0].mxu0
      %v2825 = vadd.f32 0.0, %v2824
      %v2826 = vpop.f32.mrb[0].mxu0
      %v2827 = vpop.f32.mrb[0].mxu0
      %v2828 = vadd.f32 0.0, %v2827
      %v2829 = vpop.f32.mrb[0].mxu0
      %2830 = vmatprep.mubr.bf16.mxu0 0
      %2831 = vmatmul.mubr.bf16.gmra.mrb[0].mxu0 %v2782
      %v2832 = vpop.f32.mrb[0].mxu0
      %v2833 = vadd.f32 0.0, %v2832
      %v2834 = vpop.f32.mrb[0].mxu0
      %v2835 = vpop.f32.mrb[0].mxu0
      %v2836 = vadd.f32 0.0, %v2835
      %v2837 = vpop.f32.mrb[0].mxu0
      %2838 = vmatprep.mubr.bf16.mxu0 0
      %2839 = vmatmul.mubr.bf16.gmra.mrb[0].mxu0 %v2785
      %v2840 = vpop.f32.mrb[0].mxu0
      %v2841 = vadd.f32 0.0, %v2840
      %v2842 = vpop.f32.mrb[0].mxu0
      %v2843 = vpop.f32.mrb[0].mxu0
      %v2844 = vadd.f32 0.0, %v2843
      %v2845 = vpop.f32.mrb[0].mxu0
      %2846 = vmatprep.mubr.bf16.mxu0 0
      %2847 = vmatmul.mubr.bf16.gmra.mrb[0].mxu0 %v2788
      %v2848 = vpop.f32.mrb[0].mxu0
      %v2849 = vadd.f32 0.0, %v2848
      %v2850 = vpop.f32.mrb[0].mxu0
      %v2851 = vpop.f32.mrb[0].mxu0
      %v2852 = vpop.f32.mrb[0].mxu0
      %2853 = vdwg.mxu0
      %v2854 = vadd.f32 %v2610, %v2825
      %v2855 = vadd.f32 %v2611, %v2828
      %v2856 = vadd.f32 %v2612, %v2833
      %v2857 = vadd.f32 %v2613, %v2836
      %v2858 = vadd.f32 %v2614, %v2841
      %v2859 = vadd.f32 %v2615, %v2844
      %v2860 = vadd.f32 %v2616, %v2849
      %s2861 = sadd.s32 %s197, 3
      %s2862 = smul.u32 %s2861, 2
      %s2863 = smul.addr %s2862, 4
      %s2864 = scalar_lea.vmem %s184, %s2863
      %v2865 = vld [vmem:[%s2864] sm:$0xf]
      %v2866 = vld [vmem:[%s2864 + $0x4] sm:$0x1]
      %v2867 = vld [vmem:[%s2864 + $0x8] sm:$0xf]
      %v2868 = vld [vmem:[%s2864 + $0xc] sm:$0x1]
      %v2869 = vld [vmem:[%s2864 + $0x10] sm:$0xf]
      %v2870 = vld [vmem:[%s2864 + $0x14] sm:$0x1]
      %v2871 = vld [vmem:[%s2864 + $0x18] sm:$0xf]
      %v2872 = vld [vmem:[%s2864 + $0x1c] sm:$0x1]
      %v2873 = vld [vmem:[%s2864 + $0x20] sm:$0xf]
      %v2874 = vld [vmem:[%s2864 + $0x24] sm:$0x1]
      %v2875 = vld [vmem:[%s2864 + $0x28] sm:$0xf]
      %v2876 = vld [vmem:[%s2864 + $0x2c] sm:$0x1]
      %v2877 = vld [vmem:[%s2864 + $0x30] sm:$0xf]
      %v2878 = vld [vmem:[%s2864 + $0x34] sm:$0x1]
      %v2880 = vshrl.u32 %v2865, 16
      %v2882 = vrot.slane %v2880, 4
      %v2883 = vshll.u32 %v2865, 16
      %v2885 = vrot.slane %v2883, 5
      %v2886 = vor.u32 %v2882, %v2885
      %v2887 = vrot.slane %v2886, 4
      %v2889 = vshll.u32 %v2866, 16
      %v2891 = vrot.slane %v2889, 5
      %v2892 = vsel %vm218, %v2887, %v2891
      %v2894 = vshrl.u32 %v2867, 16
      %v2896 = vrot.slane %v2894, 4
      %v2897 = vshll.u32 %v2867, 16
      %v2899 = vrot.slane %v2897, 5
      %v2900 = vor.u32 %v2896, %v2899
      %v2901 = vrot.slane %v2900, 4
      %v2903 = vshll.u32 %v2868, 16
      %v2905 = vrot.slane %v2903, 5
      %v2906 = vsel %vm218, %v2901, %v2905
      %v2908 = vshrl.u32 %v2869, 16
      %v2910 = vrot.slane %v2908, 4
      %v2911 = vshll.u32 %v2869, 16
      %v2913 = vrot.slane %v2911, 5
      %v2914 = vor.u32 %v2910, %v2913
      %v2915 = vrot.slane %v2914, 4
      %v2917 = vshll.u32 %v2870, 16
      %v2919 = vrot.slane %v2917, 5
      %v2920 = vsel %vm218, %v2915, %v2919
      %v2922 = vshrl.u32 %v2871, 16
      %v2924 = vrot.slane %v2922, 4
      %v2925 = vshll.u32 %v2871, 16
      %v2927 = vrot.slane %v2925, 5
      %v2928 = vor.u32 %v2924, %v2927
      %v2929 = vrot.slane %v2928, 4
      %v2931 = vshll.u32 %v2872, 16
      %v2933 = vrot.slane %v2931, 5
      %v2934 = vsel %vm218, %v2929, %v2933
      %v2936 = vshrl.u32 %v2873, 16
      %v2938 = vrot.slane %v2936, 4
      %v2939 = vshll.u32 %v2873, 16
      %v2941 = vrot.slane %v2939, 5
      %v2942 = vor.u32 %v2938, %v2941
      %v2943 = vrot.slane %v2942, 4
      %v2945 = vshll.u32 %v2874, 16
      %v2947 = vrot.slane %v2945, 5
      %v2948 = vsel %vm218, %v2943, %v2947
      %v2950 = vshrl.u32 %v2875, 16
      %v2952 = vrot.slane %v2950, 4
      %v2953 = vshll.u32 %v2875, 16
      %v2955 = vrot.slane %v2953, 5
      %v2956 = vor.u32 %v2952, %v2955
      %v2957 = vrot.slane %v2956, 4
      %v2959 = vshll.u32 %v2876, 16
      %v2961 = vrot.slane %v2959, 5
      %v2962 = vsel %vm218, %v2957, %v2961
      %v2964 = vshrl.u32 %v2877, 16
      %v2966 = vrot.slane %v2964, 4
      %v2967 = vshll.u32 %v2877, 16
      %v2969 = vrot.slane %v2967, 5
      %v2970 = vor.u32 %v2966, %v2969
      %v2971 = vrot.slane %v2970, 4
      %v2973 = vshll.u32 %v2878, 16
      %v2975 = vrot.slane %v2973, 5
      %v2976 = vsel %vm218, %v2971, %v2975
      %s2977 = scalar_lea.vmem %s1, 240
      %v2978 = vld [vmem:[%s2977] sm:$0xf]
      %v2979 = vld [vmem:[%s2977 + $0x4] sm:$0xf]
      %v2980 = vld [vmem:[%s2977 + $0x8] sm:$0xf]
      %v2981 = vld [vmem:[%s2977 + $0xc] sm:$0xf]
      %v2982 = vunpack.c.l.b16 %v2892
      %v2983 = vunpack.c.l.b16 %v2906
      %v2984 = vunpack.c.l.b16 %v2920
      %v2985 = vunpack.c.l.b16 %v2934
      %v2986 = vunpack.c.l.b16 %v2948
      %v2987 = vunpack.c.l.b16 %v2962
      %v2988 = vunpack.c.l.b16 %v2976
      %v2989 = vpack.c.b16 %v2983, %v2982
      %v2990 = vpack.c.b16 %v2985, %v2984
      %v2991 = vpack.c.b16 %v2987, %v2986
      %v2992 = vpack.c.b16 %v2988, %v2988
      %v2997 = vunpack.c.l.b16 %v2978
      %v2998 = vunpack.c.l.b16 %v2979
      %v2999 = vunpack.c.l.b16 %v2980
      %v3000 = vunpack.c.l.b16 %v2981
      %v3001 = vpack.c.b16 %v2998, %v2997
      %v3002 = vpack.c.b16 %v3000, %v2999
      %v3006 = vsel %vm465, %v2989, 0
      %v3009 = vsel %vm465, %v2990, 0
      %v3012 = vsel %vm465, %v2991, 0
      %v3015 = vsel %vm465, %v2992, 0
      %3017 = vmatprep.subr.bf16.mxu0 0
      %3018 = vmatpush1.bf16.msra.mxu0 %v3001
      %3019 = vmatprep.subr.bf16.mxu0 0
      %3020 = vmatpush1.bf16.msra.mxu0 %v3002
      %3021 = vmatprep.subr.bf16.mxu0 0
      %3022 = vmatpush1.bf16.msra.mxu0 0
      %3023 = vmatprep.subr.bf16.mxu0 0
      %3024 = vmatpush1.bf16.msra.mxu0 0
      %3025 = vmatprep.subr.bf16.mxu0 0
      %3026 = vmatpush1.bf16.msra.mxu0 0
      %3027 = vmatprep.subr.bf16.mxu0 0
      %3028 = vmatpush1.bf16.msra.mxu0 0
      %3029 = vmatprep.subr.bf16.mxu0 0
      %3030 = vmatpush1.bf16.msra.mxu0 0
      %3031 = vmatprep.subr.bf16.mxu0 0
      %3032 = vmatpush1.bf16.msra.mxu0 0
      %3033 = vmatprep.subr.bf16.mxu0 0
      %3034 = vmatpush1.bf16.msra.mxu0 0
      %3035 = vmatprep.subr.bf16.mxu0 0
      %3036 = vmatpush1.bf16.msra.mxu0 0
      %3037 = vmatprep.subr.bf16.mxu0 0
      %3038 = vmatpush1.bf16.msra.mxu0 0
      %3039 = vmatprep.subr.bf16.mxu0 0
      %3040 = vmatpush1.bf16.msra.mxu0 0
      %3041 = vmatprep.subr.bf16.mxu0 0
      %3042 = vmatpush1.bf16.msra.mxu0 0
      %3043 = vmatprep.subr.bf16.mxu0 0
      %3044 = vmatpush1.bf16.msra.mxu0 0
      %3045 = vmatprep.subr.bf16.mxu0 0
      %3046 = vmatpush1.bf16.msra.mxu0 0
      %3047 = vmatprep.subr.bf16.mxu0 0
      %3048 = vmatpush1.bf16.msra.mxu0 0
      %3049 = vmatprep.mubr.bf16.mxu0 0
      %3050 = vmatmul.mubr.bf16.gmra.mrb[0].mxu0 %v3006
      %v3051 = vpop.f32.mrb[0].mxu0
      %v3052 = vadd.f32 0.0, %v3051
      %v3053 = vpop.f32.mrb[0].mxu0
      %v3054 = vpop.f32.mrb[0].mxu0
      %v3055 = vadd.f32 0.0, %v3054
      %v3056 = vpop.f32.mrb[0].mxu0
      %3057 = vmatprep.mubr.bf16.mxu0 0
      %3058 = vmatmul.mubr.bf16.gmra.mrb[0].mxu0 %v3009
      %v3059 = vpop.f32.mrb[0].mxu0
      %v3060 = vadd.f32 0.0, %v3059
      %v3061 = vpop.f32.mrb[0].mxu0
      %v3062 = vpop.f32.mrb[0].mxu0
      %v3063 = vadd.f32 0.0, %v3062
      %v3064 = vpop.f32.mrb[0].mxu0
      %3065 = vmatprep.mubr.bf16.mxu0 0
      %3066 = vmatmul.mubr.bf16.gmra.mrb[0].mxu0 %v3012
      %v3067 = vpop.f32.mrb[0].mxu0
      %v3068 = vadd.f32 0.0, %v3067
      %v3069 = vpop.f32.mrb[0].mxu0
      %v3070 = vpop.f32.mrb[0].mxu0
      %v3071 = vadd.f32 0.0, %v3070
      %v3072 = vpop.f32.mrb[0].mxu0
      %3073 = vmatprep.mubr.bf16.mxu0 0
      %3074 = vmatmul.mubr.bf16.gmra.mrb[0].mxu0 %v3015
      %v3075 = vpop.f32.mrb[0].mxu0
      %v3076 = vadd.f32 0.0, %v3075
      %v3077 = vpop.f32.mrb[0].mxu0
      %v3078 = vpop.f32.mrb[0].mxu0
      %v3079 = vpop.f32.mrb[0].mxu0
      %3080 = vdwg.mxu0
      %v3081 = vadd.f32 %v2854, %v3052
      %v3082 = vadd.f32 %v2855, %v3055
      %v3083 = vadd.f32 %v2856, %v3060
      %v3084 = vadd.f32 %v2857, %v3063
      %v3085 = vadd.f32 %v2858, %v3068
      %v3086 = vadd.f32 %v2859, %v3071
      %v3087 = vadd.f32 %v2860, %v3076
      %v3088 = vld [vmem:[%s2864] sm:$0xe]
      %v3089 = vld [vmem:[%s2864 + $0x8] sm:$0xe]
      %v3090 = vld [vmem:[%s2864 + $0x10] sm:$0xe]
      %v3091 = vld [vmem:[%s2864 + $0x18] sm:$0xe]
      %v3092 = vld [vmem:[%s2864 + $0x20] sm:$0xe]
      %v3093 = vld [vmem:[%s2864 + $0x28] sm:$0xe]
      %v3094 = vld [vmem:[%s2864 + $0x30] sm:$0xe]
      %v3109 = vrot.slane %v3088, 5
      %v3110 = vrot.slane %v3109, 4
      %v3111 = vrot.slane %v2866, 5
      %v3112 = vsel %vm664, %v3110, %v3111
      %v3113 = vrot.slane %v3089, 5
      %v3114 = vrot.slane %v3113, 4
      %v3115 = vrot.slane %v2868, 5
      %v3116 = vsel %vm664, %v3114, %v3115
      %v3117 = vrot.slane %v3090, 5
      %v3118 = vrot.slane %v3117, 4
      %v3119 = vrot.slane %v2870, 5
      %v3120 = vsel %vm664, %v3118, %v3119
      %v3121 = vrot.slane %v3091, 5
      %v3122 = vrot.slane %v3121, 4
      %v3123 = vrot.slane %v2872, 5
      %v3124 = vsel %vm664, %v3122, %v3123
      %v3125 = vrot.slane %v3092, 5
      %v3126 = vrot.slane %v3125, 4
      %v3127 = vrot.slane %v2874, 5
      %v3128 = vsel %vm664, %v3126, %v3127
      %v3129 = vrot.slane %v3093, 5
      %v3130 = vrot.slane %v3129, 4
      %v3131 = vrot.slane %v2876, 5
      %v3132 = vsel %vm664, %v3130, %v3131
      %v3133 = vrot.slane %v3094, 5
      %v3134 = vrot.slane %v3133, 4
      %v3135 = vrot.slane %v2878, 5
      %v3136 = vsel %vm664, %v3134, %v3135
      %s3137 = scalar_lea.vmem %s1, 256
      %v3138 = vld [vmem:[%s3137] sm:$0xf]
      %v3139 = vld [vmem:[%s3137 + $0x4] sm:$0xf]
      %v3140 = vld [vmem:[%s3137 + $0x8] sm:$0xf]
      %v3141 = vld [vmem:[%s3137 + $0xc] sm:$0xf]
      %v3142 = vunpack.c.l.b16 %v3112
      %v3143 = vunpack.c.l.b16 %v3116
      %v3144 = vunpack.c.l.b16 %v3120
      %v3145 = vunpack.c.l.b16 %v3124
      %v3146 = vunpack.c.l.b16 %v3128
      %v3147 = vunpack.c.l.b16 %v3132
      %v3148 = vunpack.c.l.b16 %v3136
      %v3149 = vpack.c.b16 %v3143, %v3142
      %v3150 = vpack.c.b16 %v3145, %v3144
      %v3151 = vpack.c.b16 %v3147, %v3146
      %v3152 = vpack.c.b16 %v3148, %v3148
      %v3157 = vunpack.c.l.b16 %v3138
      %v3158 = vunpack.c.l.b16 %v3139
      %v3159 = vunpack.c.l.b16 %v3140
      %v3160 = vunpack.c.l.b16 %v3141
      %v3161 = vpack.c.b16 %v3158, %v3157
      %v3162 = vpack.c.b16 %v3160, %v3159
      %v3166 = vsel %vm465, %v3149, 0
      %v3169 = vsel %vm465, %v3150, 0
      %v3172 = vsel %vm465, %v3151, 0
      %v3175 = vsel %vm465, %v3152, 0
      %3177 = vmatprep.subr.bf16.mxu0 0
      %3178 = vmatpush1.bf16.msra.mxu0 %v3161
      %3179 = vmatprep.subr.bf16.mxu0 0
      %3180 = vmatpush1.bf16.msra.mxu0 %v3162
      %3181 = vmatprep.subr.bf16.mxu0 0
      %3182 = vmatpush1.bf16.msra.mxu0 0
      %3183 = vmatprep.subr.bf16.mxu0 0
      %3184 = vmatpush1.bf16.msra.mxu0 0
      %3185 = vmatprep.subr.bf16.mxu0 0
      %3186 = vmatpush1.bf16.msra.mxu0 0
      %3187 = vmatprep.subr.bf16.mxu0 0
      %3188 = vmatpush1.bf16.msra.mxu0 0
      %3189 = vmatprep.subr.bf16.mxu0 0
      %3190 = vmatpush1.bf16.msra.mxu0 0
      %3191 = vmatprep.subr.bf16.mxu0 0
      %3192 = vmatpush1.bf16.msra.mxu0 0
      %3193 = vmatprep.subr.bf16.mxu0 0
      %3194 = vmatpush1.bf16.msra.mxu0 0
      %3195 = vmatprep.subr.bf16.mxu0 0
      %3196 = vmatpush1.bf16.msra.mxu0 0
      %3197 = vmatprep.subr.bf16.mxu0 0
      %3198 = vmatpush1.bf16.msra.mxu0 0
      %3199 = vmatprep.subr.bf16.mxu0 0
      %3200 = vmatpush1.bf16.msra.mxu0 0
      %3201 = vmatprep.subr.bf16.mxu0 0
      %3202 = vmatpush1.bf16.msra.mxu0 0
      %3203 = vmatprep.subr.bf16.mxu0 0
      %3204 = vmatpush1.bf16.msra.mxu0 0
      %3205 = vmatprep.subr.bf16.mxu0 0
      %3206 = vmatpush1.bf16.msra.mxu0 0
      %3207 = vmatprep.subr.bf16.mxu0 0
      %3208 = vmatpush1.bf16.msra.mxu0 0
      %3209 = vmatprep.mubr.bf16.mxu0 0
      %3210 = vmatmul.mubr.bf16.gmra.mrb[0].mxu0 %v3166
      %v3211 = vpop.f32.mrb[0].mxu0
      %v3212 = vadd.f32 0.0, %v3211
      %v3213 = vpop.f32.mrb[0].mxu0
      %v3214 = vpop.f32.mrb[0].mxu0
      %v3215 = vadd.f32 0.0, %v3214
      %v3216 = vpop.f32.mrb[0].mxu0
      %3217 = vmatprep.mubr.bf16.mxu0 0
      %3218 = vmatmul.mubr.bf16.gmra.mrb[0].mxu0 %v3169
      %v3219 = vpop.f32.mrb[0].mxu0
      %v3220 = vadd.f32 0.0, %v3219
      %v3221 = vpop.f32.mrb[0].mxu0
      %v3222 = vpop.f32.mrb[0].mxu0
      %v3223 = vadd.f32 0.0, %v3222
      %v3224 = vpop.f32.mrb[0].mxu0
      %3225 = vmatprep.mubr.bf16.mxu0 0
      %3226 = vmatmul.mubr.bf16.gmra.mrb[0].mxu0 %v3172
      %v3227 = vpop.f32.mrb[0].mxu0
      %v3228 = vadd.f32 0.0, %v3227
      %v3229 = vpop.f32.mrb[0].mxu0
      %v3230 = vpop.f32.mrb[0].mxu0
      %v3231 = vadd.f32 0.0, %v3230
      %v3232 = vpop.f32.mrb[0].mxu0
      %3233 = vmatprep.mubr.bf16.mxu0 0
      %3234 = vmatmul.mubr.bf16.gmra.mrb[0].mxu0 %v3175
      %v3235 = vpop.f32.mrb[0].mxu0
      %v3236 = vadd.f32 0.0, %v3235
      %v3237 = vpop.f32.mrb[0].mxu0
      %v3238 = vpop.f32.mrb[0].mxu0
      %v3239 = vpop.f32.mrb[0].mxu0
      %3240 = vdwg.mxu0
      %v3241 = vadd.f32 %v3081, %v3212
      %v3242 = vadd.f32 %v3082, %v3215
      %v3243 = vadd.f32 %v3083, %v3220
      %v3244 = vadd.f32 %v3084, %v3223
      %v3245 = vadd.f32 %v3085, %v3228
      %v3246 = vadd.f32 %v3086, %v3231
      %v3247 = vadd.f32 %v3087, %v3236
      %v3248 = vld [vmem:[%s2864 + $0x4] sm:$0x3]
      %v3249 = vld [vmem:[%s2864 + $0xc] sm:$0x3]
      %v3250 = vld [vmem:[%s2864 + $0x14] sm:$0x3]
      %v3251 = vld [vmem:[%s2864 + $0x1c] sm:$0x3]
      %v3252 = vld [vmem:[%s2864 + $0x24] sm:$0x3]
      %v3253 = vld [vmem:[%s2864 + $0x2c] sm:$0x3]
      %v3254 = vld [vmem:[%s2864 + $0x34] sm:$0x3]
      %v3256 = vshrl.u32 %v3088, 16
      %v3258 = vrot.slane %v3256, 5
      %v3259 = vshll.u32 %v3088, 16
      %v3261 = vrot.slane %v3259, 6
      %v3262 = vor.u32 %v3258, %v3261
      %v3263 = vrot.slane %v3262, 4
      %v3265 = vshrl.u32 %v3248, 16
      %v3267 = vrot.slane %v3265, 5
      %v3268 = vshll.u32 %v3248, 16
      %v3270 = vrot.slane %v3268, 6
      %v3271 = vor.u32 %v3267, %v3270
      %v3272 = vsel %vm2203, %v3263, %v3271
      %v3274 = vshrl.u32 %v3089, 16
      %v3276 = vrot.slane %v3274, 5
      %v3277 = vshll.u32 %v3089, 16
      %v3279 = vrot.slane %v3277, 6
      %v3280 = vor.u32 %v3276, %v3279
      %v3281 = vrot.slane %v3280, 4
      %v3283 = vshrl.u32 %v3249, 16
      %v3285 = vrot.slane %v3283, 5
      %v3286 = vshll.u32 %v3249, 16
      %v3288 = vrot.slane %v3286, 6
      %v3289 = vor.u32 %v3285, %v3288
      %v3290 = vsel %vm2203, %v3281, %v3289
      %v3292 = vshrl.u32 %v3090, 16
      %v3294 = vrot.slane %v3292, 5
      %v3295 = vshll.u32 %v3090, 16
      %v3297 = vrot.slane %v3295, 6
      %v3298 = vor.u32 %v3294, %v3297
      %v3299 = vrot.slane %v3298, 4
      %v3301 = vshrl.u32 %v3250, 16
      %v3303 = vrot.slane %v3301, 5
      %v3304 = vshll.u32 %v3250, 16
      %v3306 = vrot.slane %v3304, 6
      %v3307 = vor.u32 %v3303, %v3306
      %v3308 = vsel %vm2203, %v3299, %v3307
      %v3310 = vshrl.u32 %v3091, 16
      %v3312 = vrot.slane %v3310, 5
      %v3313 = vshll.u32 %v3091, 16
      %v3315 = vrot.slane %v3313, 6
      %v3316 = vor.u32 %v3312, %v3315
      %v3317 = vrot.slane %v3316, 4
      %v3319 = vshrl.u32 %v3251, 16
      %v3321 = vrot.slane %v3319, 5
      %v3322 = vshll.u32 %v3251, 16
      %v3324 = vrot.slane %v3322, 6
      %v3325 = vor.u32 %v3321, %v3324
      %v3326 = vsel %vm2203, %v3317, %v3325
      %v3328 = vshrl.u32 %v3092, 16
      %v3330 = vrot.slane %v3328, 5
      %v3331 = vshll.u32 %v3092, 16
      %v3333 = vrot.slane %v3331, 6
      %v3334 = vor.u32 %v3330, %v3333
      %v3335 = vrot.slane %v3334, 4
      %v3337 = vshrl.u32 %v3252, 16
      %v3339 = vrot.slane %v3337, 5
      %v3340 = vshll.u32 %v3252, 16
      %v3342 = vrot.slane %v3340, 6
      %v3343 = vor.u32 %v3339, %v3342
      %v3344 = vsel %vm2203, %v3335, %v3343
      %v3346 = vshrl.u32 %v3093, 16
      %v3348 = vrot.slane %v3346, 5
      %v3349 = vshll.u32 %v3093, 16
      %v3351 = vrot.slane %v3349, 6
      %v3352 = vor.u32 %v3348, %v3351
      %v3353 = vrot.slane %v3352, 4
      %v3355 = vshrl.u32 %v3253, 16
      %v3357 = vrot.slane %v3355, 5
      %v3358 = vshll.u32 %v3253, 16
      %v3360 = vrot.slane %v3358, 6
      %v3361 = vor.u32 %v3357, %v3360
      %v3362 = vsel %vm2203, %v3353, %v3361
      %v3364 = vshrl.u32 %v3094, 16
      %v3366 = vrot.slane %v3364, 5
      %v3367 = vshll.u32 %v3094, 16
      %v3369 = vrot.slane %v3367, 6
      %v3370 = vor.u32 %v3366, %v3369
      %v3371 = vrot.slane %v3370, 4
      %v3373 = vshrl.u32 %v3254, 16
      %v3375 = vrot.slane %v3373, 5
      %v3376 = vshll.u32 %v3254, 16
      %v3378 = vrot.slane %v3376, 6
      %v3379 = vor.u32 %v3375, %v3378
      %v3380 = vsel %vm2203, %v3371, %v3379
      %s3381 = scalar_lea.vmem %s1, 272
      %v3382 = vld [vmem:[%s3381] sm:$0xf]
      %v3383 = vld [vmem:[%s3381 + $0x4] sm:$0xf]
      %v3384 = vld [vmem:[%s3381 + $0x8] sm:$0xf]
      %v3385 = vld [vmem:[%s3381 + $0xc] sm:$0xf]
      %v3386 = vunpack.c.l.b16 %v3272
      %v3387 = vunpack.c.l.b16 %v3290
      %v3388 = vunpack.c.l.b16 %v3308
      %v3389 = vunpack.c.l.b16 %v3326
      %v3390 = vunpack.c.l.b16 %v3344
      %v3391 = vunpack.c.l.b16 %v3362
      %v3392 = vunpack.c.l.b16 %v3380
      %v3393 = vpack.c.b16 %v3387, %v3386
      %v3394 = vpack.c.b16 %v3389, %v3388
      %v3395 = vpack.c.b16 %v3391, %v3390
      %v3396 = vpack.c.b16 %v3392, %v3392
      %v3401 = vunpack.c.l.b16 %v3382
      %v3402 = vunpack.c.l.b16 %v3383
      %v3403 = vunpack.c.l.b16 %v3384
      %v3404 = vunpack.c.l.b16 %v3385
      %v3405 = vpack.c.b16 %v3402, %v3401
      %v3406 = vpack.c.b16 %v3404, %v3403
      %v3410 = vsel %vm465, %v3393, 0
      %v3413 = vsel %vm465, %v3394, 0
      %v3416 = vsel %vm465, %v3395, 0
      %v3419 = vsel %vm465, %v3396, 0
      %3421 = vmatprep.subr.bf16.mxu0 0
      %3422 = vmatpush1.bf16.msra.mxu0 %v3405
      %3423 = vmatprep.subr.bf16.mxu0 0
      %3424 = vmatpush1.bf16.msra.mxu0 %v3406
      %3425 = vmatprep.subr.bf16.mxu0 0
      %3426 = vmatpush1.bf16.msra.mxu0 0
      %3427 = vmatprep.subr.bf16.mxu0 0
      %3428 = vmatpush1.bf16.msra.mxu0 0
      %3429 = vmatprep.subr.bf16.mxu0 0
      %3430 = vmatpush1.bf16.msra.mxu0 0
      %3431 = vmatprep.subr.bf16.mxu0 0
      %3432 = vmatpush1.bf16.msra.mxu0 0
      %3433 = vmatprep.subr.bf16.mxu0 0
      %3434 = vmatpush1.bf16.msra.mxu0 0
      %3435 = vmatprep.subr.bf16.mxu0 0
      %3436 = vmatpush1.bf16.msra.mxu0 0
      %3437 = vmatprep.subr.bf16.mxu0 0
      %3438 = vmatpush1.bf16.msra.mxu0 0
      %3439 = vmatprep.subr.bf16.mxu0 0
      %3440 = vmatpush1.bf16.msra.mxu0 0
      %3441 = vmatprep.subr.bf16.mxu0 0
      %3442 = vmatpush1.bf16.msra.mxu0 0
      %3443 = vmatprep.subr.bf16.mxu0 0
      %3444 = vmatpush1.bf16.msra.mxu0 0
      %3445 = vmatprep.subr.bf16.mxu0 0
      %3446 = vmatpush1.bf16.msra.mxu0 0
      %3447 = vmatprep.subr.bf16.mxu0 0
      %3448 = vmatpush1.bf16.msra.mxu0 0
      %3449 = vmatprep.subr.bf16.mxu0 0
      %3450 = vmatpush1.bf16.msra.mxu0 0
      %3451 = vmatprep.subr.bf16.mxu0 0
      %3452 = vmatpush1.bf16.msra.mxu0 0
      %3453 = vmatprep.mubr.bf16.mxu0 0
      %3454 = vmatmul.mubr.bf16.gmra.mrb[0].mxu0 %v3410
      %v3455 = vpop.f32.mrb[0].mxu0
      %v3456 = vadd.f32 0.0, %v3455
      %v3457 = vpop.f32.mrb[0].mxu0
      %v3458 = vpop.f32.mrb[0].mxu0
      %v3459 = vadd.f32 0.0, %v3458
      %v3460 = vpop.f32.mrb[0].mxu0
      %3461 = vmatprep.mubr.bf16.mxu0 0
      %3462 = vmatmul.mubr.bf16.gmra.mrb[0].mxu0 %v3413
      %v3463 = vpop.f32.mrb[0].mxu0
      %v3464 = vadd.f32 0.0, %v3463
      %v3465 = vpop.f32.mrb[0].mxu0
      %v3466 = vpop.f32.mrb[0].mxu0
      %v3467 = vadd.f32 0.0, %v3466
      %v3468 = vpop.f32.mrb[0].mxu0
      %3469 = vmatprep.mubr.bf16.mxu0 0
      %3470 = vmatmul.mubr.bf16.gmra.mrb[0].mxu0 %v3416
      %v3471 = vpop.f32.mrb[0].mxu0
      %v3472 = vadd.f32 0.0, %v3471
      %v3473 = vpop.f32.mrb[0].mxu0
      %v3474 = vpop.f32.mrb[0].mxu0
      %v3475 = vadd.f32 0.0, %v3474
      %v3476 = vpop.f32.mrb[0].mxu0
      %3477 = vmatprep.mubr.bf16.mxu0 0
      %3478 = vmatmul.mubr.bf16.gmra.mrb[0].mxu0 %v3419
      %v3479 = vpop.f32.mrb[0].mxu0
      %v3480 = vadd.f32 0.0, %v3479
      %v3481 = vpop.f32.mrb[0].mxu0
      %v3482 = vpop.f32.mrb[0].mxu0
      %v3483 = vpop.f32.mrb[0].mxu0
      %3484 = vdwg.mxu0
      %v3485 = vadd.f32 %v3241, %v3456
      %v3486 = vadd.f32 %v3242, %v3459
      %v3487 = vadd.f32 %v3243, %v3464
      %v3488 = vadd.f32 %v3244, %v3467
      %v3489 = vadd.f32 %v3245, %v3472
      %v3490 = vadd.f32 %v3246, %v3475
      %v3491 = vadd.f32 %v3247, %v3480
      %s3492 = sadd.s32 %s197, 33
      %s3493 = smul.u32 %s3492, 2
      %s3494 = smul.addr %s3493, 4
      %s3495 = scalar_lea.vmem %s184, %s3494
      %v3496 = vld [vmem:[%s3495] sm:$0xf]
      %v3497 = vld [vmem:[%s3495 + $0x8] sm:$0xf]
      %v3498 = vld [vmem:[%s3495 + $0x10] sm:$0xf]
      %v3499 = vld [vmem:[%s3495 + $0x18] sm:$0xf]
      %v3500 = vld [vmem:[%s3495 + $0x20] sm:$0xf]
      %v3501 = vld [vmem:[%s3495 + $0x28] sm:$0xf]
      %v3502 = vld [vmem:[%s3495 + $0x30] sm:$0xf]
      %s3503 = scalar_lea.vmem %s1, 288
      %v3504 = vld [vmem:[%s3503] sm:$0xf]
      %v3505 = vld [vmem:[%s3503 + $0x4] sm:$0xf]
      %v3506 = vld [vmem:[%s3503 + $0x8] sm:$0xf]
      %v3507 = vld [vmem:[%s3503 + $0xc] sm:$0xf]
      %s3508 = sadd.s32 %s197, 22
      %s3509 = smul.u32 %s3508, 2
      %s3510 = smul.addr %s3509, 4
      %s3511 = scalar_lea.vmem %s184, %s3510
      %v3512 = vld [vmem:[%s3511] sm:$0xe]
      %v3513 = vld [vmem:[%s3511 + $0x4] sm:$0x1]
      %v3514 = vld [vmem:[%s3511 + $0x8] sm:$0xe]
      %v3515 = vld [vmem:[%s3511 + $0xc] sm:$0x1]
      %v3516 = vld [vmem:[%s3511 + $0x10] sm:$0xe]
      %v3517 = vld [vmem:[%s3511 + $0x14] sm:$0x1]
      %v3518 = vld [vmem:[%s3511 + $0x18] sm:$0xe]
      %v3519 = vld [vmem:[%s3511 + $0x1c] sm:$0x1]
      %v3520 = vld [vmem:[%s3511 + $0x20] sm:$0xe]
      %v3521 = vld [vmem:[%s3511 + $0x24] sm:$0x1]
      %v3522 = vld [vmem:[%s3511 + $0x28] sm:$0xe]
      %v3523 = vld [vmem:[%s3511 + $0x2c] sm:$0x1]
      %v3524 = vld [vmem:[%s3511 + $0x30] sm:$0xe]
      %v3525 = vld [vmem:[%s3511 + $0x34] sm:$0x1]
      %v3540 = vrot.slane %v3512, 5
      %v3541 = vrot.slane %v3540, 4
      %v3542 = vrot.slane %v3513, 5
      %v3543 = vsel %vm664, %v3541, %v3542
      %v3544 = vrot.slane %v3514, 5
      %v3545 = vrot.slane %v3544, 4
      %v3546 = vrot.slane %v3515, 5
      %v3547 = vsel %vm664, %v3545, %v3546
      %v3548 = vrot.slane %v3516, 5
      %v3549 = vrot.slane %v3548, 4
      %v3550 = vrot.slane %v3517, 5
      %v3551 = vsel %vm664, %v3549, %v3550
      %v3552 = vrot.slane %v3518, 5
      %v3553 = vrot.slane %v3552, 4
      %v3554 = vrot.slane %v3519, 5
      %v3555 = vsel %vm664, %v3553, %v3554
      %v3556 = vrot.slane %v3520, 5
      %v3557 = vrot.slane %v3556, 4
      %v3558 = vrot.slane %v3521, 5
      %v3559 = vsel %vm664, %v3557, %v3558
      %v3560 = vrot.slane %v3522, 5
      %v3561 = vrot.slane %v3560, 4
      %v3562 = vrot.slane %v3523, 5
      %v3563 = vsel %vm664, %v3561, %v3562
      %v3564 = vrot.slane %v3524, 5
      %v3565 = vrot.slane %v3564, 4
      %v3566 = vrot.slane %v3525, 5
      %v3567 = vsel %vm664, %v3565, %v3566
      %s3568 = scalar_lea.vmem %s1, 304
      %v3569 = vld [vmem:[%s3568] sm:$0xf]
      %v3570 = vld [vmem:[%s3568 + $0x4] sm:$0xf]
      %v3571 = vld [vmem:[%s3568 + $0x8] sm:$0xf]
      %v3572 = vld [vmem:[%s3568 + $0xc] sm:$0xf]
      %v3573 = vunpack.c.l.b16 %v3543
      %v3574 = vunpack.c.l.b16 %v3547
      %v3575 = vunpack.c.l.b16 %v3551
      %v3576 = vunpack.c.l.b16 %v3555
      %v3577 = vunpack.c.l.b16 %v3559
      %v3578 = vunpack.c.l.b16 %v3563
      %v3579 = vunpack.c.l.b16 %v3567
      %v3580 = vpack.c.b16 %v3574, %v3573
      %v3581 = vpack.c.b16 %v3576, %v3575
      %v3582 = vpack.c.b16 %v3578, %v3577
      %v3583 = vpack.c.b16 %v3579, %v3579
      %v3588 = vunpack.c.l.b16 %v3569
      %v3589 = vunpack.c.l.b16 %v3570
      %v3590 = vunpack.c.l.b16 %v3571
      %v3591 = vunpack.c.l.b16 %v3572
      %v3592 = vpack.c.b16 %v3589, %v3588
      %v3593 = vpack.c.b16 %v3591, %v3590
      %v3597 = vsel %vm465, %v3580, 0
      %v3600 = vsel %vm465, %v3581, 0
      %v3603 = vsel %vm465, %v3582, 0
      %v3606 = vsel %vm465, %v3583, 0
      %3608 = vmatprep.subr.bf16.mxu0 0
      %3609 = vmatpush1.bf16.msra.mxu0 %v3592
      %3610 = vmatprep.subr.bf16.mxu0 0
      %3611 = vmatpush1.bf16.msra.mxu0 %v3593
      %3612 = vmatprep.subr.bf16.mxu0 0
      %3613 = vmatpush1.bf16.msra.mxu0 0
      %3614 = vmatprep.subr.bf16.mxu0 0
      %3615 = vmatpush1.bf16.msra.mxu0 0
      %3616 = vmatprep.subr.bf16.mxu0 0
      %3617 = vmatpush1.bf16.msra.mxu0 0
      %3618 = vmatprep.subr.bf16.mxu0 0
      %3619 = vmatpush1.bf16.msra.mxu0 0
      %3620 = vmatprep.subr.bf16.mxu0 0
      %3621 = vmatpush1.bf16.msra.mxu0 0
      %3622 = vmatprep.subr.bf16.mxu0 0
      %3623 = vmatpush1.bf16.msra.mxu0 0
      %3624 = vmatprep.subr.bf16.mxu0 0
      %3625 = vmatpush1.bf16.msra.mxu0 0
      %3626 = vmatprep.subr.bf16.mxu0 0
      %3627 = vmatpush1.bf16.msra.mxu0 0
      %3628 = vmatprep.subr.bf16.mxu0 0
      %3629 = vmatpush1.bf16.msra.mxu0 0
      %3630 = vmatprep.subr.bf16.mxu0 0
      %3631 = vmatpush1.bf16.msra.mxu0 0
      %3632 = vmatprep.subr.bf16.mxu0 0
      %3633 = vmatpush1.bf16.msra.mxu0 0
      %3634 = vmatprep.subr.bf16.mxu0 0
      %3635 = vmatpush1.bf16.msra.mxu0 0
      %3636 = vmatprep.subr.bf16.mxu0 0
      %3637 = vmatpush1.bf16.msra.mxu0 0
      %3638 = vmatprep.subr.bf16.mxu0 0
      %3639 = vmatpush1.bf16.msra.mxu0 0
      %3640 = vmatprep.mubr.bf16.mxu0 0
      %3641 = vmatmul.mubr.bf16.gmra.mrb[0].mxu0 %v3597
      %v3642 = vpop.f32.mrb[0].mxu0
      %v3643 = vadd.f32 0.0, %v3642
      %v3644 = vpop.f32.mrb[0].mxu0
      %v3645 = vpop.f32.mrb[0].mxu0
      %v3646 = vadd.f32 0.0, %v3645
      %v3647 = vpop.f32.mrb[0].mxu0
      %3648 = vmatprep.mubr.bf16.mxu0 0
      %3649 = vmatmul.mubr.bf16.gmra.mrb[0].mxu0 %v3600
      %v3650 = vpop.f32.mrb[0].mxu0
      %v3651 = vadd.f32 0.0, %v3650
      %v3652 = vpop.f32.mrb[0].mxu0
      %v3653 = vpop.f32.mrb[0].mxu0
      %v3654 = vadd.f32 0.0, %v3653
      %v3655 = vpop.f32.mrb[0].mxu0
      %3656 = vmatprep.mubr.bf16.mxu0 0
      %3657 = vmatmul.mubr.bf16.gmra.mrb[0].mxu0 %v3603
      %v3658 = vpop.f32.mrb[0].mxu0
      %v3659 = vadd.f32 0.0, %v3658
      %v3660 = vpop.f32.mrb[0].mxu0
      %v3661 = vpop.f32.mrb[0].mxu0
      %v3662 = vadd.f32 0.0, %v3661
      %v3663 = vpop.f32.mrb[0].mxu0
      %3664 = vmatprep.mubr.bf16.mxu0 0
      %3665 = vmatmul.mubr.bf16.gmra.mrb[0].mxu0 %v3606
      %v3666 = vpop.f32.mrb[0].mxu0
      %v3667 = vadd.f32 0.0, %v3666
      %v3668 = vpop.f32.mrb[0].mxu0
      %v3669 = vpop.f32.mrb[0].mxu0
      %v3670 = vpop.f32.mrb[0].mxu0
      %3671 = vdwg.mxu0
      %v3679 = vunpack.c.l.b16 %v3496
      %v3680 = vunpack.c.l.b16 %v3497
      %v3681 = vunpack.c.l.b16 %v3498
      %v3682 = vunpack.c.l.b16 %v3499
      %v3683 = vunpack.c.l.b16 %v3500
      %v3684 = vunpack.c.l.b16 %v3501
      %v3685 = vunpack.c.l.b16 %v3502
      %v3686 = vpack.c.b16 %v3680, %v3679
      %v3687 = vpack.c.b16 %v3682, %v3681
      %v3688 = vpack.c.b16 %v3684, %v3683
      %v3689 = vpack.c.b16 %v3685, %v3685
      %v3694 = vunpack.c.l.b16 %v3504
      %v3695 = vunpack.c.l.b16 %v3505
      %v3696 = vunpack.c.l.b16 %v3506
      %v3697 = vunpack.c.l.b16 %v3507
      %v3698 = vpack.c.b16 %v3695, %v3694
      %v3699 = vpack.c.b16 %v3697, %v3696
      %v3703 = vsel %vm465, %v3686, 0
      %v3706 = vsel %vm465, %v3687, 0
      %v3709 = vsel %vm465, %v3688, 0
      %v3712 = vsel %vm465, %v3689, 0
      %3714 = vmatprep.subr.bf16.mxu0 0
      %3715 = vmatpush1.bf16.msra.mxu0 %v3698
      %3716 = vmatprep.subr.bf16.mxu0 0
      %3717 = vmatpush1.bf16.msra.mxu0 %v3699
      %3718 = vmatprep.subr.bf16.mxu0 0
      %3719 = vmatpush1.bf16.msra.mxu0 0
      %3720 = vmatprep.subr.bf16.mxu0 0
      %3721 = vmatpush1.bf16.msra.mxu0 0
      %3722 = vmatprep.subr.bf16.mxu0 0
      %3723 = vmatpush1.bf16.msra.mxu0 0
      %3724 = vmatprep.subr.bf16.mxu0 0
      %3725 = vmatpush1.bf16.msra.mxu0 0
      %3726 = vmatprep.subr.bf16.mxu0 0
      %3727 = vmatpush1.bf16.msra.mxu0 0
      %3728 = vmatprep.subr.bf16.mxu0 0
      %3729 = vmatpush1.bf16.msra.mxu0 0
      %3730 = vmatprep.subr.bf16.mxu0 0
      %3731 = vmatpush1.bf16.msra.mxu0 0
      %3732 = vmatprep.subr.bf16.mxu0 0
      %3733 = vmatpush1.bf16.msra.mxu0 0
      %3734 = vmatprep.subr.bf16.mxu0 0
      %3735 = vmatpush1.bf16.msra.mxu0 0
      %3736 = vmatprep.subr.bf16.mxu0 0
      %3737 = vmatpush1.bf16.msra.mxu0 0
      %3738 = vmatprep.subr.bf16.mxu0 0
      %3739 = vmatpush1.bf16.msra.mxu0 0
      %3740 = vmatprep.subr.bf16.mxu0 0
      %3741 = vmatpush1.bf16.msra.mxu0 0
      %3742 = vmatprep.subr.bf16.mxu0 0
      %3743 = vmatpush1.bf16.msra.mxu0 0
      %3744 = vmatprep.subr.bf16.mxu0 0
      %3745 = vmatpush1.bf16.msra.mxu0 0
      %3746 = vmatprep.mubr.bf16.mxu0 0
      %3747 = vmatmul.mubr.bf16.gmra.mrb[0].mxu0 %v3703
      %v3748 = vpop.f32.mrb[0].mxu0
      %v3749 = vadd.f32 %v3643, %v3748
      %v3750 = vpop.f32.mrb[0].mxu0
      %v3751 = vpop.f32.mrb[0].mxu0
      %v3752 = vadd.f32 %v3646, %v3751
      %v3753 = vpop.f32.mrb[0].mxu0
      %3754 = vmatprep.mubr.bf16.mxu0 0
      %3755 = vmatmul.mubr.bf16.gmra.mrb[0].mxu0 %v3706
      %v3756 = vpop.f32.mrb[0].mxu0
      %v3757 = vadd.f32 %v3651, %v3756
      %v3758 = vpop.f32.mrb[0].mxu0
      %v3759 = vpop.f32.mrb[0].mxu0
      %v3760 = vadd.f32 %v3654, %v3759
      %v3761 = vpop.f32.mrb[0].mxu0
      %3762 = vmatprep.mubr.bf16.mxu0 0
      %3763 = vmatmul.mubr.bf16.gmra.mrb[0].mxu0 %v3709
      %v3764 = vpop.f32.mrb[0].mxu0
      %v3765 = vadd.f32 %v3659, %v3764
      %v3766 = vpop.f32.mrb[0].mxu0
      %v3767 = vpop.f32.mrb[0].mxu0
      %v3768 = vadd.f32 %v3662, %v3767
      %v3769 = vpop.f32.mrb[0].mxu0
      %3770 = vmatprep.mubr.bf16.mxu0 0
      %3771 = vmatmul.mubr.bf16.gmra.mrb[0].mxu0 %v3712
      %v3772 = vpop.f32.mrb[0].mxu0
      %v3773 = vadd.f32 %v3667, %v3772
      %v3774 = vpop.f32.mrb[0].mxu0
      %v3775 = vpop.f32.mrb[0].mxu0
      %v3776 = vpop.f32.mrb[0].mxu0
      %3777 = vdwg.mxu0
      %v3778 = vld [vmem:[%s3495] sm:$0xe]
      %v3779 = vld [vmem:[%s3495 + $0x4] sm:$0x3]
      %v3780 = vld [vmem:[%s3495 + $0x8] sm:$0xe]
      %v3781 = vld [vmem:[%s3495 + $0xc] sm:$0x3]
      %v3782 = vld [vmem:[%s3495 + $0x10] sm:$0xe]
      %v3783 = vld [vmem:[%s3495 + $0x14] sm:$0x3]
      %v3784 = vld [vmem:[%s3495 + $0x18] sm:$0xe]
      %v3785 = vld [vmem:[%s3495 + $0x1c] sm:$0x3]
      %v3786 = vld [vmem:[%s3495 + $0x20] sm:$0xe]
      %v3787 = vld [vmem:[%s3495 + $0x24] sm:$0x3]
      %v3788 = vld [vmem:[%s3495 + $0x28] sm:$0xe]
      %v3789 = vld [vmem:[%s3495 + $0x2c] sm:$0x3]
      %v3790 = vld [vmem:[%s3495 + $0x30] sm:$0xe]
      %v3791 = vld [vmem:[%s3495 + $0x34] sm:$0x3]
      %v3793 = vshrl.u32 %v3778, 16
      %v3795 = vrot.slane %v3793, 5
      %v3796 = vshll.u32 %v3778, 16
      %v3798 = vrot.slane %v3796, 6
      %v3799 = vor.u32 %v3795, %v3798
      %v3800 = vrot.slane %v3799, 4
      %v3802 = vshrl.u32 %v3779, 16
      %v3804 = vrot.slane %v3802, 5
      %v3805 = vshll.u32 %v3779, 16
      %v3807 = vrot.slane %v3805, 6
      %v3808 = vor.u32 %v3804, %v3807
      %v3809 = vsel %vm2203, %v3800, %v3808
      %v3811 = vshrl.u32 %v3780, 16
      %v3813 = vrot.slane %v3811, 5
      %v3814 = vshll.u32 %v3780, 16
      %v3816 = vrot.slane %v3814, 6
      %v3817 = vor.u32 %v3813, %v3816
      %v3818 = vrot.slane %v3817, 4
      %v3820 = vshrl.u32 %v3781, 16
      %v3822 = vrot.slane %v3820, 5
      %v3823 = vshll.u32 %v3781, 16
      %v3825 = vrot.slane %v3823, 6
      %v3826 = vor.u32 %v3822, %v3825
      %v3827 = vsel %vm2203, %v3818, %v3826
      %v3829 = vshrl.u32 %v3782, 16
      %v3831 = vrot.slane %v3829, 5
      %v3832 = vshll.u32 %v3782, 16
      %v3834 = vrot.slane %v3832, 6
      %v3835 = vor.u32 %v3831, %v3834
      %v3836 = vrot.slane %v3835, 4
      %v3838 = vshrl.u32 %v3783, 16
      %v3840 = vrot.slane %v3838, 5
      %v3841 = vshll.u32 %v3783, 16
      %v3843 = vrot.slane %v3841, 6
      %v3844 = vor.u32 %v3840, %v3843
      %v3845 = vsel %vm2203, %v3836, %v3844
      %v3847 = vshrl.u32 %v3784, 16
      %v3849 = vrot.slane %v3847, 5
      %v3850 = vshll.u32 %v3784, 16
      %v3852 = vrot.slane %v3850, 6
      %v3853 = vor.u32 %v3849, %v3852
      %v3854 = vrot.slane %v3853, 4
      %v3856 = vshrl.u32 %v3785, 16
      %v3858 = vrot.slane %v3856, 5
      %v3859 = vshll.u32 %v3785, 16
      %v3861 = vrot.slane %v3859, 6
      %v3862 = vor.u32 %v3858, %v3861
      %v3863 = vsel %vm2203, %v3854, %v3862
      %v3865 = vshrl.u32 %v3786, 16
      %v3867 = vrot.slane %v3865, 5
      %v3868 = vshll.u32 %v3786, 16
      %v3870 = vrot.slane %v3868, 6
      %v3871 = vor.u32 %v3867, %v3870
      %v3872 = vrot.slane %v3871, 4
      %v3874 = vshrl.u32 %v3787, 16
      %v3876 = vrot.slane %v3874, 5
      %v3877 = vshll.u32 %v3787, 16
      %v3879 = vrot.slane %v3877, 6
      %v3880 = vor.u32 %v3876, %v3879
      %v3881 = vsel %vm2203, %v3872, %v3880
      %v3883 = vshrl.u32 %v3788, 16
      %v3885 = vrot.slane %v3883, 5
      %v3886 = vshll.u32 %v3788, 16
      %v3888 = vrot.slane %v3886, 6
      %v3889 = vor.u32 %v3885, %v3888
      %v3890 = vrot.slane %v3889, 4
      %v3892 = vshrl.u32 %v3789, 16
      %v3894 = vrot.slane %v3892, 5
      %v3895 = vshll.u32 %v3789, 16
      %v3897 = vrot.slane %v3895, 6
      %v3898 = vor.u32 %v3894, %v3897
      %v3899 = vsel %vm2203, %v3890, %v3898
      %v3901 = vshrl.u32 %v3790, 16
      %v3903 = vrot.slane %v3901, 5
      %v3904 = vshll.u32 %v3790, 16
      %v3906 = vrot.slane %v3904, 6
      %v3907 = vor.u32 %v3903, %v3906
      %v3908 = vrot.slane %v3907, 4
      %v3910 = vshrl.u32 %v3791, 16
      %v3912 = vrot.slane %v3910, 5
      %v3913 = vshll.u32 %v3791, 16
      %v3915 = vrot.slane %v3913, 6
      %v3916 = vor.u32 %v3912, %v3915
      %v3917 = vsel %vm2203, %v3908, %v3916
      %s3918 = scalar_lea.vmem %s1, 320
      %v3919 = vld [vmem:[%s3918] sm:$0xf]
      %v3920 = vld [vmem:[%s3918 + $0x4] sm:$0xf]
      %v3921 = vld [vmem:[%s3918 + $0x8] sm:$0xf]
      %v3922 = vld [vmem:[%s3918 + $0xc] sm:$0xf]
      %v3923 = vunpack.c.l.b16 %v3809
      %v3924 = vunpack.c.l.b16 %v3827
      %v3925 = vunpack.c.l.b16 %v3845
      %v3926 = vunpack.c.l.b16 %v3863
      %v3927 = vunpack.c.l.b16 %v3881
      %v3928 = vunpack.c.l.b16 %v3899
      %v3929 = vunpack.c.l.b16 %v3917
      %v3930 = vpack.c.b16 %v3924, %v3923
      %v3931 = vpack.c.b16 %v3926, %v3925
      %v3932 = vpack.c.b16 %v3928, %v3927
      %v3933 = vpack.c.b16 %v3929, %v3929
      %v3938 = vunpack.c.l.b16 %v3919
      %v3939 = vunpack.c.l.b16 %v3920
      %v3940 = vunpack.c.l.b16 %v3921
      %v3941 = vunpack.c.l.b16 %v3922
      %v3942 = vpack.c.b16 %v3939, %v3938
      %v3943 = vpack.c.b16 %v3941, %v3940
      %v3947 = vsel %vm465, %v3930, 0
      %v3950 = vsel %vm465, %v3931, 0
      %v3953 = vsel %vm465, %v3932, 0
      %v3956 = vsel %vm465, %v3933, 0
      %3958 = vmatprep.subr.bf16.mxu0 0
      %3959 = vmatpush1.bf16.msra.mxu0 %v3942
      %3960 = vmatprep.subr.bf16.mxu0 0
      %3961 = vmatpush1.bf16.msra.mxu0 %v3943
      %3962 = vmatprep.subr.bf16.mxu0 0
      %3963 = vmatpush1.bf16.msra.mxu0 0
      %3964 = vmatprep.subr.bf16.mxu0 0
      %3965 = vmatpush1.bf16.msra.mxu0 0
      %3966 = vmatprep.subr.bf16.mxu0 0
      %3967 = vmatpush1.bf16.msra.mxu0 0
      %3968 = vmatprep.subr.bf16.mxu0 0
      %3969 = vmatpush1.bf16.msra.mxu0 0
      %3970 = vmatprep.subr.bf16.mxu0 0
      %3971 = vmatpush1.bf16.msra.mxu0 0
      %3972 = vmatprep.subr.bf16.mxu0 0
      %3973 = vmatpush1.bf16.msra.mxu0 0
      %3974 = vmatprep.subr.bf16.mxu0 0
      %3975 = vmatpush1.bf16.msra.mxu0 0
      %3976 = vmatprep.subr.bf16.mxu0 0
      %3977 = vmatpush1.bf16.msra.mxu0 0
      %3978 = vmatprep.subr.bf16.mxu0 0
      %3979 = vmatpush1.bf16.msra.mxu0 0
      %3980 = vmatprep.subr.bf16.mxu0 0
      %3981 = vmatpush1.bf16.msra.mxu0 0
      %3982 = vmatprep.subr.bf16.mxu0 0
      %3983 = vmatpush1.bf16.msra.mxu0 0
      %3984 = vmatprep.subr.bf16.mxu0 0
      %3985 = vmatpush1.bf16.msra.mxu0 0
      %3986 = vmatprep.subr.bf16.mxu0 0
      %3987 = vmatpush1.bf16.msra.mxu0 0
      %3988 = vmatprep.subr.bf16.mxu0 0
      %3989 = vmatpush1.bf16.msra.mxu0 0
      %3990 = vmatprep.mubr.bf16.mxu0 0
      %3991 = vmatmul.mubr.bf16.gmra.mrb[0].mxu0 %v3947
      %v3992 = vpop.f32.mrb[0].mxu0
      %v3993 = vadd.f32 0.0, %v3992
      %v3994 = vpop.f32.mrb[0].mxu0
      %v3995 = vpop.f32.mrb[0].mxu0
      %v3996 = vadd.f32 0.0, %v3995
      %v3997 = vpop.f32.mrb[0].mxu0
      %3998 = vmatprep.mubr.bf16.mxu0 0
      %3999 = vmatmul.mubr.bf16.gmra.mrb[0].mxu0 %v3950
      %v4000 = vpop.f32.mrb[0].mxu0
      %v4001 = vadd.f32 0.0, %v4000
      %v4002 = vpop.f32.mrb[0].mxu0
      %v4003 = vpop.f32.mrb[0].mxu0
      %v4004 = vadd.f32 0.0, %v4003
      %v4005 = vpop.f32.mrb[0].mxu0
      %4006 = vmatprep.mubr.bf16.mxu0 0
      %4007 = vmatmul.mubr.bf16.gmra.mrb[0].mxu0 %v3953
      %v4008 = vpop.f32.mrb[0].mxu0
      %v4009 = vadd.f32 0.0, %v4008
      %v4010 = vpop.f32.mrb[0].mxu0
      %v4011 = vpop.f32.mrb[0].mxu0
      %v4012 = vadd.f32 0.0, %v4011
      %v4013 = vpop.f32.mrb[0].mxu0
      %4014 = vmatprep.mubr.bf16.mxu0 0
      %4015 = vmatmul.mubr.bf16.gmra.mrb[0].mxu0 %v3956
      %v4016 = vpop.f32.mrb[0].mxu0
      %v4017 = vadd.f32 0.0, %v4016
      %v4018 = vpop.f32.mrb[0].mxu0
      %v4019 = vpop.f32.mrb[0].mxu0
      %v4020 = vpop.f32.mrb[0].mxu0
      %4021 = vdwg.mxu0
      %v4022 = vadd.f32 %v3749, %v3993
      %v4023 = vadd.f32 %v3752, %v3996
      %v4024 = vadd.f32 %v3757, %v4001
      %v4025 = vadd.f32 %v3760, %v4004
      %v4026 = vadd.f32 %v3765, %v4009
      %v4027 = vadd.f32 %v3768, %v4012
      %v4028 = vadd.f32 %v3773, %v4017
      %v4029 = vld [vmem:[%s1648] sm:$0xf]
      %v4030 = vld [vmem:[%s1648 + $0x8] sm:$0xf]
      %v4031 = vld [vmem:[%s1648 + $0x10] sm:$0xf]
      %v4032 = vld [vmem:[%s1648 + $0x18] sm:$0xf]
      %v4033 = vld [vmem:[%s1648 + $0x20] sm:$0xf]
      %v4034 = vld [vmem:[%s1648 + $0x28] sm:$0xf]
      %v4035 = vld [vmem:[%s1648 + $0x30] sm:$0xf]
      %s4036 = scalar_lea.vmem %s1, 336
      %v4037 = vld [vmem:[%s4036] sm:$0xf]
      %v4038 = vld [vmem:[%s4036 + $0x4] sm:$0xf]
      %v4039 = vld [vmem:[%s4036 + $0x8] sm:$0xf]
      %v4040 = vld [vmem:[%s4036 + $0xc] sm:$0xf]
      %v4048 = vunpack.c.l.b16 %v4029
      %v4049 = vunpack.c.l.b16 %v4030
      %v4050 = vunpack.c.l.b16 %v4031
      %v4051 = vunpack.c.l.b16 %v4032
      %v4052 = vunpack.c.l.b16 %v4033
      %v4053 = vunpack.c.l.b16 %v4034
      %v4054 = vunpack.c.l.b16 %v4035
      %v4055 = vpack.c.b16 %v4049, %v4048
      %v4056 = vpack.c.b16 %v4051, %v4050
      %v4057 = vpack.c.b16 %v4053, %v4052
      %v4058 = vpack.c.b16 %v4054, %v4054
      %v4063 = vunpack.c.l.b16 %v4037
      %v4064 = vunpack.c.l.b16 %v4038
      %v4065 = vunpack.c.l.b16 %v4039
      %v4066 = vunpack.c.l.b16 %v4040
      %v4067 = vpack.c.b16 %v4064, %v4063
      %v4068 = vpack.c.b16 %v4066, %v4065
      %v4072 = vsel %vm465, %v4055, 0
      %v4075 = vsel %vm465, %v4056, 0
      %v4078 = vsel %vm465, %v4057, 0
      %v4081 = vsel %vm465, %v4058, 0
      %4083 = vmatprep.subr.bf16.mxu0 0
      %4084 = vmatpush1.bf16.msra.mxu0 %v4067
      %4085 = vmatprep.subr.bf16.mxu0 0
      %4086 = vmatpush1.bf16.msra.mxu0 %v4068
      %4087 = vmatprep.subr.bf16.mxu0 0
      %4088 = vmatpush1.bf16.msra.mxu0 0
      %4089 = vmatprep.subr.bf16.mxu0 0
      %4090 = vmatpush1.bf16.msra.mxu0 0
      %4091 = vmatprep.subr.bf16.mxu0 0
      %4092 = vmatpush1.bf16.msra.mxu0 0
      %4093 = vmatprep.subr.bf16.mxu0 0
      %4094 = vmatpush1.bf16.msra.mxu0 0
      %4095 = vmatprep.subr.bf16.mxu0 0
      %4096 = vmatpush1.bf16.msra.mxu0 0
      %4097 = vmatprep.subr.bf16.mxu0 0
      %4098 = vmatpush1.bf16.msra.mxu0 0
      %4099 = vmatprep.subr.bf16.mxu0 0
      %4100 = vmatpush1.bf16.msra.mxu0 0
      %4101 = vmatprep.subr.bf16.mxu0 0
      %4102 = vmatpush1.bf16.msra.mxu0 0
      %4103 = vmatprep.subr.bf16.mxu0 0
      %4104 = vmatpush1.bf16.msra.mxu0 0
      %4105 = vmatprep.subr.bf16.mxu0 0
      %4106 = vmatpush1.bf16.msra.mxu0 0
      %4107 = vmatprep.subr.bf16.mxu0 0
      %4108 = vmatpush1.bf16.msra.mxu0 0
      %4109 = vmatprep.subr.bf16.mxu0 0
      %4110 = vmatpush1.bf16.msra.mxu0 0
      %4111 = vmatprep.subr.bf16.mxu0 0
      %4112 = vmatpush1.bf16.msra.mxu0 0
      %4113 = vmatprep.subr.bf16.mxu0 0
      %4114 = vmatpush1.bf16.msra.mxu0 0
      %4115 = vmatprep.mubr.bf16.mxu0 0
      %4116 = vmatmul.mubr.bf16.gmra.mrb[0].mxu0 %v4072
      %v4117 = vpop.f32.mrb[0].mxu0
      %v4118 = vadd.f32 0.0, %v4117
      %v4119 = vpop.f32.mrb[0].mxu0
      %v4120 = vpop.f32.mrb[0].mxu0
      %v4121 = vadd.f32 0.0, %v4120
      %v4122 = vpop.f32.mrb[0].mxu0
      %4123 = vmatprep.mubr.bf16.mxu0 0
      %4124 = vmatmul.mubr.bf16.gmra.mrb[0].mxu0 %v4075
      %v4125 = vpop.f32.mrb[0].mxu0
      %v4126 = vadd.f32 0.0, %v4125
      %v4127 = vpop.f32.mrb[0].mxu0
      %v4128 = vpop.f32.mrb[0].mxu0
      %v4129 = vadd.f32 0.0, %v4128
      %v4130 = vpop.f32.mrb[0].mxu0
      %4131 = vmatprep.mubr.bf16.mxu0 0
      %4132 = vmatmul.mubr.bf16.gmra.mrb[0].mxu0 %v4078
      %v4133 = vpop.f32.mrb[0].mxu0
      %v4134 = vadd.f32 0.0, %v4133
      %v4135 = vpop.f32.mrb[0].mxu0
      %v4136 = vpop.f32.mrb[0].mxu0
      %v4137 = vadd.f32 0.0, %v4136
      %v4138 = vpop.f32.mrb[0].mxu0
      %4139 = vmatprep.mubr.bf16.mxu0 0
      %4140 = vmatmul.mubr.bf16.gmra.mrb[0].mxu0 %v4081
      %v4141 = vpop.f32.mrb[0].mxu0
      %v4142 = vadd.f32 0.0, %v4141
      %v4143 = vpop.f32.mrb[0].mxu0
      %v4144 = vpop.f32.mrb[0].mxu0
      %v4145 = vpop.f32.mrb[0].mxu0
      %4146 = vdwg.mxu0
      %v4147 = vadd.f32 %v4022, %v4118
      %v4148 = vadd.f32 %v4023, %v4121
      %v4149 = vadd.f32 %v4024, %v4126
      %v4150 = vadd.f32 %v4025, %v4129
      %v4151 = vadd.f32 %v4026, %v4134
      %v4152 = vadd.f32 %v4027, %v4137
      %v4153 = vadd.f32 %v4028, %v4142
      %s4154 = scalar_lea.vmem %s1, 352
      %v4155 = vld [vmem:[%s4154] sm:$0xf]
      %v4156 = vld [vmem:[%s4154 + $0x4] sm:$0xf]
      %v4157 = vld [vmem:[%s4154 + $0x8] sm:$0xf]
      %v4158 = vld [vmem:[%s4154 + $0xc] sm:$0xf]
      %v4163 = vunpack.c.l.b16 %v4155
      %v4164 = vunpack.c.l.b16 %v4156
      %v4165 = vunpack.c.l.b16 %v4157
      %v4166 = vunpack.c.l.b16 %v4158
      %v4167 = vpack.c.b16 %v4164, %v4163
      %v4168 = vpack.c.b16 %v4166, %v4165
      %4171 = vmatprep.subr.bf16.mxu0 0
      %4172 = vmatpush1.bf16.msra.mxu0 %v4167
      %4173 = vmatprep.subr.bf16.mxu0 0
      %4174 = vmatpush1.bf16.msra.mxu0 %v4168
      %4175 = vmatprep.subr.bf16.mxu0 0
      %4176 = vmatpush1.bf16.msra.mxu0 0
      %4177 = vmatprep.subr.bf16.mxu0 0
      %4178 = vmatpush1.bf16.msra.mxu0 0
      %4179 = vmatprep.subr.bf16.mxu0 0
      %4180 = vmatpush1.bf16.msra.mxu0 0
      %4181 = vmatprep.subr.bf16.mxu0 0
      %4182 = vmatpush1.bf16.msra.mxu0 0
      %4183 = vmatprep.subr.bf16.mxu0 0
      %4184 = vmatpush1.bf16.msra.mxu0 0
      %4185 = vmatprep.subr.bf16.mxu0 0
      %4186 = vmatpush1.bf16.msra.mxu0 0
      %4187 = vmatprep.subr.bf16.mxu0 0
      %4188 = vmatpush1.bf16.msra.mxu0 0
      %4189 = vmatprep.subr.bf16.mxu0 0
      %4190 = vmatpush1.bf16.msra.mxu0 0
      %4191 = vmatprep.subr.bf16.mxu0 0
      %4192 = vmatpush1.bf16.msra.mxu0 0
      %4193 = vmatprep.subr.bf16.mxu0 0
      %4194 = vmatpush1.bf16.msra.mxu0 0
      %4195 = vmatprep.subr.bf16.mxu0 0
      %4196 = vmatpush1.bf16.msra.mxu0 0
      %4197 = vmatprep.subr.bf16.mxu0 0
      %4198 = vmatpush1.bf16.msra.mxu0 0
      %4199 = vmatprep.subr.bf16.mxu0 0
      %4200 = vmatpush1.bf16.msra.mxu0 0
      %4201 = vmatprep.subr.bf16.mxu0 0
      %4202 = vmatpush1.bf16.msra.mxu0 0
      %4203 = vmatprep.mubr.bf16.mxu0 0
      %4204 = vmatmul.mubr.bf16.gmra.mrb[0].mxu0 %v1950
      %v4205 = vpop.f32.mrb[0].mxu0
      %v4206 = vadd.f32 0.0, %v4205
      %v4207 = vpop.f32.mrb[0].mxu0
      %v4208 = vpop.f32.mrb[0].mxu0
      %v4209 = vadd.f32 0.0, %v4208
      %v4210 = vpop.f32.mrb[0].mxu0
      %4211 = vmatprep.mubr.bf16.mxu0 0
      %4212 = vmatmul.mubr.bf16.gmra.mrb[0].mxu0 %v1953
      %v4213 = vpop.f32.mrb[0].mxu0
      %v4214 = vadd.f32 0.0, %v4213
      %v4215 = vpop.f32.mrb[0].mxu0
      %v4216 = vpop.f32.mrb[0].mxu0
      %v4217 = vadd.f32 0.0, %v4216
      %v4218 = vpop.f32.mrb[0].mxu0
      %4219 = vmatprep.mubr.bf16.mxu0 0
      %4220 = vmatmul.mubr.bf16.gmra.mrb[0].mxu0 %v1956
      %v4221 = vpop.f32.mrb[0].mxu0
      %v4222 = vadd.f32 0.0, %v4221
      %v4223 = vpop.f32.mrb[0].mxu0
      %v4224 = vpop.f32.mrb[0].mxu0
      %v4225 = vadd.f32 0.0, %v4224
      %v4226 = vpop.f32.mrb[0].mxu0
      %4227 = vmatprep.mubr.bf16.mxu0 0
      %4228 = vmatmul.mubr.bf16.gmra.mrb[0].mxu0 %v1959
      %v4229 = vpop.f32.mrb[0].mxu0
      %v4230 = vadd.f32 0.0, %v4229
      %v4231 = vpop.f32.mrb[0].mxu0
      %v4232 = vpop.f32.mrb[0].mxu0
      %v4233 = vpop.f32.mrb[0].mxu0
      %4234 = vdwg.mxu0
      %v4235 = vadd.f32 %v4147, %v4206
      %v4236 = vadd.f32 %v4148, %v4209
      %v4237 = vadd.f32 %v4149, %v4214
      %v4238 = vadd.f32 %v4150, %v4217
      %v4239 = vadd.f32 %v4151, %v4222
      %v4240 = vadd.f32 %v4152, %v4225
      %v4241 = vadd.f32 %v4153, %v4230
      %v4242 = vld [vmem:[%s1648] sm:$0xe]
      %v4243 = vld [vmem:[%s1648 + $0x4] sm:$0x3]
      %v4244 = vld [vmem:[%s1648 + $0x8] sm:$0xe]
      %v4245 = vld [vmem:[%s1648 + $0xc] sm:$0x3]
      %v4246 = vld [vmem:[%s1648 + $0x10] sm:$0xe]
      %v4247 = vld [vmem:[%s1648 + $0x14] sm:$0x3]
      %v4248 = vld [vmem:[%s1648 + $0x18] sm:$0xe]
      %v4249 = vld [vmem:[%s1648 + $0x1c] sm:$0x3]
      %v4250 = vld [vmem:[%s1648 + $0x20] sm:$0xe]
      %v4251 = vld [vmem:[%s1648 + $0x24] sm:$0x3]
      %v4252 = vld [vmem:[%s1648 + $0x28] sm:$0xe]
      %v4253 = vld [vmem:[%s1648 + $0x2c] sm:$0x3]
      %v4254 = vld [vmem:[%s1648 + $0x30] sm:$0xe]
      %v4255 = vld [vmem:[%s1648 + $0x34] sm:$0x3]
      %v4257 = vshrl.u32 %v4242, 16
      %v4259 = vrot.slane %v4257, 5
      %v4260 = vshll.u32 %v4242, 16
      %v4262 = vrot.slane %v4260, 6
      %v4263 = vor.u32 %v4259, %v4262
      %v4264 = vrot.slane %v4263, 4
      %v4266 = vshrl.u32 %v4243, 16
      %v4268 = vrot.slane %v4266, 5
      %v4269 = vshll.u32 %v4243, 16
      %v4271 = vrot.slane %v4269, 6
      %v4272 = vor.u32 %v4268, %v4271
      %v4273 = vsel %vm2203, %v4264, %v4272
      %v4275 = vshrl.u32 %v4244, 16
      %v4277 = vrot.slane %v4275, 5
      %v4278 = vshll.u32 %v4244, 16
      %v4280 = vrot.slane %v4278, 6
      %v4281 = vor.u32 %v4277, %v4280
      %v4282 = vrot.slane %v4281, 4
      %v4284 = vshrl.u32 %v4245, 16
      %v4286 = vrot.slane %v4284, 5
      %v4287 = vshll.u32 %v4245, 16
      %v4289 = vrot.slane %v4287, 6
      %v4290 = vor.u32 %v4286, %v4289
      %v4291 = vsel %vm2203, %v4282, %v4290
      %v4293 = vshrl.u32 %v4246, 16
      %v4295 = vrot.slane %v4293, 5
      %v4296 = vshll.u32 %v4246, 16
      %v4298 = vrot.slane %v4296, 6
      %v4299 = vor.u32 %v4295, %v4298
      %v4300 = vrot.slane %v4299, 4
      %v4302 = vshrl.u32 %v4247, 16
      %v4304 = vrot.slane %v4302, 5
      %v4305 = vshll.u32 %v4247, 16
      %v4307 = vrot.slane %v4305, 6
      %v4308 = vor.u32 %v4304, %v4307
      %v4309 = vsel %vm2203, %v4300, %v4308
      %v4311 = vshrl.u32 %v4248, 16
      %v4313 = vrot.slane %v4311, 5
      %v4314 = vshll.u32 %v4248, 16
      %v4316 = vrot.slane %v4314, 6
      %v4317 = vor.u32 %v4313, %v4316
      %v4318 = vrot.slane %v4317, 4
      %v4320 = vshrl.u32 %v4249, 16
      %v4322 = vrot.slane %v4320, 5
      %v4323 = vshll.u32 %v4249, 16
      %v4325 = vrot.slane %v4323, 6
      %v4326 = vor.u32 %v4322, %v4325
      %v4327 = vsel %vm2203, %v4318, %v4326
      %v4329 = vshrl.u32 %v4250, 16
      %v4331 = vrot.slane %v4329, 5
      %v4332 = vshll.u32 %v4250, 16
      %v4334 = vrot.slane %v4332, 6
      %v4335 = vor.u32 %v4331, %v4334
      %v4336 = vrot.slane %v4335, 4
      %v4338 = vshrl.u32 %v4251, 16
      %v4340 = vrot.slane %v4338, 5
      %v4341 = vshll.u32 %v4251, 16
      %v4343 = vrot.slane %v4341, 6
      %v4344 = vor.u32 %v4340, %v4343
      %v4345 = vsel %vm2203, %v4336, %v4344
      %v4347 = vshrl.u32 %v4252, 16
      %v4349 = vrot.slane %v4347, 5
      %v4350 = vshll.u32 %v4252, 16
      %v4352 = vrot.slane %v4350, 6
      %v4353 = vor.u32 %v4349, %v4352
      %v4354 = vrot.slane %v4353, 4
      %v4356 = vshrl.u32 %v4253, 16
      %v4358 = vrot.slane %v4356, 5
      %v4359 = vshll.u32 %v4253, 16
      %v4361 = vrot.slane %v4359, 6
      %v4362 = vor.u32 %v4358, %v4361
      %v4363 = vsel %vm2203, %v4354, %v4362
      %v4365 = vshrl.u32 %v4254, 16
      %v4367 = vrot.slane %v4365, 5
      %v4368 = vshll.u32 %v4254, 16
      %v4370 = vrot.slane %v4368, 6
      %v4371 = vor.u32 %v4367, %v4370
      %v4372 = vrot.slane %v4371, 4
      %v4374 = vshrl.u32 %v4255, 16
      %v4376 = vrot.slane %v4374, 5
      %v4377 = vshll.u32 %v4255, 16
      %v4379 = vrot.slane %v4377, 6
      %v4380 = vor.u32 %v4376, %v4379
      %v4381 = vsel %vm2203, %v4372, %v4380
      %s4382 = scalar_lea.vmem %s1, 368
      %v4383 = vld [vmem:[%s4382] sm:$0xf]
      %v4384 = vld [vmem:[%s4382 + $0x4] sm:$0xf]
      %v4385 = vld [vmem:[%s4382 + $0x8] sm:$0xf]
      %v4386 = vld [vmem:[%s4382 + $0xc] sm:$0xf]
      %v4387 = vunpack.c.l.b16 %v4273
      %v4388 = vunpack.c.l.b16 %v4291
      %v4389 = vunpack.c.l.b16 %v4309
      %v4390 = vunpack.c.l.b16 %v4327
      %v4391 = vunpack.c.l.b16 %v4345
      %v4392 = vunpack.c.l.b16 %v4363
      %v4393 = vunpack.c.l.b16 %v4381
      %v4394 = vpack.c.b16 %v4388, %v4387
      %v4395 = vpack.c.b16 %v4390, %v4389
      %v4396 = vpack.c.b16 %v4392, %v4391
      %v4397 = vpack.c.b16 %v4393, %v4393
      %v4402 = vunpack.c.l.b16 %v4383
      %v4403 = vunpack.c.l.b16 %v4384
      %v4404 = vunpack.c.l.b16 %v4385
      %v4405 = vunpack.c.l.b16 %v4386
      %v4406 = vpack.c.b16 %v4403, %v4402
      %v4407 = vpack.c.b16 %v4405, %v4404
      %v4411 = vsel %vm465, %v4394, 0
      %v4414 = vsel %vm465, %v4395, 0
      %v4417 = vsel %vm465, %v4396, 0
      %v4420 = vsel %vm465, %v4397, 0
      %4422 = vmatprep.subr.bf16.mxu0 0
      %4423 = vmatpush1.bf16.msra.mxu0 %v4406
      %4424 = vmatprep.subr.bf16.mxu0 0
      %4425 = vmatpush1.bf16.msra.mxu0 %v4407
      %4426 = vmatprep.subr.bf16.mxu0 0
      %4427 = vmatpush1.bf16.msra.mxu0 0
      %4428 = vmatprep.subr.bf16.mxu0 0
      %4429 = vmatpush1.bf16.msra.mxu0 0
      %4430 = vmatprep.subr.bf16.mxu0 0
      %4431 = vmatpush1.bf16.msra.mxu0 0
      %4432 = vmatprep.subr.bf16.mxu0 0
      %4433 = vmatpush1.bf16.msra.mxu0 0
      %4434 = vmatprep.subr.bf16.mxu0 0
      %4435 = vmatpush1.bf16.msra.mxu0 0
      %4436 = vmatprep.subr.bf16.mxu0 0
      %4437 = vmatpush1.bf16.msra.mxu0 0
      %4438 = vmatprep.subr.bf16.mxu0 0
      %4439 = vmatpush1.bf16.msra.mxu0 0
      %4440 = vmatprep.subr.bf16.mxu0 0
      %4441 = vmatpush1.bf16.msra.mxu0 0
      %4442 = vmatprep.subr.bf16.mxu0 0
      %4443 = vmatpush1.bf16.msra.mxu0 0
      %4444 = vmatprep.subr.bf16.mxu0 0
      %4445 = vmatpush1.bf16.msra.mxu0 0
      %4446 = vmatprep.subr.bf16.mxu0 0
      %4447 = vmatpush1.bf16.msra.mxu0 0
      %4448 = vmatprep.subr.bf16.mxu0 0
      %4449 = vmatpush1.bf16.msra.mxu0 0
      %4450 = vmatprep.subr.bf16.mxu0 0
      %4451 = vmatpush1.bf16.msra.mxu0 0
      %4452 = vmatprep.subr.bf16.mxu0 0
      %4453 = vmatpush1.bf16.msra.mxu0 0
      %4454 = vmatprep.mubr.bf16.mxu0 0
      %4455 = vmatmul.mubr.bf16.gmra.mrb[0].mxu0 %v4411
      %v4456 = vpop.f32.mrb[0].mxu0
      %v4457 = vadd.f32 0.0, %v4456
      %v4458 = vpop.f32.mrb[0].mxu0
      %v4459 = vpop.f32.mrb[0].mxu0
      %v4460 = vadd.f32 0.0, %v4459
      %v4461 = vpop.f32.mrb[0].mxu0
      %4462 = vmatprep.mubr.bf16.mxu0 0
      %4463 = vmatmul.mubr.bf16.gmra.mrb[0].mxu0 %v4414
      %v4464 = vpop.f32.mrb[0].mxu0
      %v4465 = vadd.f32 0.0, %v4464
      %v4466 = vpop.f32.mrb[0].mxu0
      %v4467 = vpop.f32.mrb[0].mxu0
      %v4468 = vadd.f32 0.0, %v4467
      %v4469 = vpop.f32.mrb[0].mxu0
      %4470 = vmatprep.mubr.bf16.mxu0 0
      %4471 = vmatmul.mubr.bf16.gmra.mrb[0].mxu0 %v4417
      %v4472 = vpop.f32.mrb[0].mxu0
      %v4473 = vadd.f32 0.0, %v4472
      %v4474 = vpop.f32.mrb[0].mxu0
      %v4475 = vpop.f32.mrb[0].mxu0
      %v4476 = vadd.f32 0.0, %v4475
      %v4477 = vpop.f32.mrb[0].mxu0
      %4478 = vmatprep.mubr.bf16.mxu0 0
      %4479 = vmatmul.mubr.bf16.gmra.mrb[0].mxu0 %v4420
      %v4480 = vpop.f32.mrb[0].mxu0
      %v4481 = vadd.f32 0.0, %v4480
      %v4482 = vpop.f32.mrb[0].mxu0
      %v4483 = vpop.f32.mrb[0].mxu0
      %v4484 = vpop.f32.mrb[0].mxu0
      %4485 = vdwg.mxu0
      %v4486 = vadd.f32 %v4235, %v4457
      %v4487 = vadd.f32 %v4236, %v4460
      %v4488 = vadd.f32 %v4237, %v4465
      %v4489 = vadd.f32 %v4238, %v4468
      %v4490 = vadd.f32 %v4239, %v4473
      %v4491 = vadd.f32 %v4240, %v4476
      %v4492 = vadd.f32 %v4241, %v4481
      %s4493 = sadd.s32 %s197, 36
      %s4494 = smul.u32 %s4493, 2
      %s4495 = smul.addr %s4494, 4
      %s4496 = scalar_lea.vmem %s184, %s4495
      %v4497 = vld [vmem:[%s4496] sm:$0xf]
      %v4498 = vld [vmem:[%s4496 + $0x8] sm:$0xf]
      %v4499 = vld [vmem:[%s4496 + $0x10] sm:$0xf]
      %v4500 = vld [vmem:[%s4496 + $0x18] sm:$0xf]
      %v4501 = vld [vmem:[%s4496 + $0x20] sm:$0xf]
      %v4502 = vld [vmem:[%s4496 + $0x28] sm:$0xf]
      %v4503 = vld [vmem:[%s4496 + $0x30] sm:$0xf]
      %s4504 = scalar_lea.vmem %s1, 384
      %v4505 = vld [vmem:[%s4504] sm:$0xf]
      %v4506 = vld [vmem:[%s4504 + $0x4] sm:$0xf]
      %v4507 = vld [vmem:[%s4504 + $0x8] sm:$0xf]
      %v4508 = vld [vmem:[%s4504 + $0xc] sm:$0xf]
      %v4516 = vunpack.c.l.b16 %v4497
      %v4517 = vunpack.c.l.b16 %v4498
      %v4518 = vunpack.c.l.b16 %v4499
      %v4519 = vunpack.c.l.b16 %v4500
      %v4520 = vunpack.c.l.b16 %v4501
      %v4521 = vunpack.c.l.b16 %v4502
      %v4522 = vunpack.c.l.b16 %v4503
      %v4523 = vpack.c.b16 %v4517, %v4516
      %v4524 = vpack.c.b16 %v4519, %v4518
      %v4525 = vpack.c.b16 %v4521, %v4520
      %v4526 = vpack.c.b16 %v4522, %v4522
      %v4531 = vunpack.c.l.b16 %v4505
      %v4532 = vunpack.c.l.b16 %v4506
      %v4533 = vunpack.c.l.b16 %v4507
      %v4534 = vunpack.c.l.b16 %v4508
      %v4535 = vpack.c.b16 %v4532, %v4531
      %v4536 = vpack.c.b16 %v4534, %v4533
      %v4540 = vsel %vm465, %v4523, 0
      %v4543 = vsel %vm465, %v4524, 0
      %v4546 = vsel %vm465, %v4525, 0
      %v4549 = vsel %vm465, %v4526, 0
      %4551 = vmatprep.subr.bf16.mxu0 0
      %4552 = vmatpush1.bf16.msra.mxu0 %v4535
      %4553 = vmatprep.subr.bf16.mxu0 0
      %4554 = vmatpush1.bf16.msra.mxu0 %v4536
      %4555 = vmatprep.subr.bf16.mxu0 0
      %4556 = vmatpush1.bf16.msra.mxu0 0
      %4557 = vmatprep.subr.bf16.mxu0 0
      %4558 = vmatpush1.bf16.msra.mxu0 0
      %4559 = vmatprep.subr.bf16.mxu0 0
      %4560 = vmatpush1.bf16.msra.mxu0 0
      %4561 = vmatprep.subr.bf16.mxu0 0
      %4562 = vmatpush1.bf16.msra.mxu0 0
      %4563 = vmatprep.subr.bf16.mxu0 0
      %4564 = vmatpush1.bf16.msra.mxu0 0
      %4565 = vmatprep.subr.bf16.mxu0 0
      %4566 = vmatpush1.bf16.msra.mxu0 0
      %4567 = vmatprep.subr.bf16.mxu0 0
      %4568 = vmatpush1.bf16.msra.mxu0 0
      %4569 = vmatprep.subr.bf16.mxu0 0
      %4570 = vmatpush1.bf16.msra.mxu0 0
      %4571 = vmatprep.subr.bf16.mxu0 0
      %4572 = vmatpush1.bf16.msra.mxu0 0
      %4573 = vmatprep.subr.bf16.mxu0 0
      %4574 = vmatpush1.bf16.msra.mxu0 0
      %4575 = vmatprep.subr.bf16.mxu0 0
      %4576 = vmatpush1.bf16.msra.mxu0 0
      %4577 = vmatprep.subr.bf16.mxu0 0
      %4578 = vmatpush1.bf16.msra.mxu0 0
      %4579 = vmatprep.subr.bf16.mxu0 0
      %4580 = vmatpush1.bf16.msra.mxu0 0
      %4581 = vmatprep.subr.bf16.mxu0 0
      %4582 = vmatpush1.bf16.msra.mxu0 0
      %4583 = vmatprep.mubr.bf16.mxu0 0
      %4584 = vmatmul.mubr.bf16.gmra.mrb[0].mxu0 %v4540
      %v4585 = vpop.f32.mrb[0].mxu0
      %v4586 = vadd.f32 0.0, %v4585
      %v4587 = vpop.f32.mrb[0].mxu0
      %v4588 = vpop.f32.mrb[0].mxu0
      %v4589 = vadd.f32 0.0, %v4588
      %v4590 = vpop.f32.mrb[0].mxu0
      %4591 = vmatprep.mubr.bf16.mxu0 0
      %4592 = vmatmul.mubr.bf16.gmra.mrb[0].mxu0 %v4543
      %v4593 = vpop.f32.mrb[0].mxu0
      %v4594 = vadd.f32 0.0, %v4593
      %v4595 = vpop.f32.mrb[0].mxu0
      %v4596 = vpop.f32.mrb[0].mxu0
      %v4597 = vadd.f32 0.0, %v4596
      %v4598 = vpop.f32.mrb[0].mxu0
      %4599 = vmatprep.mubr.bf16.mxu0 0
      %4600 = vmatmul.mubr.bf16.gmra.mrb[0].mxu0 %v4546
      %v4601 = vpop.f32.mrb[0].mxu0
      %v4602 = vadd.f32 0.0, %v4601
      %v4603 = vpop.f32.mrb[0].mxu0
      %v4604 = vpop.f32.mrb[0].mxu0
      %v4605 = vadd.f32 0.0, %v4604
      %v4606 = vpop.f32.mrb[0].mxu0
      %4607 = vmatprep.mubr.bf16.mxu0 0
      %4608 = vmatmul.mubr.bf16.gmra.mrb[0].mxu0 %v4549
      %v4609 = vpop.f32.mrb[0].mxu0
      %v4610 = vadd.f32 0.0, %v4609
      %v4611 = vpop.f32.mrb[0].mxu0
      %v4612 = vpop.f32.mrb[0].mxu0
      %v4613 = vpop.f32.mrb[0].mxu0
      %4614 = vdwg.mxu0
      %v4615 = vadd.f32 %v4486, %v4586
      %v4616 = vadd.f32 %v4487, %v4589
      %v4617 = vadd.f32 %v4488, %v4594
      %v4618 = vadd.f32 %v4489, %v4597
      %v4619 = vadd.f32 %v4490, %v4602
      %v4620 = vadd.f32 %v4491, %v4605
      %v4621 = vadd.f32 %v4492, %v4610
      %s4622 = sadd.s32 %s197, 25
      %s4623 = smul.u32 %s4622, 2
      %s4624 = smul.addr %s4623, 4
      %s4625 = scalar_lea.vmem %s184, %s4624
      %v4626 = vld [vmem:[%s4625] sm:$0xe]
      %v4627 = vld [vmem:[%s4625 + $0x4] sm:$0x1]
      %v4628 = vld [vmem:[%s4625 + $0x8] sm:$0xe]
      %v4629 = vld [vmem:[%s4625 + $0xc] sm:$0x1]
      %v4630 = vld [vmem:[%s4625 + $0x10] sm:$0xe]
      %v4631 = vld [vmem:[%s4625 + $0x14] sm:$0x1]
      %v4632 = vld [vmem:[%s4625 + $0x18] sm:$0xe]
      %v4633 = vld [vmem:[%s4625 + $0x1c] sm:$0x1]
      %v4634 = vld [vmem:[%s4625 + $0x20] sm:$0xe]
      %v4635 = vld [vmem:[%s4625 + $0x24] sm:$0x1]
      %v4636 = vld [vmem:[%s4625 + $0x28] sm:$0xe]
      %v4637 = vld [vmem:[%s4625 + $0x2c] sm:$0x1]
      %v4638 = vld [vmem:[%s4625 + $0x30] sm:$0xe]
      %v4639 = vld [vmem:[%s4625 + $0x34] sm:$0x1]
      %v4654 = vrot.slane %v4626, 5
      %v4655 = vrot.slane %v4654, 4
      %v4656 = vrot.slane %v4627, 5
      %v4657 = vsel %vm664, %v4655, %v4656
      %v4658 = vrot.slane %v4628, 5
      %v4659 = vrot.slane %v4658, 4
      %v4660 = vrot.slane %v4629, 5
      %v4661 = vsel %vm664, %v4659, %v4660
      %v4662 = vrot.slane %v4630, 5
      %v4663 = vrot.slane %v4662, 4
      %v4664 = vrot.slane %v4631, 5
      %v4665 = vsel %vm664, %v4663, %v4664
      %v4666 = vrot.slane %v4632, 5
      %v4667 = vrot.slane %v4666, 4
      %v4668 = vrot.slane %v4633, 5
      %v4669 = vsel %vm664, %v4667, %v4668
      %v4670 = vrot.slane %v4634, 5
      %v4671 = vrot.slane %v4670, 4
      %v4672 = vrot.slane %v4635, 5
      %v4673 = vsel %vm664, %v4671, %v4672
      %v4674 = vrot.slane %v4636, 5
      %v4675 = vrot.slane %v4674, 4
      %v4676 = vrot.slane %v4637, 5
      %v4677 = vsel %vm664, %v4675, %v4676
      %v4678 = vrot.slane %v4638, 5
      %v4679 = vrot.slane %v4678, 4
      %v4680 = vrot.slane %v4639, 5
      %v4681 = vsel %vm664, %v4679, %v4680
      %s4682 = scalar_lea.vmem %s1, 400
      %v4683 = vld [vmem:[%s4682] sm:$0xf]
      %v4684 = vld [vmem:[%s4682 + $0x4] sm:$0xf]
      %v4685 = vld [vmem:[%s4682 + $0x8] sm:$0xf]
      %v4686 = vld [vmem:[%s4682 + $0xc] sm:$0xf]
      %v4687 = vunpack.c.l.b16 %v4657
      %v4688 = vunpack.c.l.b16 %v4661
      %v4689 = vunpack.c.l.b16 %v4665
      %v4690 = vunpack.c.l.b16 %v4669
      %v4691 = vunpack.c.l.b16 %v4673
      %v4692 = vunpack.c.l.b16 %v4677
      %v4693 = vunpack.c.l.b16 %v4681
      %v4694 = vpack.c.b16 %v4688, %v4687
      %v4695 = vpack.c.b16 %v4690, %v4689
      %v4696 = vpack.c.b16 %v4692, %v4691
      %v4697 = vpack.c.b16 %v4693, %v4693
      %v4702 = vunpack.c.l.b16 %v4683
      %v4703 = vunpack.c.l.b16 %v4684
      %v4704 = vunpack.c.l.b16 %v4685
      %v4705 = vunpack.c.l.b16 %v4686
      %v4706 = vpack.c.b16 %v4703, %v4702
      %v4707 = vpack.c.b16 %v4705, %v4704
      %v4711 = vsel %vm465, %v4694, 0
      %v4714 = vsel %vm465, %v4695, 0
      %v4717 = vsel %vm465, %v4696, 0
      %v4720 = vsel %vm465, %v4697, 0
      %4722 = vmatprep.subr.bf16.mxu0 0
      %4723 = vmatpush1.bf16.msra.mxu0 %v4706
      %4724 = vmatprep.subr.bf16.mxu0 0
      %4725 = vmatpush1.bf16.msra.mxu0 %v4707
      %4726 = vmatprep.subr.bf16.mxu0 0
      %4727 = vmatpush1.bf16.msra.mxu0 0
      %4728 = vmatprep.subr.bf16.mxu0 0
      %4729 = vmatpush1.bf16.msra.mxu0 0
      %4730 = vmatprep.subr.bf16.mxu0 0
      %4731 = vmatpush1.bf16.msra.mxu0 0
      %4732 = vmatprep.subr.bf16.mxu0 0
      %4733 = vmatpush1.bf16.msra.mxu0 0
      %4734 = vmatprep.subr.bf16.mxu0 0
      %4735 = vmatpush1.bf16.msra.mxu0 0
      %4736 = vmatprep.subr.bf16.mxu0 0
      %4737 = vmatpush1.bf16.msra.mxu0 0
      %4738 = vmatprep.subr.bf16.mxu0 0
      %4739 = vmatpush1.bf16.msra.mxu0 0
      %4740 = vmatprep.subr.bf16.mxu0 0
      %4741 = vmatpush1.bf16.msra.mxu0 0
      %4742 = vmatprep.subr.bf16.mxu0 0
      %4743 = vmatpush1.bf16.msra.mxu0 0
      %4744 = vmatprep.subr.bf16.mxu0 0
      %4745 = vmatpush1.bf16.msra.mxu0 0
      %4746 = vmatprep.subr.bf16.mxu0 0
      %4747 = vmatpush1.bf16.msra.mxu0 0
      %4748 = vmatprep.subr.bf16.mxu0 0
      %4749 = vmatpush1.bf16.msra.mxu0 0
      %4750 = vmatprep.subr.bf16.mxu0 0
      %4751 = vmatpush1.bf16.msra.mxu0 0
      %4752 = vmatprep.subr.bf16.mxu0 0
      %4753 = vmatpush1.bf16.msra.mxu0 0
      %4754 = vmatprep.mubr.bf16.mxu0 0
      %4755 = vmatmul.mubr.bf16.gmra.mrb[0].mxu0 %v4711
      %v4756 = vpop.f32.mrb[0].mxu0
      %v4757 = vadd.f32 0.0, %v4756
      %v4758 = vpop.f32.mrb[0].mxu0
      %v4759 = vpop.f32.mrb[0].mxu0
      %v4760 = vadd.f32 0.0, %v4759
      %v4761 = vpop.f32.mrb[0].mxu0
      %4762 = vmatprep.mubr.bf16.mxu0 0
      %4763 = vmatmul.mubr.bf16.gmra.mrb[0].mxu0 %v4714
      %v4764 = vpop.f32.mrb[0].mxu0
      %v4765 = vadd.f32 0.0, %v4764
      %v4766 = vpop.f32.mrb[0].mxu0
      %v4767 = vpop.f32.mrb[0].mxu0
      %v4768 = vadd.f32 0.0, %v4767
      %v4769 = vpop.f32.mrb[0].mxu0
      %4770 = vmatprep.mubr.bf16.mxu0 0
      %4771 = vmatmul.mubr.bf16.gmra.mrb[0].mxu0 %v4717
      %v4772 = vpop.f32.mrb[0].mxu0
      %v4773 = vadd.f32 0.0, %v4772
      %v4774 = vpop.f32.mrb[0].mxu0
      %v4775 = vpop.f32.mrb[0].mxu0
      %v4776 = vadd.f32 0.0, %v4775
      %v4777 = vpop.f32.mrb[0].mxu0
      %4778 = vmatprep.mubr.bf16.mxu0 0
      %4779 = vmatmul.mubr.bf16.gmra.mrb[0].mxu0 %v4720
      %v4780 = vpop.f32.mrb[0].mxu0
      %v4781 = vadd.f32 0.0, %v4780
      %v4782 = vpop.f32.mrb[0].mxu0
      %v4783 = vpop.f32.mrb[0].mxu0
      %v4784 = vpop.f32.mrb[0].mxu0
      %4785 = vdwg.mxu0
      %v4786 = vadd.f32 %v4615, %v4757
      %v4787 = vadd.f32 %v4616, %v4760
      %v4788 = vadd.f32 %v4617, %v4765
      %v4789 = vadd.f32 %v4618, %v4768
      %v4790 = vadd.f32 %v4619, %v4773
      %v4791 = vadd.f32 %v4620, %v4776
      %v4792 = vadd.f32 %v4621, %v4781
      %v4793 = vld [vmem:[%s4496] sm:$0xe]
      %v4794 = vld [vmem:[%s4496 + $0x4] sm:$0x3]
      %v4795 = vld [vmem:[%s4496 + $0x8] sm:$0xe]
      %v4796 = vld [vmem:[%s4496 + $0xc] sm:$0x3]
      %v4797 = vld [vmem:[%s4496 + $0x10] sm:$0xe]
      %v4798 = vld [vmem:[%s4496 + $0x14] sm:$0x3]
      %v4799 = vld [vmem:[%s4496 + $0x18] sm:$0xe]
      %v4800 = vld [vmem:[%s4496 + $0x1c] sm:$0x3]
      %v4801 = vld [vmem:[%s4496 + $0x20] sm:$0xe]
      %v4802 = vld [vmem:[%s4496 + $0x24] sm:$0x3]
      %v4803 = vld [vmem:[%s4496 + $0x28] sm:$0xe]
      %v4804 = vld [vmem:[%s4496 + $0x2c] sm:$0x3]
      %v4805 = vld [vmem:[%s4496 + $0x30] sm:$0xe]
      %v4806 = vld [vmem:[%s4496 + $0x34] sm:$0x3]
      %v4808 = vshrl.u32 %v4793, 16
      %v4810 = vrot.slane %v4808, 5
      %v4811 = vshll.u32 %v4793, 16
      %v4813 = vrot.slane %v4811, 6
      %v4814 = vor.u32 %v4810, %v4813
      %v4815 = vrot.slane %v4814, 4
      %v4817 = vshrl.u32 %v4794, 16
      %v4819 = vrot.slane %v4817, 5
      %v4820 = vshll.u32 %v4794, 16
      %v4822 = vrot.slane %v4820, 6
      %v4823 = vor.u32 %v4819, %v4822
      %v4824 = vsel %vm2203, %v4815, %v4823
      %v4826 = vshrl.u32 %v4795, 16
      %v4828 = vrot.slane %v4826, 5
      %v4829 = vshll.u32 %v4795, 16
      %v4831 = vrot.slane %v4829, 6
      %v4832 = vor.u32 %v4828, %v4831
      %v4833 = vrot.slane %v4832, 4
      %v4835 = vshrl.u32 %v4796, 16
      %v4837 = vrot.slane %v4835, 5
      %v4838 = vshll.u32 %v4796, 16
      %v4840 = vrot.slane %v4838, 6
      %v4841 = vor.u32 %v4837, %v4840
      %v4842 = vsel %vm2203, %v4833, %v4841
      %v4844 = vshrl.u32 %v4797, 16
      %v4846 = vrot.slane %v4844, 5
      %v4847 = vshll.u32 %v4797, 16
      %v4849 = vrot.slane %v4847, 6
      %v4850 = vor.u32 %v4846, %v4849
      %v4851 = vrot.slane %v4850, 4
      %v4853 = vshrl.u32 %v4798, 16
      %v4855 = vrot.slane %v4853, 5
      %v4856 = vshll.u32 %v4798, 16
      %v4858 = vrot.slane %v4856, 6
      %v4859 = vor.u32 %v4855, %v4858
      %v4860 = vsel %vm2203, %v4851, %v4859
      %v4862 = vshrl.u32 %v4799, 16
      %v4864 = vrot.slane %v4862, 5
      %v4865 = vshll.u32 %v4799, 16
      %v4867 = vrot.slane %v4865, 6
      %v4868 = vor.u32 %v4864, %v4867
      %v4869 = vrot.slane %v4868, 4
      %v4871 = vshrl.u32 %v4800, 16
      %v4873 = vrot.slane %v4871, 5
      %v4874 = vshll.u32 %v4800, 16
      %v4876 = vrot.slane %v4874, 6
      %v4877 = vor.u32 %v4873, %v4876
      %v4878 = vsel %vm2203, %v4869, %v4877
      %v4880 = vshrl.u32 %v4801, 16
      %v4882 = vrot.slane %v4880, 5
      %v4883 = vshll.u32 %v4801, 16
      %v4885 = vrot.slane %v4883, 6
      %v4886 = vor.u32 %v4882, %v4885
      %v4887 = vrot.slane %v4886, 4
      %v4889 = vshrl.u32 %v4802, 16
      %v4891 = vrot.slane %v4889, 5
      %v4892 = vshll.u32 %v4802, 16
      %v4894 = vrot.slane %v4892, 6
      %v4895 = vor.u32 %v4891, %v4894
      %v4896 = vsel %vm2203, %v4887, %v4895
      %v4898 = vshrl.u32 %v4803, 16
      %v4900 = vrot.slane %v4898, 5
      %v4901 = vshll.u32 %v4803, 16
      %v4903 = vrot.slane %v4901, 6
      %v4904 = vor.u32 %v4900, %v4903
      %v4905 = vrot.slane %v4904, 4
      %v4907 = vshrl.u32 %v4804, 16
      %v4909 = vrot.slane %v4907, 5
      %v4910 = vshll.u32 %v4804, 16
      %v4912 = vrot.slane %v4910, 6
      %v4913 = vor.u32 %v4909, %v4912
      %v4914 = vsel %vm2203, %v4905, %v4913
      %v4916 = vshrl.u32 %v4805, 16
      %v4918 = vrot.slane %v4916, 5
      %v4919 = vshll.u32 %v4805, 16
      %v4921 = vrot.slane %v4919, 6
      %v4922 = vor.u32 %v4918, %v4921
      %v4923 = vrot.slane %v4922, 4
      %v4925 = vshrl.u32 %v4806, 16
      %v4927 = vrot.slane %v4925, 5
      %v4928 = vshll.u32 %v4806, 16
      %v4930 = vrot.slane %v4928, 6
      %v4931 = vor.u32 %v4927, %v4930
      %v4932 = vsel %vm2203, %v4923, %v4931
      %s4933 = scalar_lea.vmem %s1, 416
      %v4934 = vld [vmem:[%s4933] sm:$0xf]
      %v4935 = vld [vmem:[%s4933 + $0x4] sm:$0xf]
      %v4936 = vld [vmem:[%s4933 + $0x8] sm:$0xf]
      %v4937 = vld [vmem:[%s4933 + $0xc] sm:$0xf]
      %v4938 = vunpack.c.l.b16 %v4824
      %v4939 = vunpack.c.l.b16 %v4842
      %v4940 = vunpack.c.l.b16 %v4860
      %v4941 = vunpack.c.l.b16 %v4878
      %v4942 = vunpack.c.l.b16 %v4896
      %v4943 = vunpack.c.l.b16 %v4914
      %v4944 = vunpack.c.l.b16 %v4932
      %v4945 = vpack.c.b16 %v4939, %v4938
      %v4946 = vpack.c.b16 %v4941, %v4940
      %v4947 = vpack.c.b16 %v4943, %v4942
      %v4948 = vpack.c.b16 %v4944, %v4944
      %v4953 = vunpack.c.l.b16 %v4934
      %v4954 = vunpack.c.l.b16 %v4935
      %v4955 = vunpack.c.l.b16 %v4936
      %v4956 = vunpack.c.l.b16 %v4937
      %v4957 = vpack.c.b16 %v4954, %v4953
      %v4958 = vpack.c.b16 %v4956, %v4955
      %v4962 = vsel %vm465, %v4945, 0
      %v4965 = vsel %vm465, %v4946, 0
      %v4968 = vsel %vm465, %v4947, 0
      %v4971 = vsel %vm465, %v4948, 0
      %4973 = vmatprep.subr.bf16.mxu0 0
      %4974 = vmatpush1.bf16.msra.mxu0 %v4957
      %4975 = vmatprep.subr.bf16.mxu0 0
      %4976 = vmatpush1.bf16.msra.mxu0 %v4958
      %4977 = vmatprep.subr.bf16.mxu0 0
      %4978 = vmatpush1.bf16.msra.mxu0 0
      %4979 = vmatprep.subr.bf16.mxu0 0
      %4980 = vmatpush1.bf16.msra.mxu0 0
      %4981 = vmatprep.subr.bf16.mxu0 0
      %4982 = vmatpush1.bf16.msra.mxu0 0
      %4983 = vmatprep.subr.bf16.mxu0 0
      %4984 = vmatpush1.bf16.msra.mxu0 0
      %4985 = vmatprep.subr.bf16.mxu0 0
      %4986 = vmatpush1.bf16.msra.mxu0 0
      %4987 = vmatprep.subr.bf16.mxu0 0
      %4988 = vmatpush1.bf16.msra.mxu0 0
      %4989 = vmatprep.subr.bf16.mxu0 0
      %4990 = vmatpush1.bf16.msra.mxu0 0
      %4991 = vmatprep.subr.bf16.mxu0 0
      %4992 = vmatpush1.bf16.msra.mxu0 0
      %4993 = vmatprep.subr.bf16.mxu0 0
      %4994 = vmatpush1.bf16.msra.mxu0 0
      %4995 = vmatprep.subr.bf16.mxu0 0
      %4996 = vmatpush1.bf16.msra.mxu0 0
      %4997 = vmatprep.subr.bf16.mxu0 0
      %4998 = vmatpush1.bf16.msra.mxu0 0
      %4999 = vmatprep.subr.bf16.mxu0 0
      %5000 = vmatpush1.bf16.msra.mxu0 0
      %5001 = vmatprep.subr.bf16.mxu0 0
      %5002 = vmatpush1.bf16.msra.mxu0 0
      %5003 = vmatprep.subr.bf16.mxu0 0
      %5004 = vmatpush1.bf16.msra.mxu0 0
      %5005 = vmatprep.mubr.bf16.mxu0 0
      %5006 = vmatmul.mubr.bf16.gmra.mrb[0].mxu0 %v4962
      %v5007 = vpop.f32.mrb[0].mxu0
      %v5008 = vadd.f32 0.0, %v5007
      %v5009 = vpop.f32.mrb[0].mxu0
      %v5010 = vpop.f32.mrb[0].mxu0
      %v5011 = vadd.f32 0.0, %v5010
      %v5012 = vpop.f32.mrb[0].mxu0
      %5013 = vmatprep.mubr.bf16.mxu0 0
      %5014 = vmatmul.mubr.bf16.gmra.mrb[0].mxu0 %v4965
      %v5015 = vpop.f32.mrb[0].mxu0
      %v5016 = vadd.f32 0.0, %v5015
      %v5017 = vpop.f32.mrb[0].mxu0
      %v5018 = vpop.f32.mrb[0].mxu0
      %v5019 = vadd.f32 0.0, %v5018
      %v5020 = vpop.f32.mrb[0].mxu0
      %5021 = vmatprep.mubr.bf16.mxu0 0
      %5022 = vmatmul.mubr.bf16.gmra.mrb[0].mxu0 %v4968
      %v5023 = vpop.f32.mrb[0].mxu0
      %v5024 = vadd.f32 0.0, %v5023
      %v5025 = vpop.f32.mrb[0].mxu0
      %v5026 = vpop.f32.mrb[0].mxu0
      %v5027 = vadd.f32 0.0, %v5026
      %v5028 = vpop.f32.mrb[0].mxu0
      %5029 = vmatprep.mubr.bf16.mxu0 0
      %5030 = vmatmul.mubr.bf16.gmra.mrb[0].mxu0 %v4971
      %v5031 = vpop.f32.mrb[0].mxu0
      %v5032 = vadd.f32 0.0, %v5031
      %v5033 = vpop.f32.mrb[0].mxu0
      %v5034 = vpop.f32.mrb[0].mxu0
      %v5035 = vpop.f32.mrb[0].mxu0
      %5036 = vdwg.mxu0
      %v5037 = vadd.f32 %v4786, %v5008
      %v5038 = vadd.f32 %v4787, %v5011
      %v5039 = vadd.f32 %v4788, %v5016
      %v5040 = vadd.f32 %v4789, %v5019
      %v5041 = vadd.f32 %v4790, %v5024
      %v5042 = vadd.f32 %v4791, %v5027
      %v5043 = vadd.f32 %v4792, %v5032
      %s5044 = smul.u32 %s197, 2
      %s5045 = smul.addr %s5044, 4
      %s5046 = scalar_lea.vmem %s184, %s5045
      %v5047 = vld [vmem:[%s5046] sm:$0xf]
      %v5048 = vld [vmem:[%s5046 + $0x8] sm:$0xf]
      %v5049 = vld [vmem:[%s5046 + $0x10] sm:$0xf]
      %v5050 = vld [vmem:[%s5046 + $0x18] sm:$0xf]
      %v5051 = vld [vmem:[%s5046 + $0x20] sm:$0xf]
      %v5052 = vld [vmem:[%s5046 + $0x28] sm:$0xf]
      %v5053 = vld [vmem:[%s5046 + $0x30] sm:$0xf]
      %s5054 = scalar_lea.vmem %s1, 432
      %v5055 = vld [vmem:[%s5054] sm:$0xf]
      %v5056 = vld [vmem:[%s5054 + $0x4] sm:$0xf]
      %v5057 = vld [vmem:[%s5054 + $0x8] sm:$0xf]
      %v5058 = vld [vmem:[%s5054 + $0xc] sm:$0xf]
      %v5059 = vld [vmem:[%s5046] sm:$0xe]
      %v5060 = vld [vmem:[%s5046 + $0x4] sm:$0x1]
      %v5061 = vld [vmem:[%s5046 + $0x8] sm:$0xe]
      %v5062 = vld [vmem:[%s5046 + $0xc] sm:$0x1]
      %v5063 = vld [vmem:[%s5046 + $0x10] sm:$0xe]
      %v5064 = vld [vmem:[%s5046 + $0x14] sm:$0x1]
      %v5065 = vld [vmem:[%s5046 + $0x18] sm:$0xe]
      %v5066 = vld [vmem:[%s5046 + $0x1c] sm:$0x1]
      %v5067 = vld [vmem:[%s5046 + $0x20] sm:$0xe]
      %v5068 = vld [vmem:[%s5046 + $0x24] sm:$0x1]
      %v5069 = vld [vmem:[%s5046 + $0x28] sm:$0xe]
      %v5070 = vld [vmem:[%s5046 + $0x2c] sm:$0x1]
      %v5071 = vld [vmem:[%s5046 + $0x30] sm:$0xe]
      %v5072 = vld [vmem:[%s5046 + $0x34] sm:$0x1]
      %v5087 = vrot.slane %v5059, 5
      %v5088 = vrot.slane %v5087, 4
      %v5089 = vrot.slane %v5060, 5
      %v5090 = vsel %vm664, %v5088, %v5089
      %v5091 = vrot.slane %v5061, 5
      %v5092 = vrot.slane %v5091, 4
      %v5093 = vrot.slane %v5062, 5
      %v5094 = vsel %vm664, %v5092, %v5093
      %v5095 = vrot.slane %v5063, 5
      %v5096 = vrot.slane %v5095, 4
      %v5097 = vrot.slane %v5064, 5
      %v5098 = vsel %vm664, %v5096, %v5097
      %v5099 = vrot.slane %v5065, 5
      %v5100 = vrot.slane %v5099, 4
      %v5101 = vrot.slane %v5066, 5
      %v5102 = vsel %vm664, %v5100, %v5101
      %v5103 = vrot.slane %v5067, 5
      %v5104 = vrot.slane %v5103, 4
      %v5105 = vrot.slane %v5068, 5
      %v5106 = vsel %vm664, %v5104, %v5105
      %v5107 = vrot.slane %v5069, 5
      %v5108 = vrot.slane %v5107, 4
      %v5109 = vrot.slane %v5070, 5
      %v5110 = vsel %vm664, %v5108, %v5109
      %v5111 = vrot.slane %v5071, 5
      %v5112 = vrot.slane %v5111, 4
      %v5113 = vrot.slane %v5072, 5
      %v5114 = vsel %vm664, %v5112, %v5113
      %s5115 = scalar_lea.vmem %s1, 448
      %v5116 = vld [vmem:[%s5115] sm:$0xf]
      %v5117 = vld [vmem:[%s5115 + $0x4] sm:$0xf]
      %v5118 = vld [vmem:[%s5115 + $0x8] sm:$0xf]
      %v5119 = vld [vmem:[%s5115 + $0xc] sm:$0xf]
      %v5120 = vunpack.c.l.b16 %v5090
      %v5121 = vunpack.c.l.b16 %v5094
      %v5122 = vunpack.c.l.b16 %v5098
      %v5123 = vunpack.c.l.b16 %v5102
      %v5124 = vunpack.c.l.b16 %v5106
      %v5125 = vunpack.c.l.b16 %v5110
      %v5126 = vunpack.c.l.b16 %v5114
      %v5127 = vpack.c.b16 %v5121, %v5120
      %v5128 = vpack.c.b16 %v5123, %v5122
      %v5129 = vpack.c.b16 %v5125, %v5124
      %v5130 = vpack.c.b16 %v5126, %v5126
      %v5135 = vunpack.c.l.b16 %v5116
      %v5136 = vunpack.c.l.b16 %v5117
      %v5137 = vunpack.c.l.b16 %v5118
      %v5138 = vunpack.c.l.b16 %v5119
      %v5139 = vpack.c.b16 %v5136, %v5135
      %v5140 = vpack.c.b16 %v5138, %v5137
      %v5144 = vsel %vm465, %v5127, 0
      %v5147 = vsel %vm465, %v5128, 0
      %v5150 = vsel %vm465, %v5129, 0
      %v5153 = vsel %vm465, %v5130, 0
      %5155 = vmatprep.subr.bf16.mxu0 0
      %5156 = vmatpush1.bf16.msra.mxu0 %v5139
      %5157 = vmatprep.subr.bf16.mxu0 0
      %5158 = vmatpush1.bf16.msra.mxu0 %v5140
      %5159 = vmatprep.subr.bf16.mxu0 0
      %5160 = vmatpush1.bf16.msra.mxu0 0
      %5161 = vmatprep.subr.bf16.mxu0 0
      %5162 = vmatpush1.bf16.msra.mxu0 0
      %5163 = vmatprep.subr.bf16.mxu0 0
      %5164 = vmatpush1.bf16.msra.mxu0 0
      %5165 = vmatprep.subr.bf16.mxu0 0
      %5166 = vmatpush1.bf16.msra.mxu0 0
      %5167 = vmatprep.subr.bf16.mxu0 0
      %5168 = vmatpush1.bf16.msra.mxu0 0
      %5169 = vmatprep.subr.bf16.mxu0 0
      %5170 = vmatpush1.bf16.msra.mxu0 0
      %5171 = vmatprep.subr.bf16.mxu0 0
      %5172 = vmatpush1.bf16.msra.mxu0 0
      %5173 = vmatprep.subr.bf16.mxu0 0
      %5174 = vmatpush1.bf16.msra.mxu0 0
      %5175 = vmatprep.subr.bf16.mxu0 0
      %5176 = vmatpush1.bf16.msra.mxu0 0
      %5177 = vmatprep.subr.bf16.mxu0 0
      %5178 = vmatpush1.bf16.msra.mxu0 0
      %5179 = vmatprep.subr.bf16.mxu0 0
      %5180 = vmatpush1.bf16.msra.mxu0 0
      %5181 = vmatprep.subr.bf16.mxu0 0
      %5182 = vmatpush1.bf16.msra.mxu0 0
      %5183 = vmatprep.subr.bf16.mxu0 0
      %5184 = vmatpush1.bf16.msra.mxu0 0
      %5185 = vmatprep.subr.bf16.mxu0 0
      %5186 = vmatpush1.bf16.msra.mxu0 0
      %5187 = vmatprep.mubr.bf16.mxu0 0
      %5188 = vmatmul.mubr.bf16.gmra.mrb[0].mxu0 %v5144
      %v5189 = vpop.f32.mrb[0].mxu0
      %v5190 = vadd.f32 0.0, %v5189
      %v5191 = vpop.f32.mrb[0].mxu0
      %v5192 = vpop.f32.mrb[0].mxu0
      %v5193 = vadd.f32 0.0, %v5192
      %v5194 = vpop.f32.mrb[0].mxu0
      %5195 = vmatprep.mubr.bf16.mxu0 0
      %5196 = vmatmul.mubr.bf16.gmra.mrb[0].mxu0 %v5147
      %v5197 = vpop.f32.mrb[0].mxu0
      %v5198 = vadd.f32 0.0, %v5197
      %v5199 = vpop.f32.mrb[0].mxu0
      %v5200 = vpop.f32.mrb[0].mxu0
      %v5201 = vadd.f32 0.0, %v5200
      %v5202 = vpop.f32.mrb[0].mxu0
      %5203 = vmatprep.mubr.bf16.mxu0 0
      %5204 = vmatmul.mubr.bf16.gmra.mrb[0].mxu0 %v5150
      %v5205 = vpop.f32.mrb[0].mxu0
      %v5206 = vadd.f32 0.0, %v5205
      %v5207 = vpop.f32.mrb[0].mxu0
      %v5208 = vpop.f32.mrb[0].mxu0
      %v5209 = vadd.f32 0.0, %v5208
      %v5210 = vpop.f32.mrb[0].mxu0
      %5211 = vmatprep.mubr.bf16.mxu0 0
      %5212 = vmatmul.mubr.bf16.gmra.mrb[0].mxu0 %v5153
      %v5213 = vpop.f32.mrb[0].mxu0
      %v5214 = vadd.f32 0.0, %v5213
      %v5215 = vpop.f32.mrb[0].mxu0
      %v5216 = vpop.f32.mrb[0].mxu0
      %v5217 = vpop.f32.mrb[0].mxu0
      %5218 = vdwg.mxu0
      %v5226 = vunpack.c.l.b16 %v5047
      %v5227 = vunpack.c.l.b16 %v5048
      %v5228 = vunpack.c.l.b16 %v5049
      %v5229 = vunpack.c.l.b16 %v5050
      %v5230 = vunpack.c.l.b16 %v5051
      %v5231 = vunpack.c.l.b16 %v5052
      %v5232 = vunpack.c.l.b16 %v5053
      %v5233 = vpack.c.b16 %v5227, %v5226
      %v5234 = vpack.c.b16 %v5229, %v5228
      %v5235 = vpack.c.b16 %v5231, %v5230
      %v5236 = vpack.c.b16 %v5232, %v5232
      %v5241 = vunpack.c.l.b16 %v5055
      %v5242 = vunpack.c.l.b16 %v5056
      %v5243 = vunpack.c.l.b16 %v5057
      %v5244 = vunpack.c.l.b16 %v5058
      %v5245 = vpack.c.b16 %v5242, %v5241
      %v5246 = vpack.c.b16 %v5244, %v5243
      %v5250 = vsel %vm465, %v5233, 0
      %v5253 = vsel %vm465, %v5234, 0
      %v5256 = vsel %vm465, %v5235, 0
      %v5259 = vsel %vm465, %v5236, 0
      %5261 = vmatprep.subr.bf16.mxu0 0
      %5262 = vmatpush1.bf16.msra.mxu0 %v5245
      %5263 = vmatprep.subr.bf16.mxu0 0
      %5264 = vmatpush1.bf16.msra.mxu0 %v5246
      %5265 = vmatprep.subr.bf16.mxu0 0
      %5266 = vmatpush1.bf16.msra.mxu0 0
      %5267 = vmatprep.subr.bf16.mxu0 0
      %5268 = vmatpush1.bf16.msra.mxu0 0
      %5269 = vmatprep.subr.bf16.mxu0 0
      %5270 = vmatpush1.bf16.msra.mxu0 0
      %5271 = vmatprep.subr.bf16.mxu0 0
      %5272 = vmatpush1.bf16.msra.mxu0 0
      %5273 = vmatprep.subr.bf16.mxu0 0
      %5274 = vmatpush1.bf16.msra.mxu0 0
      %5275 = vmatprep.subr.bf16.mxu0 0
      %5276 = vmatpush1.bf16.msra.mxu0 0
      %5277 = vmatprep.subr.bf16.mxu0 0
      %5278 = vmatpush1.bf16.msra.mxu0 0
      %5279 = vmatprep.subr.bf16.mxu0 0
      %5280 = vmatpush1.bf16.msra.mxu0 0
      %5281 = vmatprep.subr.bf16.mxu0 0
      %5282 = vmatpush1.bf16.msra.mxu0 0
      %5283 = vmatprep.subr.bf16.mxu0 0
      %5284 = vmatpush1.bf16.msra.mxu0 0
      %5285 = vmatprep.subr.bf16.mxu0 0
      %5286 = vmatpush1.bf16.msra.mxu0 0
      %5287 = vmatprep.subr.bf16.mxu0 0
      %5288 = vmatpush1.bf16.msra.mxu0 0
      %5289 = vmatprep.subr.bf16.mxu0 0
      %5290 = vmatpush1.bf16.msra.mxu0 0
      %5291 = vmatprep.subr.bf16.mxu0 0
      %5292 = vmatpush1.bf16.msra.mxu0 0
      %5293 = vmatprep.mubr.bf16.mxu0 0
      %5294 = vmatmul.mubr.bf16.gmra.mrb[0].mxu0 %v5250
      %v5295 = vpop.f32.mrb[0].mxu0
      %v5296 = vadd.f32 %v5190, %v5295
      %v5297 = vpop.f32.mrb[0].mxu0
      %v5298 = vpop.f32.mrb[0].mxu0
      %v5299 = vadd.f32 %v5193, %v5298
      %v5300 = vpop.f32.mrb[0].mxu0
      %5301 = vmatprep.mubr.bf16.mxu0 0
      %5302 = vmatmul.mubr.bf16.gmra.mrb[0].mxu0 %v5253
      %v5303 = vpop.f32.mrb[0].mxu0
      %v5304 = vadd.f32 %v5198, %v5303
      %v5305 = vpop.f32.mrb[0].mxu0
      %v5306 = vpop.f32.mrb[0].mxu0
      %v5307 = vadd.f32 %v5201, %v5306
      %v5308 = vpop.f32.mrb[0].mxu0
      %5309 = vmatprep.mubr.bf16.mxu0 0
      %5310 = vmatmul.mubr.bf16.gmra.mrb[0].mxu0 %v5256
      %v5311 = vpop.f32.mrb[0].mxu0
      %v5312 = vadd.f32 %v5206, %v5311
      %v5313 = vpop.f32.mrb[0].mxu0
      %v5314 = vpop.f32.mrb[0].mxu0
      %v5315 = vadd.f32 %v5209, %v5314
      %v5316 = vpop.f32.mrb[0].mxu0
      %5317 = vmatprep.mubr.bf16.mxu0 0
      %5318 = vmatmul.mubr.bf16.gmra.mrb[0].mxu0 %v5259
      %v5319 = vpop.f32.mrb[0].mxu0
      %v5320 = vadd.f32 %v5214, %v5319
      %v5321 = vpop.f32.mrb[0].mxu0
      %v5322 = vpop.f32.mrb[0].mxu0
      %v5323 = vpop.f32.mrb[0].mxu0
      %5324 = vdwg.mxu0
      %v5325 = vld [vmem:[%s5046] sm:$0xc]
      %v5326 = vld [vmem:[%s5046 + $0x4] sm:$0x3]
      %v5327 = vld [vmem:[%s5046 + $0x8] sm:$0xc]
      %v5328 = vld [vmem:[%s5046 + $0xc] sm:$0x3]
      %v5329 = vld [vmem:[%s5046 + $0x10] sm:$0xc]
      %v5330 = vld [vmem:[%s5046 + $0x14] sm:$0x3]
      %v5331 = vld [vmem:[%s5046 + $0x18] sm:$0xc]
      %v5332 = vld [vmem:[%s5046 + $0x1c] sm:$0x3]
      %v5333 = vld [vmem:[%s5046 + $0x20] sm:$0xc]
      %v5334 = vld [vmem:[%s5046 + $0x24] sm:$0x3]
      %v5335 = vld [vmem:[%s5046 + $0x28] sm:$0xc]
      %v5336 = vld [vmem:[%s5046 + $0x2c] sm:$0x3]
      %v5337 = vld [vmem:[%s5046 + $0x30] sm:$0xc]
      %v5338 = vld [vmem:[%s5046 + $0x34] sm:$0x3]
      %vm5353 = vcmask 1041408
      %vm5354 = vcmask 1045508
      %vm5355 = vmor %vm5353, %vm5354
      %v5356 = vrot.slane %v5325, 6
      %v5357 = vrot.slane %v5356, 4
      %v5358 = vrot.slane %v5326, 6
      %v5359 = vsel %vm5355, %v5357, %v5358
      %v5360 = vrot.slane %v5327, 6
      %v5361 = vrot.slane %v5360, 4
      %v5362 = vrot.slane %v5328, 6
      %v5363 = vsel %vm5355, %v5361, %v5362
      %v5364 = vrot.slane %v5329, 6
      %v5365 = vrot.slane %v5364, 4
      %v5366 = vrot.slane %v5330, 6
      %v5367 = vsel %vm5355, %v5365, %v5366
      %v5368 = vrot.slane %v5331, 6
      %v5369 = vrot.slane %v5368, 4
      %v5370 = vrot.slane %v5332, 6
      %v5371 = vsel %vm5355, %v5369, %v5370
      %v5372 = vrot.slane %v5333, 6
      %v5373 = vrot.slane %v5372, 4
      %v5374 = vrot.slane %v5334, 6
      %v5375 = vsel %vm5355, %v5373, %v5374
      %v5376 = vrot.slane %v5335, 6
      %v5377 = vrot.slane %v5376, 4
      %v5378 = vrot.slane %v5336, 6
      %v5379 = vsel %vm5355, %v5377, %v5378
      %v5380 = vrot.slane %v5337, 6
      %v5381 = vrot.slane %v5380, 4
      %v5382 = vrot.slane %v5338, 6
      %v5383 = vsel %vm5355, %v5381, %v5382
      %s5384 = scalar_lea.vmem %s1, 464
      %v5385 = vld [vmem:[%s5384] sm:$0xf]
      %v5386 = vld [vmem:[%s5384 + $0x4] sm:$0xf]
      %v5387 = vld [vmem:[%s5384 + $0x8] sm:$0xf]
      %v5388 = vld [vmem:[%s5384 + $0xc] sm:$0xf]
      %v5389 = vunpack.c.l.b16 %v5359
      %v5390 = vunpack.c.l.b16 %v5363
      %v5391 = vunpack.c.l.b16 %v5367
      %v5392 = vunpack.c.l.b16 %v5371
      %v5393 = vunpack.c.l.b16 %v5375
      %v5394 = vunpack.c.l.b16 %v5379
      %v5395 = vunpack.c.l.b16 %v5383
      %v5396 = vpack.c.b16 %v5390, %v5389
      %v5397 = vpack.c.b16 %v5392, %v5391
      %v5398 = vpack.c.b16 %v5394, %v5393
      %v5399 = vpack.c.b16 %v5395, %v5395
      %v5404 = vunpack.c.l.b16 %v5385
      %v5405 = vunpack.c.l.b16 %v5386
      %v5406 = vunpack.c.l.b16 %v5387
      %v5407 = vunpack.c.l.b16 %v5388
      %v5408 = vpack.c.b16 %v5405, %v5404
      %v5409 = vpack.c.b16 %v5407, %v5406
      %v5413 = vsel %vm465, %v5396, 0
      %v5416 = vsel %vm465, %v5397, 0
      %v5419 = vsel %vm465, %v5398, 0
      %v5422 = vsel %vm465, %v5399, 0
      %5424 = vmatprep.subr.bf16.mxu0 0
      %5425 = vmatpush1.bf16.msra.mxu0 %v5408
      %5426 = vmatprep.subr.bf16.mxu0 0
      %5427 = vmatpush1.bf16.msra.mxu0 %v5409
      %5428 = vmatprep.subr.bf16.mxu0 0
      %5429 = vmatpush1.bf16.msra.mxu0 0
      %5430 = vmatprep.subr.bf16.mxu0 0
      %5431 = vmatpush1.bf16.msra.mxu0 0
      %5432 = vmatprep.subr.bf16.mxu0 0
      %5433 = vmatpush1.bf16.msra.mxu0 0
      %5434 = vmatprep.subr.bf16.mxu0 0
      %5435 = vmatpush1.bf16.msra.mxu0 0
      %5436 = vmatprep.subr.bf16.mxu0 0
      %5437 = vmatpush1.bf16.msra.mxu0 0
      %5438 = vmatprep.subr.bf16.mxu0 0
      %5439 = vmatpush1.bf16.msra.mxu0 0
      %5440 = vmatprep.subr.bf16.mxu0 0
      %5441 = vmatpush1.bf16.msra.mxu0 0
      %5442 = vmatprep.subr.bf16.mxu0 0
      %5443 = vmatpush1.bf16.msra.mxu0 0
      %5444 = vmatprep.subr.bf16.mxu0 0
      %5445 = vmatpush1.bf16.msra.mxu0 0
      %5446 = vmatprep.subr.bf16.mxu0 0
      %5447 = vmatpush1.bf16.msra.mxu0 0
      %5448 = vmatprep.subr.bf16.mxu0 0
      %5449 = vmatpush1.bf16.msra.mxu0 0
      %5450 = vmatprep.subr.bf16.mxu0 0
      %5451 = vmatpush1.bf16.msra.mxu0 0
      %5452 = vmatprep.subr.bf16.mxu0 0
      %5453 = vmatpush1.bf16.msra.mxu0 0
      %5454 = vmatprep.subr.bf16.mxu0 0
      %5455 = vmatpush1.bf16.msra.mxu0 0
      %5456 = vmatprep.mubr.bf16.mxu0 0
      %5457 = vmatmul.mubr.bf16.gmra.mrb[0].mxu0 %v5413
      %v5458 = vpop.f32.mrb[0].mxu0
      %v5459 = vadd.f32 0.0, %v5458
      %v5460 = vpop.f32.mrb[0].mxu0
      %v5461 = vpop.f32.mrb[0].mxu0
      %v5462 = vadd.f32 0.0, %v5461
      %v5463 = vpop.f32.mrb[0].mxu0
      %5464 = vmatprep.mubr.bf16.mxu0 0
      %5465 = vmatmul.mubr.bf16.gmra.mrb[0].mxu0 %v5416
      %v5466 = vpop.f32.mrb[0].mxu0
      %v5467 = vadd.f32 0.0, %v5466
      %v5468 = vpop.f32.mrb[0].mxu0
      %v5469 = vpop.f32.mrb[0].mxu0
      %v5470 = vadd.f32 0.0, %v5469
      %v5471 = vpop.f32.mrb[0].mxu0
      %5472 = vmatprep.mubr.bf16.mxu0 0
      %5473 = vmatmul.mubr.bf16.gmra.mrb[0].mxu0 %v5419
      %v5474 = vpop.f32.mrb[0].mxu0
      %v5475 = vadd.f32 0.0, %v5474
      %v5476 = vpop.f32.mrb[0].mxu0
      %v5477 = vpop.f32.mrb[0].mxu0
      %v5478 = vadd.f32 0.0, %v5477
      %v5479 = vpop.f32.mrb[0].mxu0
      %5480 = vmatprep.mubr.bf16.mxu0 0
      %5481 = vmatmul.mubr.bf16.gmra.mrb[0].mxu0 %v5422
      %v5482 = vpop.f32.mrb[0].mxu0
      %v5483 = vadd.f32 0.0, %v5482
      %v5484 = vpop.f32.mrb[0].mxu0
      %v5485 = vpop.f32.mrb[0].mxu0
      %v5486 = vpop.f32.mrb[0].mxu0
      %5487 = vdwg.mxu0
      %v5488 = vadd.f32 %v5296, %v5459
      %v5489 = vadd.f32 %v5299, %v5462
      %v5490 = vadd.f32 %v5304, %v5467
      %v5491 = vadd.f32 %v5307, %v5470
      %v5492 = vadd.f32 %v5312, %v5475
      %v5493 = vadd.f32 %v5315, %v5478
      %v5494 = vadd.f32 %v5320, %v5483
      %v5495 = vld [vmem:[%s1421] sm:$0xf]
      %v5496 = vld [vmem:[%s1421 + $0x8] sm:$0xf]
      %v5497 = vld [vmem:[%s1421 + $0x10] sm:$0xf]
      %v5498 = vld [vmem:[%s1421 + $0x18] sm:$0xf]
      %v5499 = vld [vmem:[%s1421 + $0x20] sm:$0xf]
      %v5500 = vld [vmem:[%s1421 + $0x28] sm:$0xf]
      %v5501 = vld [vmem:[%s1421 + $0x30] sm:$0xf]
      %s5502 = scalar_lea.vmem %s1, 480
      %v5503 = vld [vmem:[%s5502] sm:$0xf]
      %v5504 = vld [vmem:[%s5502 + $0x4] sm:$0xf]
      %v5505 = vld [vmem:[%s5502 + $0x8] sm:$0xf]
      %v5506 = vld [vmem:[%s5502 + $0xc] sm:$0xf]
      %v5514 = vunpack.c.l.b16 %v5495
      %v5515 = vunpack.c.l.b16 %v5496
      %v5516 = vunpack.c.l.b16 %v5497
      %v5517 = vunpack.c.l.b16 %v5498
      %v5518 = vunpack.c.l.b16 %v5499
      %v5519 = vunpack.c.l.b16 %v5500
      %v5520 = vunpack.c.l.b16 %v5501
      %v5521 = vpack.c.b16 %v5515, %v5514
      %v5522 = vpack.c.b16 %v5517, %v5516
      %v5523 = vpack.c.b16 %v5519, %v5518
      %v5524 = vpack.c.b16 %v5520, %v5520
      %v5529 = vunpack.c.l.b16 %v5503
      %v5530 = vunpack.c.l.b16 %v5504
      %v5531 = vunpack.c.l.b16 %v5505
      %v5532 = vunpack.c.l.b16 %v5506
      %v5533 = vpack.c.b16 %v5530, %v5529
      %v5534 = vpack.c.b16 %v5532, %v5531
      %v5538 = vsel %vm465, %v5521, 0
      %v5541 = vsel %vm465, %v5522, 0
      %v5544 = vsel %vm465, %v5523, 0
      %v5547 = vsel %vm465, %v5524, 0
      %5549 = vmatprep.subr.bf16.mxu0 0
      %5550 = vmatpush1.bf16.msra.mxu0 %v5533
      %5551 = vmatprep.subr.bf16.mxu0 0
      %5552 = vmatpush1.bf16.msra.mxu0 %v5534
      %5553 = vmatprep.subr.bf16.mxu0 0
      %5554 = vmatpush1.bf16.msra.mxu0 0
      %5555 = vmatprep.subr.bf16.mxu0 0
      %5556 = vmatpush1.bf16.msra.mxu0 0
      %5557 = vmatprep.subr.bf16.mxu0 0
      %5558 = vmatpush1.bf16.msra.mxu0 0
      %5559 = vmatprep.subr.bf16.mxu0 0
      %5560 = vmatpush1.bf16.msra.mxu0 0
      %5561 = vmatprep.subr.bf16.mxu0 0
      %5562 = vmatpush1.bf16.msra.mxu0 0
      %5563 = vmatprep.subr.bf16.mxu0 0
      %5564 = vmatpush1.bf16.msra.mxu0 0
      %5565 = vmatprep.subr.bf16.mxu0 0
      %5566 = vmatpush1.bf16.msra.mxu0 0
      %5567 = vmatprep.subr.bf16.mxu0 0
      %5568 = vmatpush1.bf16.msra.mxu0 0
      %5569 = vmatprep.subr.bf16.mxu0 0
      %5570 = vmatpush1.bf16.msra.mxu0 0
      %5571 = vmatprep.subr.bf16.mxu0 0
      %5572 = vmatpush1.bf16.msra.mxu0 0
      %5573 = vmatprep.subr.bf16.mxu0 0
      %5574 = vmatpush1.bf16.msra.mxu0 0
      %5575 = vmatprep.subr.bf16.mxu0 0
      %5576 = vmatpush1.bf16.msra.mxu0 0
      %5577 = vmatprep.subr.bf16.mxu0 0
      %5578 = vmatpush1.bf16.msra.mxu0 0
      %5579 = vmatprep.subr.bf16.mxu0 0
      %5580 = vmatpush1.bf16.msra.mxu0 0
      %5581 = vmatprep.mubr.bf16.mxu0 0
      %5582 = vmatmul.mubr.bf16.gmra.mrb[0].mxu0 %v5538
      %v5583 = vpop.f32.mrb[0].mxu0
      %v5584 = vadd.f32 0.0, %v5583
      %v5585 = vpop.f32.mrb[0].mxu0
      %v5586 = vpop.f32.mrb[0].mxu0
      %v5587 = vadd.f32 0.0, %v5586
      %v5588 = vpop.f32.mrb[0].mxu0
      %5589 = vmatprep.mubr.bf16.mxu0 0
      %5590 = vmatmul.mubr.bf16.gmra.mrb[0].mxu0 %v5541
      %v5591 = vpop.f32.mrb[0].mxu0
      %v5592 = vadd.f32 0.0, %v5591
      %v5593 = vpop.f32.mrb[0].mxu0
      %v5594 = vpop.f32.mrb[0].mxu0
      %v5595 = vadd.f32 0.0, %v5594
      %v5596 = vpop.f32.mrb[0].mxu0
      %5597 = vmatprep.mubr.bf16.mxu0 0
      %5598 = vmatmul.mubr.bf16.gmra.mrb[0].mxu0 %v5544
      %v5599 = vpop.f32.mrb[0].mxu0
      %v5600 = vadd.f32 0.0, %v5599
      %v5601 = vpop.f32.mrb[0].mxu0
      %v5602 = vpop.f32.mrb[0].mxu0
      %v5603 = vadd.f32 0.0, %v5602
      %v5604 = vpop.f32.mrb[0].mxu0
      %5605 = vmatprep.mubr.bf16.mxu0 0
      %5606 = vmatmul.mubr.bf16.gmra.mrb[0].mxu0 %v5547
      %v5607 = vpop.f32.mrb[0].mxu0
      %v5608 = vadd.f32 0.0, %v5607
      %v5609 = vpop.f32.mrb[0].mxu0
      %v5610 = vpop.f32.mrb[0].mxu0
      %v5611 = vpop.f32.mrb[0].mxu0
      %5612 = vdwg.mxu0
      %v5613 = vadd.f32 %v5488, %v5584
      %v5614 = vadd.f32 %v5489, %v5587
      %v5615 = vadd.f32 %v5490, %v5592
      %v5616 = vadd.f32 %v5491, %v5595
      %v5617 = vadd.f32 %v5492, %v5600
      %v5618 = vadd.f32 %v5493, %v5603
      %v5619 = vadd.f32 %v5494, %v5608
      %s5620 = scalar_lea.vmem %s1, 496
      %v5621 = vld [vmem:[%s5620] sm:$0xf]
      %v5622 = vld [vmem:[%s5620 + $0x4] sm:$0xf]
      %v5623 = vld [vmem:[%s5620 + $0x8] sm:$0xf]
      %v5624 = vld [vmem:[%s5620 + $0xc] sm:$0xf]
      %v5629 = vunpack.c.l.b16 %v5621
      %v5630 = vunpack.c.l.b16 %v5622
      %v5631 = vunpack.c.l.b16 %v5623
      %v5632 = vunpack.c.l.b16 %v5624
      %v5633 = vpack.c.b16 %v5630, %v5629
      %v5634 = vpack.c.b16 %v5632, %v5631
      %5637 = vmatprep.subr.bf16.mxu0 0
      %5638 = vmatpush1.bf16.msra.mxu0 %v5633
      %5639 = vmatprep.subr.bf16.mxu0 0
      %5640 = vmatpush1.bf16.msra.mxu0 %v5634
      %5641 = vmatprep.subr.bf16.mxu0 0
      %5642 = vmatpush1.bf16.msra.mxu0 0
      %5643 = vmatprep.subr.bf16.mxu0 0
      %5644 = vmatpush1.bf16.msra.mxu0 0
      %5645 = vmatprep.subr.bf16.mxu0 0
      %5646 = vmatpush1.bf16.msra.mxu0 0
      %5647 = vmatprep.subr.bf16.mxu0 0
      %5648 = vmatpush1.bf16.msra.mxu0 0
      %5649 = vmatprep.subr.bf16.mxu0 0
      %5650 = vmatpush1.bf16.msra.mxu0 0
      %5651 = vmatprep.subr.bf16.mxu0 0
      %5652 = vmatpush1.bf16.msra.mxu0 0
      %5653 = vmatprep.subr.bf16.mxu0 0
      %5654 = vmatpush1.bf16.msra.mxu0 0
      %5655 = vmatprep.subr.bf16.mxu0 0
      %5656 = vmatpush1.bf16.msra.mxu0 0
      %5657 = vmatprep.subr.bf16.mxu0 0
      %5658 = vmatpush1.bf16.msra.mxu0 0
      %5659 = vmatprep.subr.bf16.mxu0 0
      %5660 = vmatpush1.bf16.msra.mxu0 0
      %5661 = vmatprep.subr.bf16.mxu0 0
      %5662 = vmatpush1.bf16.msra.mxu0 0
      %5663 = vmatprep.subr.bf16.mxu0 0
      %5664 = vmatpush1.bf16.msra.mxu0 0
      %5665 = vmatprep.subr.bf16.mxu0 0
      %5666 = vmatpush1.bf16.msra.mxu0 0
      %5667 = vmatprep.subr.bf16.mxu0 0
      %5668 = vmatpush1.bf16.msra.mxu0 0
      %5669 = vmatprep.mubr.bf16.mxu0 0
      %5670 = vmatmul.mubr.bf16.gmra.mrb[0].mxu0 %v1950
      %v5671 = vpop.f32.mrb[0].mxu0
      %v5672 = vadd.f32 0.0, %v5671
      %v5673 = vpop.f32.mrb[0].mxu0
      %v5674 = vpop.f32.mrb[0].mxu0
      %v5675 = vadd.f32 0.0, %v5674
      %v5676 = vpop.f32.mrb[0].mxu0
      %5677 = vmatprep.mubr.bf16.mxu0 0
      %5678 = vmatmul.mubr.bf16.gmra.mrb[0].mxu0 %v1953
      %v5679 = vpop.f32.mrb[0].mxu0
      %v5680 = vadd.f32 0.0, %v5679
      %v5681 = vpop.f32.mrb[0].mxu0
      %v5682 = vpop.f32.mrb[0].mxu0
      %v5683 = vadd.f32 0.0, %v5682
      %v5684 = vpop.f32.mrb[0].mxu0
      %5685 = vmatprep.mubr.bf16.mxu0 0
      %5686 = vmatmul.mubr.bf16.gmra.mrb[0].mxu0 %v1956
      %v5687 = vpop.f32.mrb[0].mxu0
      %v5688 = vadd.f32 0.0, %v5687
      %v5689 = vpop.f32.mrb[0].mxu0
      %v5690 = vpop.f32.mrb[0].mxu0
      %v5691 = vadd.f32 0.0, %v5690
      %v5692 = vpop.f32.mrb[0].mxu0
      %5693 = vmatprep.mubr.bf16.mxu0 0
      %5694 = vmatmul.mubr.bf16.gmra.mrb[0].mxu0 %v1959
      %v5695 = vpop.f32.mrb[0].mxu0
      %v5696 = vadd.f32 0.0, %v5695
      %v5697 = vpop.f32.mrb[0].mxu0
      %v5698 = vpop.f32.mrb[0].mxu0
      %v5699 = vpop.f32.mrb[0].mxu0
      %5700 = vdwg.mxu0
      %v5701 = vadd.f32 %v5613, %v5672
      %v5702 = vadd.f32 %v5614, %v5675
      %v5703 = vadd.f32 %v5615, %v5680
      %v5704 = vadd.f32 %v5616, %v5683
      %v5705 = vadd.f32 %v5617, %v5688
      %v5706 = vadd.f32 %v5618, %v5691
      %v5707 = vadd.f32 %v5619, %v5696
      %v5708 = vld [vmem:[%s1421] sm:$0xc]
      %v5709 = vld [vmem:[%s1421 + $0x8] sm:$0xc]
      %v5710 = vld [vmem:[%s1421 + $0x10] sm:$0xc]
      %v5711 = vld [vmem:[%s1421 + $0x18] sm:$0xc]
      %v5712 = vld [vmem:[%s1421 + $0x20] sm:$0xc]
      %v5713 = vld [vmem:[%s1421 + $0x28] sm:$0xc]
      %v5714 = vld [vmem:[%s1421 + $0x30] sm:$0xc]
      %v5729 = vrot.slane %v5708, 6
      %v5730 = vrot.slane %v5729, 4
      %v5731 = vrot.slane %v2617, 6
      %v5732 = vsel %vm5355, %v5730, %v5731
      %v5733 = vrot.slane %v5709, 6
      %v5734 = vrot.slane %v5733, 4
      %v5735 = vrot.slane %v2618, 6
      %v5736 = vsel %vm5355, %v5734, %v5735
      %v5737 = vrot.slane %v5710, 6
      %v5738 = vrot.slane %v5737, 4
      %v5739 = vrot.slane %v2619, 6
      %v5740 = vsel %vm5355, %v5738, %v5739
      %v5741 = vrot.slane %v5711, 6
      %v5742 = vrot.slane %v5741, 4
      %v5743 = vrot.slane %v2620, 6
      %v5744 = vsel %vm5355, %v5742, %v5743
      %v5745 = vrot.slane %v5712, 6
      %v5746 = vrot.slane %v5745, 4
      %v5747 = vrot.slane %v2621, 6
      %v5748 = vsel %vm5355, %v5746, %v5747
      %v5749 = vrot.slane %v5713, 6
      %v5750 = vrot.slane %v5749, 4
      %v5751 = vrot.slane %v2622, 6
      %v5752 = vsel %vm5355, %v5750, %v5751
      %v5753 = vrot.slane %v5714, 6
      %v5754 = vrot.slane %v5753, 4
      %v5755 = vrot.slane %v2623, 6
      %v5756 = vsel %vm5355, %v5754, %v5755
      %s5757 = scalar_lea.vmem %s1, 512
      %v5758 = vld [vmem:[%s5757] sm:$0xf]
      %v5759 = vld [vmem:[%s5757 + $0x4] sm:$0xf]
      %v5760 = vld [vmem:[%s5757 + $0x8] sm:$0xf]
      %v5761 = vld [vmem:[%s5757 + $0xc] sm:$0xf]
      %v5762 = vunpack.c.l.b16 %v5732
      %v5763 = vunpack.c.l.b16 %v5736
      %v5764 = vunpack.c.l.b16 %v5740
      %v5765 = vunpack.c.l.b16 %v5744
      %v5766 = vunpack.c.l.b16 %v5748
      %v5767 = vunpack.c.l.b16 %v5752
      %v5768 = vunpack.c.l.b16 %v5756
      %v5769 = vpack.c.b16 %v5763, %v5762
      %v5770 = vpack.c.b16 %v5765, %v5764
      %v5771 = vpack.c.b16 %v5767, %v5766
      %v5772 = vpack.c.b16 %v5768, %v5768
      %v5777 = vunpack.c.l.b16 %v5758
      %v5778 = vunpack.c.l.b16 %v5759
      %v5779 = vunpack.c.l.b16 %v5760
      %v5780 = vunpack.c.l.b16 %v5761
      %v5781 = vpack.c.b16 %v5778, %v5777
      %v5782 = vpack.c.b16 %v5780, %v5779
      %v5786 = vsel %vm465, %v5769, 0
      %v5789 = vsel %vm465, %v5770, 0
      %v5792 = vsel %vm465, %v5771, 0
      %v5795 = vsel %vm465, %v5772, 0
      %5797 = vmatprep.subr.bf16.mxu0 0
      %5798 = vmatpush1.bf16.msra.mxu0 %v5781
      %5799 = vmatprep.subr.bf16.mxu0 0
      %5800 = vmatpush1.bf16.msra.mxu0 %v5782
      %5801 = vmatprep.subr.bf16.mxu0 0
      %5802 = vmatpush1.bf16.msra.mxu0 0
      %5803 = vmatprep.subr.bf16.mxu0 0
      %5804 = vmatpush1.bf16.msra.mxu0 0
      %5805 = vmatprep.subr.bf16.mxu0 0
      %5806 = vmatpush1.bf16.msra.mxu0 0
      %5807 = vmatprep.subr.bf16.mxu0 0
      %5808 = vmatpush1.bf16.msra.mxu0 0
      %5809 = vmatprep.subr.bf16.mxu0 0
      %5810 = vmatpush1.bf16.msra.mxu0 0
      %5811 = vmatprep.subr.bf16.mxu0 0
      %5812 = vmatpush1.bf16.msra.mxu0 0
      %5813 = vmatprep.subr.bf16.mxu0 0
      %5814 = vmatpush1.bf16.msra.mxu0 0
      %5815 = vmatprep.subr.bf16.mxu0 0
      %5816 = vmatpush1.bf16.msra.mxu0 0
      %5817 = vmatprep.subr.bf16.mxu0 0
      %5818 = vmatpush1.bf16.msra.mxu0 0
      %5819 = vmatprep.subr.bf16.mxu0 0
      %5820 = vmatpush1.bf16.msra.mxu0 0
      %5821 = vmatprep.subr.bf16.mxu0 0
      %5822 = vmatpush1.bf16.msra.mxu0 0
      %5823 = vmatprep.subr.bf16.mxu0 0
      %5824 = vmatpush1.bf16.msra.mxu0 0
      %5825 = vmatprep.subr.bf16.mxu0 0
      %5826 = vmatpush1.bf16.msra.mxu0 0
      %5827 = vmatprep.subr.bf16.mxu0 0
      %5828 = vmatpush1.bf16.msra.mxu0 0
      %5829 = vmatprep.mubr.bf16.mxu0 0
      %5830 = vmatmul.mubr.bf16.gmra.mrb[0].mxu0 %v5786
      %v5831 = vpop.f32.mrb[0].mxu0
      %v5832 = vadd.f32 0.0, %v5831
      %v5833 = vpop.f32.mrb[0].mxu0
      %v5834 = vpop.f32.mrb[0].mxu0
      %v5835 = vadd.f32 0.0, %v5834
      %v5836 = vpop.f32.mrb[0].mxu0
      %5837 = vmatprep.mubr.bf16.mxu0 0
      %5838 = vmatmul.mubr.bf16.gmra.mrb[0].mxu0 %v5789
      %v5839 = vpop.f32.mrb[0].mxu0
      %v5840 = vadd.f32 0.0, %v5839
      %v5841 = vpop.f32.mrb[0].mxu0
      %v5842 = vpop.f32.mrb[0].mxu0
      %v5843 = vadd.f32 0.0, %v5842
      %v5844 = vpop.f32.mrb[0].mxu0
      %5845 = vmatprep.mubr.bf16.mxu0 0
      %5846 = vmatmul.mubr.bf16.gmra.mrb[0].mxu0 %v5792
      %v5847 = vpop.f32.mrb[0].mxu0
      %v5848 = vadd.f32 0.0, %v5847
      %v5849 = vpop.f32.mrb[0].mxu0
      %v5850 = vpop.f32.mrb[0].mxu0
      %v5851 = vadd.f32 0.0, %v5850
      %v5852 = vpop.f32.mrb[0].mxu0
      %5853 = vmatprep.mubr.bf16.mxu0 0
      %5854 = vmatmul.mubr.bf16.gmra.mrb[0].mxu0 %v5795
      %v5855 = vpop.f32.mrb[0].mxu0
      %v5856 = vadd.f32 0.0, %v5855
      %v5857 = vpop.f32.mrb[0].mxu0
      %v5858 = vpop.f32.mrb[0].mxu0
      %v5859 = vpop.f32.mrb[0].mxu0
      %5860 = vdwg.mxu0
      %v5861 = vadd.f32 %v5701, %v5832
      %v5862 = vadd.f32 %v5702, %v5835
      %v5863 = vadd.f32 %v5703, %v5840
      %v5864 = vadd.f32 %v5704, %v5843
      %v5865 = vadd.f32 %v5705, %v5848
      %v5866 = vadd.f32 %v5706, %v5851
      %v5867 = vadd.f32 %v5707, %v5856
      %s5868 = sadd.s32 %s197, 4
      %s5869 = smul.u32 %s5868, 2
      %s5870 = smul.addr %s5869, 4
      %s5871 = scalar_lea.vmem %s184, %s5870
      %v5872 = vld [vmem:[%s5871] sm:$0xf]
      %v5873 = vld [vmem:[%s5871 + $0x8] sm:$0xf]
      %v5874 = vld [vmem:[%s5871 + $0x10] sm:$0xf]
      %v5875 = vld [vmem:[%s5871 + $0x18] sm:$0xf]
      %v5876 = vld [vmem:[%s5871 + $0x20] sm:$0xf]
      %v5877 = vld [vmem:[%s5871 + $0x28] sm:$0xf]
      %v5878 = vld [vmem:[%s5871 + $0x30] sm:$0xf]
      %s5879 = scalar_lea.vmem %s1, 528
      %v5880 = vld [vmem:[%s5879] sm:$0xf]
      %v5881 = vld [vmem:[%s5879 + $0x4] sm:$0xf]
      %v5882 = vld [vmem:[%s5879 + $0x8] sm:$0xf]
      %v5883 = vld [vmem:[%s5879 + $0xc] sm:$0xf]
      %v5891 = vunpack.c.l.b16 %v5872
      %v5892 = vunpack.c.l.b16 %v5873
      %v5893 = vunpack.c.l.b16 %v5874
      %v5894 = vunpack.c.l.b16 %v5875
      %v5895 = vunpack.c.l.b16 %v5876
      %v5896 = vunpack.c.l.b16 %v5877
      %v5897 = vunpack.c.l.b16 %v5878
      %v5898 = vpack.c.b16 %v5892, %v5891
      %v5899 = vpack.c.b16 %v5894, %v5893
      %v5900 = vpack.c.b16 %v5896, %v5895
      %v5901 = vpack.c.b16 %v5897, %v5897
      %v5906 = vunpack.c.l.b16 %v5880
      %v5907 = vunpack.c.l.b16 %v5881
      %v5908 = vunpack.c.l.b16 %v5882
      %v5909 = vunpack.c.l.b16 %v5883
      %v5910 = vpack.c.b16 %v5907, %v5906
      %v5911 = vpack.c.b16 %v5909, %v5908
      %v5915 = vsel %vm465, %v5898, 0
      %v5918 = vsel %vm465, %v5899, 0
      %v5921 = vsel %vm465, %v5900, 0
      %v5924 = vsel %vm465, %v5901, 0
      %5926 = vmatprep.subr.bf16.mxu0 0
      %5927 = vmatpush1.bf16.msra.mxu0 %v5910
      %5928 = vmatprep.subr.bf16.mxu0 0
      %5929 = vmatpush1.bf16.msra.mxu0 %v5911
      %5930 = vmatprep.subr.bf16.mxu0 0
      %5931 = vmatpush1.bf16.msra.mxu0 0
      %5932 = vmatprep.subr.bf16.mxu0 0
      %5933 = vmatpush1.bf16.msra.mxu0 0
      %5934 = vmatprep.subr.bf16.mxu0 0
      %5935 = vmatpush1.bf16.msra.mxu0 0
      %5936 = vmatprep.subr.bf16.mxu0 0
      %5937 = vmatpush1.bf16.msra.mxu0 0
      %5938 = vmatprep.subr.bf16.mxu0 0
      %5939 = vmatpush1.bf16.msra.mxu0 0
      %5940 = vmatprep.subr.bf16.mxu0 0
      %5941 = vmatpush1.bf16.msra.mxu0 0
      %5942 = vmatprep.subr.bf16.mxu0 0
      %5943 = vmatpush1.bf16.msra.mxu0 0
      %5944 = vmatprep.subr.bf16.mxu0 0
      %5945 = vmatpush1.bf16.msra.mxu0 0
      %5946 = vmatprep.subr.bf16.mxu0 0
      %5947 = vmatpush1.bf16.msra.mxu0 0
      %5948 = vmatprep.subr.bf16.mxu0 0
      %5949 = vmatpush1.bf16.msra.mxu0 0
      %5950 = vmatprep.subr.bf16.mxu0 0
      %5951 = vmatpush1.bf16.msra.mxu0 0
      %5952 = vmatprep.subr.bf16.mxu0 0
      %5953 = vmatpush1.bf16.msra.mxu0 0
      %5954 = vmatprep.subr.bf16.mxu0 0
      %5955 = vmatpush1.bf16.msra.mxu0 0
      %5956 = vmatprep.subr.bf16.mxu0 0
      %5957 = vmatpush1.bf16.msra.mxu0 0
      %5958 = vmatprep.mubr.bf16.mxu0 0
      %5959 = vmatmul.mubr.bf16.gmra.mrb[0].mxu0 %v5915
      %v5960 = vpop.f32.mrb[0].mxu0
      %v5961 = vadd.f32 0.0, %v5960
      %v5962 = vpop.f32.mrb[0].mxu0
      %v5963 = vpop.f32.mrb[0].mxu0
      %v5964 = vadd.f32 0.0, %v5963
      %v5965 = vpop.f32.mrb[0].mxu0
      %5966 = vmatprep.mubr.bf16.mxu0 0
      %5967 = vmatmul.mubr.bf16.gmra.mrb[0].mxu0 %v5918
      %v5968 = vpop.f32.mrb[0].mxu0
      %v5969 = vadd.f32 0.0, %v5968
      %v5970 = vpop.f32.mrb[0].mxu0
      %v5971 = vpop.f32.mrb[0].mxu0
      %v5972 = vadd.f32 0.0, %v5971
      %v5973 = vpop.f32.mrb[0].mxu0
      %5974 = vmatprep.mubr.bf16.mxu0 0
      %5975 = vmatmul.mubr.bf16.gmra.mrb[0].mxu0 %v5921
      %v5976 = vpop.f32.mrb[0].mxu0
      %v5977 = vadd.f32 0.0, %v5976
      %v5978 = vpop.f32.mrb[0].mxu0
      %v5979 = vpop.f32.mrb[0].mxu0
      %v5980 = vadd.f32 0.0, %v5979
      %v5981 = vpop.f32.mrb[0].mxu0
      %5982 = vmatprep.mubr.bf16.mxu0 0
      %5983 = vmatmul.mubr.bf16.gmra.mrb[0].mxu0 %v5924
      %v5984 = vpop.f32.mrb[0].mxu0
      %v5985 = vadd.f32 0.0, %v5984
      %v5986 = vpop.f32.mrb[0].mxu0
      %v5987 = vpop.f32.mrb[0].mxu0
      %v5988 = vpop.f32.mrb[0].mxu0
      %5989 = vdwg.mxu0
      %v5990 = vadd.f32 %v5861, %v5961
      %v5991 = vadd.f32 %v5862, %v5964
      %v5992 = vadd.f32 %v5863, %v5969
      %v5993 = vadd.f32 %v5864, %v5972
      %v5994 = vadd.f32 %v5865, %v5977
      %v5995 = vadd.f32 %v5866, %v5980
      %v5996 = vadd.f32 %v5867, %v5985
      %v5997 = vld [vmem:[%s5871] sm:$0xe]
      %v5998 = vld [vmem:[%s5871 + $0x4] sm:$0x1]
      %v5999 = vld [vmem:[%s5871 + $0x8] sm:$0xe]
      %v6000 = vld [vmem:[%s5871 + $0xc] sm:$0x1]
      %v6001 = vld [vmem:[%s5871 + $0x10] sm:$0xe]
      %v6002 = vld [vmem:[%s5871 + $0x14] sm:$0x1]
      %v6003 = vld [vmem:[%s5871 + $0x18] sm:$0xe]
      %v6004 = vld [vmem:[%s5871 + $0x1c] sm:$0x1]
      %v6005 = vld [vmem:[%s5871 + $0x20] sm:$0xe]
      %v6006 = vld [vmem:[%s5871 + $0x24] sm:$0x1]
      %v6007 = vld [vmem:[%s5871 + $0x28] sm:$0xe]
      %v6008 = vld [vmem:[%s5871 + $0x2c] sm:$0x1]
      %v6009 = vld [vmem:[%s5871 + $0x30] sm:$0xe]
      %v6010 = vld [vmem:[%s5871 + $0x34] sm:$0x1]
      %v6025 = vrot.slane %v5997, 5
      %v6026 = vrot.slane %v6025, 4
      %v6027 = vrot.slane %v5998, 5
      %v6028 = vsel %vm664, %v6026, %v6027
      %v6029 = vrot.slane %v5999, 5
      %v6030 = vrot.slane %v6029, 4
      %v6031 = vrot.slane %v6000, 5
      %v6032 = vsel %vm664, %v6030, %v6031
      %v6033 = vrot.slane %v6001, 5
      %v6034 = vrot.slane %v6033, 4
      %v6035 = vrot.slane %v6002, 5
      %v6036 = vsel %vm664, %v6034, %v6035
      %v6037 = vrot.slane %v6003, 5
      %v6038 = vrot.slane %v6037, 4
      %v6039 = vrot.slane %v6004, 5
      %v6040 = vsel %vm664, %v6038, %v6039
      %v6041 = vrot.slane %v6005, 5
      %v6042 = vrot.slane %v6041, 4
      %v6043 = vrot.slane %v6006, 5
      %v6044 = vsel %vm664, %v6042, %v6043
      %v6045 = vrot.slane %v6007, 5
      %v6046 = vrot.slane %v6045, 4
      %v6047 = vrot.slane %v6008, 5
      %v6048 = vsel %vm664, %v6046, %v6047
      %v6049 = vrot.slane %v6009, 5
      %v6050 = vrot.slane %v6049, 4
      %v6051 = vrot.slane %v6010, 5
      %v6052 = vsel %vm664, %v6050, %v6051
      %s6053 = scalar_lea.vmem %s1, 544
      %v6054 = vld [vmem:[%s6053] sm:$0xf]
      %v6055 = vld [vmem:[%s6053 + $0x4] sm:$0xf]
      %v6056 = vld [vmem:[%s6053 + $0x8] sm:$0xf]
      %v6057 = vld [vmem:[%s6053 + $0xc] sm:$0xf]
      %v6058 = vunpack.c.l.b16 %v6028
      %v6059 = vunpack.c.l.b16 %v6032
      %v6060 = vunpack.c.l.b16 %v6036
      %v6061 = vunpack.c.l.b16 %v6040
      %v6062 = vunpack.c.l.b16 %v6044
      %v6063 = vunpack.c.l.b16 %v6048
      %v6064 = vunpack.c.l.b16 %v6052
      %v6065 = vpack.c.b16 %v6059, %v6058
      %v6066 = vpack.c.b16 %v6061, %v6060
      %v6067 = vpack.c.b16 %v6063, %v6062
      %v6068 = vpack.c.b16 %v6064, %v6064
      %v6073 = vunpack.c.l.b16 %v6054
      %v6074 = vunpack.c.l.b16 %v6055
      %v6075 = vunpack.c.l.b16 %v6056
      %v6076 = vunpack.c.l.b16 %v6057
      %v6077 = vpack.c.b16 %v6074, %v6073
      %v6078 = vpack.c.b16 %v6076, %v6075
      %v6082 = vsel %vm465, %v6065, 0
      %v6085 = vsel %vm465, %v6066, 0
      %v6088 = vsel %vm465, %v6067, 0
      %v6091 = vsel %vm465, %v6068, 0
      %6093 = vmatprep.subr.bf16.mxu0 0
      %6094 = vmatpush1.bf16.msra.mxu0 %v6077
      %6095 = vmatprep.subr.bf16.mxu0 0
      %6096 = vmatpush1.bf16.msra.mxu0 %v6078
      %6097 = vmatprep.subr.bf16.mxu0 0
      %6098 = vmatpush1.bf16.msra.mxu0 0
      %6099 = vmatprep.subr.bf16.mxu0 0
      %6100 = vmatpush1.bf16.msra.mxu0 0
      %6101 = vmatprep.subr.bf16.mxu0 0
      %6102 = vmatpush1.bf16.msra.mxu0 0
      %6103 = vmatprep.subr.bf16.mxu0 0
      %6104 = vmatpush1.bf16.msra.mxu0 0
      %6105 = vmatprep.subr.bf16.mxu0 0
      %6106 = vmatpush1.bf16.msra.mxu0 0
      %6107 = vmatprep.subr.bf16.mxu0 0
      %6108 = vmatpush1.bf16.msra.mxu0 0
      %6109 = vmatprep.subr.bf16.mxu0 0
      %6110 = vmatpush1.bf16.msra.mxu0 0
      %6111 = vmatprep.subr.bf16.mxu0 0
      %6112 = vmatpush1.bf16.msra.mxu0 0
      %6113 = vmatprep.subr.bf16.mxu0 0
      %6114 = vmatpush1.bf16.msra.mxu0 0
      %6115 = vmatprep.subr.bf16.mxu0 0
      %6116 = vmatpush1.bf16.msra.mxu0 0
      %6117 = vmatprep.subr.bf16.mxu0 0
      %6118 = vmatpush1.bf16.msra.mxu0 0
      %6119 = vmatprep.subr.bf16.mxu0 0
      %6120 = vmatpush1.bf16.msra.mxu0 0
      %6121 = vmatprep.subr.bf16.mxu0 0
      %6122 = vmatpush1.bf16.msra.mxu0 0
      %6123 = vmatprep.subr.bf16.mxu0 0
      %6124 = vmatpush1.bf16.msra.mxu0 0
      %6125 = vmatprep.mubr.bf16.mxu0 0
      %6126 = vmatmul.mubr.bf16.gmra.mrb[0].mxu0 %v6082
      %v6127 = vpop.f32.mrb[0].mxu0
      %v6128 = vadd.f32 0.0, %v6127
      %v6129 = vpop.f32.mrb[0].mxu0
      %v6130 = vpop.f32.mrb[0].mxu0
      %v6131 = vadd.f32 0.0, %v6130
      %v6132 = vpop.f32.mrb[0].mxu0
      %6133 = vmatprep.mubr.bf16.mxu0 0
      %6134 = vmatmul.mubr.bf16.gmra.mrb[0].mxu0 %v6085
      %v6135 = vpop.f32.mrb[0].mxu0
      %v6136 = vadd.f32 0.0, %v6135
      %v6137 = vpop.f32.mrb[0].mxu0
      %v6138 = vpop.f32.mrb[0].mxu0
      %v6139 = vadd.f32 0.0, %v6138
      %v6140 = vpop.f32.mrb[0].mxu0
      %6141 = vmatprep.mubr.bf16.mxu0 0
      %6142 = vmatmul.mubr.bf16.gmra.mrb[0].mxu0 %v6088
      %v6143 = vpop.f32.mrb[0].mxu0
      %v6144 = vadd.f32 0.0, %v6143
      %v6145 = vpop.f32.mrb[0].mxu0
      %v6146 = vpop.f32.mrb[0].mxu0
      %v6147 = vadd.f32 0.0, %v6146
      %v6148 = vpop.f32.mrb[0].mxu0
      %6149 = vmatprep.mubr.bf16.mxu0 0
      %6150 = vmatmul.mubr.bf16.gmra.mrb[0].mxu0 %v6091
      %v6151 = vpop.f32.mrb[0].mxu0
      %v6152 = vadd.f32 0.0, %v6151
      %v6153 = vpop.f32.mrb[0].mxu0
      %v6154 = vpop.f32.mrb[0].mxu0
      %v6155 = vpop.f32.mrb[0].mxu0
      %6156 = vdwg.mxu0
      %v6157 = vadd.f32 %v5990, %v6128
      %v6158 = vadd.f32 %v5991, %v6131
      %v6159 = vadd.f32 %v5992, %v6136
      %v6160 = vadd.f32 %v5993, %v6139
      %v6161 = vadd.f32 %v5994, %v6144
      %v6162 = vadd.f32 %v5995, %v6147
      %v6163 = vadd.f32 %v5996, %v6152
      %v6164 = vld [vmem:[%s5871] sm:$0xc]
      %v6165 = vld [vmem:[%s5871 + $0x4] sm:$0x3]
      %v6166 = vld [vmem:[%s5871 + $0x8] sm:$0xc]
      %v6167 = vld [vmem:[%s5871 + $0xc] sm:$0x3]
      %v6168 = vld [vmem:[%s5871 + $0x10] sm:$0xc]
      %v6169 = vld [vmem:[%s5871 + $0x14] sm:$0x3]
      %v6170 = vld [vmem:[%s5871 + $0x18] sm:$0xc]
      %v6171 = vld [vmem:[%s5871 + $0x1c] sm:$0x3]
      %v6172 = vld [vmem:[%s5871 + $0x20] sm:$0xc]
      %v6173 = vld [vmem:[%s5871 + $0x24] sm:$0x3]
      %v6174 = vld [vmem:[%s5871 + $0x28] sm:$0xc]
      %v6175 = vld [vmem:[%s5871 + $0x2c] sm:$0x3]
      %v6176 = vld [vmem:[%s5871 + $0x30] sm:$0xc]
      %v6177 = vld [vmem:[%s5871 + $0x34] sm:$0x3]
      %v6192 = vrot.slane %v6164, 6
      %v6193 = vrot.slane %v6192, 4
      %v6194 = vrot.slane %v6165, 6
      %v6195 = vsel %vm5355, %v6193, %v6194
      %v6196 = vrot.slane %v6166, 6
      %v6197 = vrot.slane %v6196, 4
      %v6198 = vrot.slane %v6167, 6
      %v6199 = vsel %vm5355, %v6197, %v6198
      %v6200 = vrot.slane %v6168, 6
      %v6201 = vrot.slane %v6200, 4
      %v6202 = vrot.slane %v6169, 6
      %v6203 = vsel %vm5355, %v6201, %v6202
      %v6204 = vrot.slane %v6170, 6
      %v6205 = vrot.slane %v6204, 4
      %v6206 = vrot.slane %v6171, 6
      %v6207 = vsel %vm5355, %v6205, %v6206
      %v6208 = vrot.slane %v6172, 6
      %v6209 = vrot.slane %v6208, 4
      %v6210 = vrot.slane %v6173, 6
      %v6211 = vsel %vm5355, %v6209, %v6210
      %v6212 = vrot.slane %v6174, 6
      %v6213 = vrot.slane %v6212, 4
      %v6214 = vrot.slane %v6175, 6
      %v6215 = vsel %vm5355, %v6213, %v6214
      %v6216 = vrot.slane %v6176, 6
      %v6217 = vrot.slane %v6216, 4
      %v6218 = vrot.slane %v6177, 6
      %v6219 = vsel %vm5355, %v6217, %v6218
      %s6220 = scalar_lea.vmem %s1, 560
      %v6221 = vld [vmem:[%s6220] sm:$0xf]
      %v6222 = vld [vmem:[%s6220 + $0x4] sm:$0xf]
      %v6223 = vld [vmem:[%s6220 + $0x8] sm:$0xf]
      %v6224 = vld [vmem:[%s6220 + $0xc] sm:$0xf]
      %v6225 = vunpack.c.l.b16 %v6195
      %v6226 = vunpack.c.l.b16 %v6199
      %v6227 = vunpack.c.l.b16 %v6203
      %v6228 = vunpack.c.l.b16 %v6207
      %v6229 = vunpack.c.l.b16 %v6211
      %v6230 = vunpack.c.l.b16 %v6215
      %v6231 = vunpack.c.l.b16 %v6219
      %v6232 = vpack.c.b16 %v6226, %v6225
      %v6233 = vpack.c.b16 %v6228, %v6227
      %v6234 = vpack.c.b16 %v6230, %v6229
      %v6235 = vpack.c.b16 %v6231, %v6231
      %v6240 = vunpack.c.l.b16 %v6221
      %v6241 = vunpack.c.l.b16 %v6222
      %v6242 = vunpack.c.l.b16 %v6223
      %v6243 = vunpack.c.l.b16 %v6224
      %v6244 = vpack.c.b16 %v6241, %v6240
      %v6245 = vpack.c.b16 %v6243, %v6242
      %v6249 = vsel %vm465, %v6232, 0
      %v6252 = vsel %vm465, %v6233, 0
      %v6255 = vsel %vm465, %v6234, 0
      %v6258 = vsel %vm465, %v6235, 0
      %6260 = vmatprep.subr.bf16.mxu0 0
      %6261 = vmatpush1.bf16.msra.mxu0 %v6244
      %6262 = vmatprep.subr.bf16.mxu0 0
      %6263 = vmatpush1.bf16.msra.mxu0 %v6245
      %6264 = vmatprep.subr.bf16.mxu0 0
      %6265 = vmatpush1.bf16.msra.mxu0 0
      %6266 = vmatprep.subr.bf16.mxu0 0
      %6267 = vmatpush1.bf16.msra.mxu0 0
      %6268 = vmatprep.subr.bf16.mxu0 0
      %6269 = vmatpush1.bf16.msra.mxu0 0
      %6270 = vmatprep.subr.bf16.mxu0 0
      %6271 = vmatpush1.bf16.msra.mxu0 0
      %6272 = vmatprep.subr.bf16.mxu0 0
      %6273 = vmatpush1.bf16.msra.mxu0 0
      %6274 = vmatprep.subr.bf16.mxu0 0
      %6275 = vmatpush1.bf16.msra.mxu0 0
      %6276 = vmatprep.subr.bf16.mxu0 0
      %6277 = vmatpush1.bf16.msra.mxu0 0
      %6278 = vmatprep.subr.bf16.mxu0 0
      %6279 = vmatpush1.bf16.msra.mxu0 0
      %6280 = vmatprep.subr.bf16.mxu0 0
      %6281 = vmatpush1.bf16.msra.mxu0 0
      %6282 = vmatprep.subr.bf16.mxu0 0
      %6283 = vmatpush1.bf16.msra.mxu0 0
      %6284 = vmatprep.subr.bf16.mxu0 0
      %6285 = vmatpush1.bf16.msra.mxu0 0
      %6286 = vmatprep.subr.bf16.mxu0 0
      %6287 = vmatpush1.bf16.msra.mxu0 0
      %6288 = vmatprep.subr.bf16.mxu0 0
      %6289 = vmatpush1.bf16.msra.mxu0 0
      %6290 = vmatprep.subr.bf16.mxu0 0
      %6291 = vmatpush1.bf16.msra.mxu0 0
      %6292 = vmatprep.mubr.bf16.mxu0 0
      %6293 = vmatmul.mubr.bf16.gmra.mrb[0].mxu0 %v6249
      %v6294 = vpop.f32.mrb[0].mxu0
      %v6295 = vadd.f32 0.0, %v6294
      %v6296 = vpop.f32.mrb[0].mxu0
      %v6297 = vpop.f32.mrb[0].mxu0
      %v6298 = vadd.f32 0.0, %v6297
      %v6299 = vpop.f32.mrb[0].mxu0
      %6300 = vmatprep.mubr.bf16.mxu0 0
      %6301 = vmatmul.mubr.bf16.gmra.mrb[0].mxu0 %v6252
      %v6302 = vpop.f32.mrb[0].mxu0
      %v6303 = vadd.f32 0.0, %v6302
      %v6304 = vpop.f32.mrb[0].mxu0
      %v6305 = vpop.f32.mrb[0].mxu0
      %v6306 = vadd.f32 0.0, %v6305
      %v6307 = vpop.f32.mrb[0].mxu0
      %6308 = vmatprep.mubr.bf16.mxu0 0
      %6309 = vmatmul.mubr.bf16.gmra.mrb[0].mxu0 %v6255
      %v6310 = vpop.f32.mrb[0].mxu0
      %v6311 = vadd.f32 0.0, %v6310
      %v6312 = vpop.f32.mrb[0].mxu0
      %v6313 = vpop.f32.mrb[0].mxu0
      %v6314 = vadd.f32 0.0, %v6313
      %v6315 = vpop.f32.mrb[0].mxu0
      %6316 = vmatprep.mubr.bf16.mxu0 0
      %6317 = vmatmul.mubr.bf16.gmra.mrb[0].mxu0 %v6258
      %v6318 = vpop.f32.mrb[0].mxu0
      %v6319 = vadd.f32 0.0, %v6318
      %v6320 = vpop.f32.mrb[0].mxu0
      %v6321 = vpop.f32.mrb[0].mxu0
      %v6322 = vpop.f32.mrb[0].mxu0
      %6323 = vdwg.mxu0
      %v6324 = vadd.f32 %v6157, %v6295
      %v6325 = vadd.f32 %v6158, %v6298
      %v6326 = vadd.f32 %v6159, %v6303
      %v6327 = vadd.f32 %v6160, %v6306
      %v6328 = vadd.f32 %v6161, %v6311
      %v6329 = vadd.f32 %v6162, %v6314
      %v6330 = vadd.f32 %v6163, %v6319
      %6338 = vrot.lane.b32.xlu0 %v3485, 64
      %v6339 = vpop.permute.xlu0 %6338
      %6340 = vrot.lane.b32.xlu0 %v3486, 64
      %v6341 = vpop.permute.xlu0 %6340
      %6342 = vrot.lane.b32.xlu0 %v3487, 64
      %v6343 = vpop.permute.xlu0 %6342
      %6344 = vrot.lane.b32.xlu0 %v3488, 64
      %v6345 = vpop.permute.xlu0 %6344
      %6346 = vrot.lane.b32.xlu0 %v3489, 64
      %v6347 = vpop.permute.xlu0 %6346
      %6348 = vrot.lane.b32.xlu0 %v3490, 64
      %v6349 = vpop.permute.xlu0 %6348
      %6350 = vrot.lane.b32.xlu0 %v3491, 64
      %v6351 = vpop.permute.xlu0 %6350
      %6366 = vrot.lane.b32.xlu0 %v6324, 64
      %v6367 = vpop.permute.xlu0 %6366
      %6368 = vrot.lane.b32.xlu0 %v6325, 64
      %v6369 = vpop.permute.xlu0 %6368
      %6370 = vrot.lane.b32.xlu0 %v6326, 64
      %v6371 = vpop.permute.xlu0 %6370
      %6372 = vrot.lane.b32.xlu0 %v6327, 64
      %v6373 = vpop.permute.xlu0 %6372
      %6374 = vrot.lane.b32.xlu0 %v6328, 64
      %v6375 = vpop.permute.xlu0 %6374
      %6376 = vrot.lane.b32.xlu0 %v6329, 64
      %v6377 = vpop.permute.xlu0 %6376
      %6378 = vrot.lane.b32.xlu0 %v6330, 64
      %v6379 = vpop.permute.xlu0 %6378
      %vm6387 = vcmask 523264
      %v6388 = vsel %vm6387, %v2025, %v6339
      %v6389 = vsel %vm6387, %v2026, %v6341
      %v6390 = vsel %vm6387, %v2027, %v6343
      %v6391 = vsel %vm6387, %v2028, %v6345
      %v6392 = vsel %vm6387, %v2029, %v6347
      %v6393 = vsel %vm6387, %v2030, %v6349
      %v6394 = vsel %vm6387, %v2031, %v6351
      %v6395 = vsel %vm6387, %v5037, %v6367
      %v6396 = vsel %vm6387, %v5038, %v6369
      %v6397 = vsel %vm6387, %v5039, %v6371
      %v6398 = vsel %vm6387, %v5040, %v6373
      %v6399 = vsel %vm6387, %v5041, %v6375
      %v6400 = vsel %vm6387, %v5042, %v6377
      %v6401 = vsel %vm6387, %v5043, %v6379
      %v6402 = vld [vmem:[%s2] sm:$0x3]
      %v6404 = vlaneseq
      %v6405 = vshrl.u32 %v6404, 7
      %v6406 = vsub.s32 0, %v6405
      %v6407 = vrot.slane %v6402, %v6406
      %v6408 = vlaneseq
      %v6409 = vshrl.u32 %v6408, 7
      %v6410 = vsub.s32 1, %v6409
      %v6411 = vrot.slane %v6402, %v6410
      %v6414 = vadd.f32 %v6388, %v6407
      %v6415 = vadd.f32 %v6395, %v6411
      %v6416 = vadd.f32 %v6389, %v6407
      %v6417 = vadd.f32 %v6396, %v6411
      %v6418 = vadd.f32 %v6390, %v6407
      %v6419 = vadd.f32 %v6397, %v6411
      %v6420 = vadd.f32 %v6391, %v6407
      %v6421 = vadd.f32 %v6398, %v6411
      %v6422 = vadd.f32 %v6392, %v6407
      %v6423 = vadd.f32 %v6399, %v6411
      %v6424 = vadd.f32 %v6393, %v6407
      %v6425 = vadd.f32 %v6400, %v6411
      %v6426 = vadd.f32 %v6394, %v6407
      %v6427 = vadd.f32 %v6401, %v6411
      %v6428 = vpack.c.bf16 %v6416, %v6414
      %v6429 = vpack.c.bf16 %v6417, %v6415
      %v6430 = vpack.c.bf16 %v6420, %v6418
      %v6431 = vpack.c.bf16 %v6421, %v6419
      %v6432 = vpack.c.bf16 %v6424, %v6422
      %v6433 = vpack.c.bf16 %v6425, %v6423
      %v6434 = vpack.c.bf16 %v6426, %v6426
      %v6435 = vpack.c.bf16 %v6427, %v6427
      %v6444 = vunpack.c.l.b16 %v6428
      %v6445 = vunpack.c.l.b16 %v6429
      %v6446 = vunpack.c.h.b16 %v6428
      %v6447 = vunpack.c.h.b16 %v6429
      %v6448 = vunpack.c.l.b16 %v6430
      %v6449 = vunpack.c.l.b16 %v6431
      %v6450 = vunpack.c.h.b16 %v6430
      %v6451 = vunpack.c.h.b16 %v6431
      %v6452 = vunpack.c.l.b16 %v6432
      %v6453 = vunpack.c.l.b16 %v6433
      %v6454 = vunpack.c.h.b16 %v6432
      %v6455 = vunpack.c.h.b16 %v6433
      %v6456 = vunpack.c.l.b16 %v6434
      %v6457 = vunpack.c.l.b16 %v6435
      %v6458 = vpack.c.b16 %v6445, %v6444
      %v6459 = vpack.c.b16 %v6447, %v6446
      %v6460 = vpack.c.b16 %v6449, %v6448
      %v6461 = vpack.c.b16 %v6451, %v6450
      %v6462 = vpack.c.b16 %v6453, %v6452
      %v6463 = vpack.c.b16 %v6455, %v6454
      %v6464 = vpack.c.b16 %v6457, %v6456
      %6472 = vst [vmem:[%s194] sm:$0xff] %v6458
      %6473 = vst [vmem:[%s194 + $0x8] sm:$0xff] %v6459
      %6474 = vst [vmem:[%s194 + $0x10] sm:$0xff] %v6460
      %6475 = vst [vmem:[%s194 + $0x18] sm:$0xff] %v6461
      %6476 = vst [vmem:[%s194 + $0x20] sm:$0xff] %v6462
      %6477 = vst [vmem:[%s194 + $0x28] sm:$0xff] %v6463
      %6478 = vst [vmem:[%s194 + $0x30] sm:$0xff] %v6464
      %s6479 = smul.u32 7, %s19
      %p6480 = scmp.lt.s32.totalorder %s18, 1
      %s6481 = scalar_select %p6480, %s18, 1
      %p6482 = scmp.lt.s32.totalorder %s6479, 6
      %s6483 = scalar_select %p6482, %s6479, 6
      %s6484 = smul.addr %s6483, 2
      %s6485 = smul.addr %s6481, 14
      %s6486 = sadd.s32 %s6484, %s6485
      %s6487 = smul.addr %s6486, 4
      %s6488 = scalar_lea.vmem %s3, %s6487
      // Predicated region
      $region33: #{dilatedconv_reduction_forward.1} parent=31 // pred_check
        %p6489 = pneg %p114
      $region34: #{dilatedconv_reduction_forward.1} parent=31 // pred_check_branch
        %6491 = sbr.rel (%p6489) target = $region36
      $region35: #{dilatedconv_reduction_forward.1} parent=31 // pred_region
        %s6492 = smul.u32 7, %s19
      $region36: #{dilatedconv_reduction_forward.1} parent=31 // pred_fallthru
        _
    $region32: #{dilatedconv_reduction_forward.1} parent=5 // pred_fallthru
      _
    %p6493 = scmp.le.s32.totalorder 2, %s9
    // Predicated region
    $region37: #{dilatedconv_reduction_forward.1} parent=5 // pred_check
      %p6494 = pneg %p6493
    $region38: #{dilatedconv_reduction_forward.1} parent=5 // pred_check_branch
      %6496 = sbr.rel (%p6494) target = $region40
    $region39: #{dilatedconv_reduction_forward.1} parent=5 // pred_region
      %s6497 = ssub.s32 %s9, 2
      // Predicated region
      $region41: #{dilatedconv_reduction_forward.1} parent=39 // pred_check
        %p6498 = pneg %p120
      $region42: #{dilatedconv_reduction_forward.1} parent=39 // pred_check_branch
        %6500 = sbr.rel (%p6498) target = $region44
      $region43: #{dilatedconv_reduction_forward.1} parent=39 // pred_region
        %s6501 = smul.u32 7, %s21
        %p6502 = scmp.lt.s32.totalorder %s20, 1
        %s6503 = scalar_select %p6502, %s20, 1
        %p6504 = scmp.lt.s32.totalorder %s6501, 6
        %s6505 = scalar_select %p6504, %s6501, 6
        %s6506 = smul.addr %s6505, 2
        %s6507 = smul.addr %s6503, 14
        %s6508 = sadd.s32 %s6506, %s6507
        %s6509 = smul.addr %s6508, 4
        %s6510 = scalar_lea.vmem %s3, %s6509
      $region44: #{dilatedconv_reduction_forward.1} parent=39 // pred_fallthru
        _
    $region40: #{dilatedconv_reduction_forward.1} parent=5 // pred_fallthru
      _
  $region6: #{dilatedconv_reduction_forward.1} parent=0 // loop_footer
    %s13 = sadd.s32 1, %s9
  $region7: #{dilatedconv_reduction_forward.1} parent=0 // loop_footer_branch
    %8 = sbr.rel target = $region3
  $region8: #{dilatedconv_reduction_forward.1} parent=0 // loop_exit
    _

</llo_original>
